<compile_context>
chip_gen: v7x
topology: tpu7x:2x2x1
jax: 0.10.0
libtpu: 0.0.40
codegen_flags: <defaults>
</compile_context>

<pallas_src>
import math

import jax
import jax.numpy as jnp
from jax.experimental import pallas as pl
from jax.experimental.pallas import tpu as pltpu

# ---------------- config (small, consistent with the module) ----------------
MODEL_DIM = 32
NUM_HEADS = 2
HEAD_DIM = MODEL_DIM // NUM_HEADS
HIDDEN_DIM = 2 * MODEL_DIM
NUM_LAYERS = 3
SEQ = 8
BATCH = 2
EPS = 1e-5                 # nn.LayerNorm default
VECS_PER_LAYER = 8         # gamma1,beta1,gamma2,beta2,gamma3,beta3,bo,b2


# ---------------- shared LayerNorm helper (kernel + reference) ----------------
def _layernorm(x, gamma, beta):
    mu = jnp.mean(x, axis=-1, keepdims=True)
    xc = x - mu
    var = jnp.mean(xc * xc, axis=-1, keepdims=True)
    return xc * jax.lax.rsqrt(var + EPS) * gamma + beta


# ---------------- fused Pallas kernel (one batch element per grid step) ----------------
def fused_encoder_kernel(x_ref, wqkv_ref, bqkv_ref, wo_ref,
                         w1_ref, b1_ref, w2_ref, vec_ref, o_ref):
    S, D = x_ref.shape
    x = x_ref[...]                                    # (S, D) f32, stays resident

    for l in range(NUM_LAYERS):                       # static unroll over layers
        base = l * VECS_PER_LAYER
        g1  = vec_ref[base + 0:base + 1]              # (1, D)
        be1 = vec_ref[base + 1:base + 2]
        g2  = vec_ref[base + 2:base + 3]
        be2 = vec_ref[base + 3:base + 4]
        g3  = vec_ref[base + 4:base + 5]
        be3 = vec_ref[base + 5:base + 6]
        bo  = vec_ref[base + 6:base + 7]
        b2v = vec_ref[base + 7:base + 8]

        # ---- pre-norm + multi-head self-attention (per-head weights, no slicing) ----
        h = _layernorm(x, g1, be1)
        attn = jnp.zeros((S, D), jnp.float32)
        for hd in range(NUM_HEADS):                   # static unroll over heads
            # 1/sqrt(head_dim) already folded into the Q weights/bias.
            q = jnp.dot(h, wqkv_ref[l, hd, 0],
                        preferred_element_type=jnp.float32) + bqkv_ref[l, hd, 0]
            k = jnp.dot(h, wqkv_ref[l, hd, 1],
                        preferred_element_type=jnp.float32) + bqkv_ref[l, hd, 1]
            v = jnp.dot(h, wqkv_ref[l, hd, 2],
                        preferred_element_type=jnp.float32) + bqkv_ref[l, hd, 2]
            # scores: contract feature dims directly (q @ k^T), (S, S)
            s = jax.lax.dot_general(q, k, (((1,), (1,)), ((), ())),
                                    preferred_element_type=jnp.float32)
            s = s - jnp.max(s, axis=-1, keepdims=True)
            p = jnp.exp(s)
            p = p / jnp.sum(p, axis=-1, keepdims=True)
            pv = jnp.dot(p, v, preferred_element_type=jnp.float32)        # (S, Hd)
            # per-head output projection == concat(heads) @ W_o, without the concat
            attn = attn + jnp.dot(pv, wo_ref[l, hd],
                                  preferred_element_type=jnp.float32)     # (S, D)
        attn = attn + bo

        # ---- post-norm on attention branch + residual ----
        x = x + _layernorm(attn, g2, be2)

        # ---- pre-norm MLP + residual ----
        h2 = _layernorm(x, g3, be3)
        mid = jax.nn.gelu(jnp.dot(h2, w1_ref[l],
                                  preferred_element_type=jnp.float32) + b1_ref[l])
        x = x + jnp.dot(mid, w2_ref[l],
                        preferred_element_type=jnp.float32) + b2v

    # ---- final LayerNorm + store ----
    fbase = NUM_LAYERS * VECS_PER_LAYER
    fg = vec_ref[fbase + 0:fbase + 1]
    fb = vec_ref[fbase + 1:fbase + 2]
    # TODO(synk): at realistic sizes pad the output last dim to a multiple of 128
    # for an unmasked vst; negligible at (8, 32).
    o_ref[...] = _layernorm(x, fg, fb).astype(o_ref.dtype)


# ---------------- wrapper ----------------
def transformer_encoder(x, packed):
    B, S, D = x.shape
    w_qkv, b_qkv, w_o, w1, b1, w2, vec = packed
    x_flat = x.reshape(B * S, D)

    def resident(a):
        nd = a.ndim
        return pl.BlockSpec(a.shape, lambda b, nd=nd: (0,) * nd)   # constant block -> stays resident

    # advisory cost estimate (per forward, all batches)
    Hd, Hh, Hi, L = HEAD_DIM, NUM_HEADS, HIDDEN_DIM, NUM_LAYERS
    per_layer_flops = (Hh * (3 * 2 * S * D * Hd      # q/k/v projections
                             + 2 * 2 * S * S * Hd    # scores + p@v
                             + 2 * S * Hd * D)       # per-head output projection
                       + 2 * 2 * S * D * Hi)         # MLP
    flops = B * L * per_layer_flops
    transcendentals = B * (L * Hh * S * S + L * S * Hi + (3 * L + 1) * S)
    weight_bytes = sum(int(a.size) * a.dtype.itemsize for a in packed)
    bytes_accessed = 2 * int(x_flat.size) * x_flat.dtype.itemsize + weight_bytes

    out = pl.pallas_call(
        fused_encoder_kernel,
        out_shape=jax.ShapeDtypeStruct((B * S, D), x.dtype),
        grid=(B,),
        in_specs=[pl.BlockSpec((S, D), lambda b: (b, 0)),
                  resident(w_qkv), resident(b_qkv), resident(w_o),
                  resident(w1), resident(b1), resident(w2), resident(vec)],
        out_specs=pl.BlockSpec((S, D), lambda b: (b, 0)),
        compiler_params=pltpu.CompilerParams(dimension_semantics=("parallel",)),
        cost_estimate=pl.CostEstimate(flops=flops,
                                      transcendentals=transcendentals,
                                      bytes_accessed=bytes_accessed),
    )(x_flat, w_qkv, b_qkv, w_o, w1, b1, w2, vec)
    return out.reshape(B, S, D)


# ---------------- host-side parameter packing (static, free) ----------------
def pack_params(p):
    L, D, Hh, Hd = NUM_LAYERS, MODEL_DIM, NUM_HEADS, HEAD_DIM
    scale = 1.0 / math.sqrt(Hd)                       # 0.25 exactly -> lossless fold

    def split_w(w):                                   # (L, D, D) -> (L, H, D, Hd)
        return w.reshape(L, D, Hh, Hd).transpose(0, 2, 1, 3)

    def split_b(b):                                   # (L, D) -> (L, H, Hd)
        return b.reshape(L, Hh, Hd)

    wq = split_w(p["wq"]) * scale
    wk = split_w(p["wk"])
    wv = split_w(p["wv"])
    w_qkv = jnp.stack([wq, wk, wv], axis=2)           # (L, H, 3, D, Hd)

    bq = split_b(p["bq"]) * scale
    bk = split_b(p["bk"])
    bv = split_b(p["bv"])
    b_qkv = jnp.stack([bq, bk, bv], axis=2)[:, :, :, None, :]   # (L, H, 3, 1, Hd)

    w_o = p["wo"].reshape(L, Hh, Hd, D)               # row-split per head

    vec = jnp.concatenate([
        jnp.stack([p["gamma1"], p["beta1"], p["gamma2"], p["beta2"],
                   p["gamma3"], p["beta3"], p["bo"], p["b2"]],
                  axis=1).reshape(L * VECS_PER_LAYER, D),
        p["final_gamma"][None, :], p["final_beta"][None, :]], axis=0)   # (L*8+2, D)

    b1 = p["b1"][:, None, :]                          # (L, 1, HIDDEN)
    return (w_qkv, b_qkv, w_o, p["w1"], b1, p["w2"], vec)


# ---------------- pure-JAX reference (mirrors the PyTorch forward, true f32) ----------------
def transformer_encoder_ref(x, p):
    hp = jax.lax.Precision.HIGHEST
    B, S, D = x.shape
    for l in range(NUM_LAYERS):
        h = _layernorm(x, p["gamma1"][l], p["beta1"][l])
        q = jnp.einsum("bsd,de->bse", h, p["wq"][l], precision=hp) + p["bq"][l]
        k = jnp.einsum("bsd,de->bse", h, p["wk"][l], precision=hp) + p["bk"][l]
        v = jnp.einsum("bsd,de->bse", h, p["wv"][l], precision=hp) + p["bv"][l]
        qh = q.reshape(B, S, NUM_HEADS, HEAD_DIM).transpose(0, 2, 1, 3)
        kh = k.reshape(B, S, NUM_HEADS, HEAD_DIM).transpose(0, 2, 1, 3)
        vh = v.reshape(B, S, NUM_HEADS, HEAD_DIM).transpose(0, 2, 1, 3)
        scores = jnp.einsum("bhsd,bhtd->bhst", qh, kh,
                            precision=hp) / math.sqrt(HEAD_DIM)
        attnw = jax.nn.softmax(scores, axis=-1)
        o = jnp.einsum("bhst,bhtd->bhsd", attnw, vh, precision=hp)
        o = o.transpose(0, 2, 1, 3).reshape(B, S, D)
        o = jnp.einsum("bsd,de->bse", o, p["wo"][l], precision=hp) + p["bo"][l]
        x = x + _layernorm(o, p["gamma2"][l], p["beta2"][l])
        h2 = _layernorm(x, p["gamma3"][l], p["beta3"][l])
        mid = jax.nn.gelu(
            jnp.einsum("bsd,dh->bsh", h2, p["w1"][l], precision=hp) + p["b1"][l])
        x = x + jnp.einsum("bsh,hd->bsd", mid, p["w2"][l], precision=hp) + p["b2"][l]
    return _layernorm(x, p["final_gamma"], p["final_beta"])


# ---------------- deterministic parameter init (natural PyTorch-like layout) ----------------
def make_params(key):
    L, D, Hi = NUM_LAYERS, MODEL_DIM, HIDDEN_DIM
    ks = jax.random.split(key, 20)
    n = jax.random.normal
    return {
        "wq": 0.08 * n(ks[0], (L, D, D), jnp.float32),
        "bq": 0.02 * n(ks[1], (L, D), jnp.float32),
        "wk": 0.08 * n(ks[2], (L, D, D), jnp.float32),
        "bk": 0.02 * n(ks[3], (L, D), jnp.float32),
        "wv": 0.08 * n(ks[4], (L, D, D), jnp.float32),
        "bv": 0.02 * n(ks[5], (L, D), jnp.float32),
        "wo": 0.08 * n(ks[6], (L, D, D), jnp.float32),
        "bo": 0.02 * n(ks[7], (L, D), jnp.float32),
        "w1": 0.08 * n(ks[8], (L, D, Hi), jnp.float32),
        "b1": 0.02 * n(ks[9], (L, Hi), jnp.float32),
        "w2": 0.08 * n(ks[10], (L, Hi, D), jnp.float32),
        "b2": 0.02 * n(ks[11], (L, D), jnp.float32),
        "gamma1": 1.0 + 0.1 * n(ks[12], (L, D), jnp.float32),
        "beta1": 0.05 * n(ks[13], (L, D), jnp.float32),
        "gamma2": 1.0 + 0.1 * n(ks[14], (L, D), jnp.float32),
        "beta2": 0.05 * n(ks[15], (L, D), jnp.float32),
        "gamma3": 1.0 + 0.1 * n(ks[16], (L, D), jnp.float32),
        "beta3": 0.05 * n(ks[17], (L, D), jnp.float32),
        "final_gamma": 1.0 + 0.1 * n(ks[18], (D,), jnp.float32),
        "final_beta": 0.05 * n(ks[19], (D,), jnp.float32),
    }


if __name__ == "__main__":
    key = jax.random.PRNGKey(0)
    kx, kp = jax.random.split(key)
    x = jax.random.normal(kx, (BATCH, SEQ, MODEL_DIM), jnp.float32)

    params = make_params(kp)
    packed = pack_params(params)

    out = transformer_encoder(x, packed)
    out = jax.block_until_ready(out)

    ref = transformer_encoder_ref(x, params)
    assert out.shape == (BATCH, SEQ, MODEL_DIM)
    max_err = float(jnp.max(jnp.abs(out - ref)))
    assert jnp.allclose(out, ref, atol=2e-3, rtol=2e-3), (
        f"mismatch vs JAX reference (max abs err {max_err:.3e})")

    print("KERNEL_OK")
</pallas_src>

<mosaic_0001>
module attributes {stable_mosaic.version = 11 : i64} {
  func.func @fused_encoder_kernel(%arg0: i32, %arg1: memref<8x32xf32, #tpu.memory_space<vmem>>, %arg2: memref<3x2x3x32x16xf32, #tpu.memory_space<vmem>>, %arg3: memref<3x2x3x1x16xf32, #tpu.memory_space<vmem>>, %arg4: memref<3x2x16x32xf32, #tpu.memory_space<vmem>>, %arg5: memref<3x32x64xf32, #tpu.memory_space<vmem>>, %arg6: memref<3x1x64xf32, #tpu.memory_space<vmem>>, %arg7: memref<3x64x32xf32, #tpu.memory_space<vmem>>, %arg8: memref<26x32xf32, #tpu.memory_space<vmem>>, %arg9: memref<8x32xf32, #tpu.memory_space<vmem>>) attributes {dimension_semantics = [#tpu.dimension_semantics<parallel>], iteration_bounds = array<i64: 2>, scalar_prefetch = 0 : i64, scratch_operands = 0 : i64, tpu.core_type = #tpu.core_type<tc>, window_params = [{transform_indices = @transform_0, window_bounds = array<i64: 8, 32>}, {pipeline_mode = #tpu.pipeline_mode<synchronous>, transform_indices = @transform_1, window_bounds = array<i64: 3, 2, 3, 32, 16>}, {pipeline_mode = #tpu.pipeline_mode<synchronous>, transform_indices = @transform_2, window_bounds = array<i64: 3, 2, 3, 1, 16>}, {pipeline_mode = #tpu.pipeline_mode<synchronous>, transform_indices = @transform_3, window_bounds = array<i64: 3, 2, 16, 32>}, {pipeline_mode = #tpu.pipeline_mode<synchronous>, transform_indices = @transform_4, window_bounds = array<i64: 3, 32, 64>}, {pipeline_mode = #tpu.pipeline_mode<synchronous>, transform_indices = @transform_5, window_bounds = array<i64: 3, 1, 64>}, {pipeline_mode = #tpu.pipeline_mode<synchronous>, transform_indices = @transform_6, window_bounds = array<i64: 3, 64, 32>}, {pipeline_mode = #tpu.pipeline_mode<synchronous>, transform_indices = @transform_7, window_bounds = array<i64: 26, 32>}, {transform_indices = @transform_8, window_bounds = array<i64: 8, 32>}]} {
    %c0 = arith.constant 0 : index
    %c0_0 = arith.constant 0 : index
    %0 = vector.load %arg1[%c0, %c0_0] : memref<8x32xf32, #tpu.memory_space<vmem>>, vector<8x32xf32>
    %c0_1 = arith.constant 0 : index
    %c0_2 = arith.constant 0 : index
    %1 = vector.load %arg8[%c0_1, %c0_2] : memref<26x32xf32, #tpu.memory_space<vmem>>, vector<1x32xf32>
    %c1 = arith.constant 1 : index
    %c0_3 = arith.constant 0 : index
    %2 = vector.load %arg8[%c1, %c0_3] : memref<26x32xf32, #tpu.memory_space<vmem>>, vector<1x32xf32>
    %c2 = arith.constant 2 : index
    %c0_4 = arith.constant 0 : index
    %3 = vector.load %arg8[%c2, %c0_4] : memref<26x32xf32, #tpu.memory_space<vmem>>, vector<1x32xf32>
    %c3 = arith.constant 3 : index
    %c0_5 = arith.constant 0 : index
    %4 = vector.load %arg8[%c3, %c0_5] : memref<26x32xf32, #tpu.memory_space<vmem>>, vector<1x32xf32>
    %c4 = arith.constant 4 : index
    %c0_6 = arith.constant 0 : index
    %5 = vector.load %arg8[%c4, %c0_6] : memref<26x32xf32, #tpu.memory_space<vmem>>, vector<1x32xf32>
    %c5 = arith.constant 5 : index
    %c0_7 = arith.constant 0 : index
    %6 = vector.load %arg8[%c5, %c0_7] : memref<26x32xf32, #tpu.memory_space<vmem>>, vector<1x32xf32>
    %c6 = arith.constant 6 : index
    %c0_8 = arith.constant 0 : index
    %7 = vector.load %arg8[%c6, %c0_8] : memref<26x32xf32, #tpu.memory_space<vmem>>, vector<1x32xf32>
    %c7 = arith.constant 7 : index
    %c0_9 = arith.constant 0 : index
    %8 = vector.load %arg8[%c7, %c0_9] : memref<26x32xf32, #tpu.memory_space<vmem>>, vector<1x32xf32>
    %cst = arith.constant dense<0.000000e+00> : vector<8xf32>
    %9 = vector.multi_reduction <add>, %0, %cst [1] : vector<8x32xf32> to vector<8xf32>
    %10 = vector.shape_cast %9 : vector<8xf32> to vector<8x1xf32>
    %cst_10 = arith.constant 3.200000e+01 : f32
    %11 = vector.broadcast %cst_10 : f32 to vector<8x1xf32>
    %12 = arith.divf %10, %11 : vector<8x1xf32>
    %13 = vector.broadcast %12 : vector<8x1xf32> to vector<8x32xf32>
    %14 = arith.subf %0, %13 : vector<8x32xf32>
    %15 = arith.mulf %14, %14 : vector<8x32xf32>
    %cst_11 = arith.constant dense<0.000000e+00> : vector<8xf32>
    %16 = vector.multi_reduction <add>, %15, %cst_11 [1] : vector<8x32xf32> to vector<8xf32>
    %17 = vector.shape_cast %16 : vector<8xf32> to vector<8x1xf32>
    %cst_12 = arith.constant 3.200000e+01 : f32
    %18 = vector.broadcast %cst_12 : f32 to vector<8x1xf32>
    %19 = arith.divf %17, %18 : vector<8x1xf32>
    %cst_13 = arith.constant 9.99999974E-6 : f32
    %20 = vector.broadcast %cst_13 : f32 to vector<8x1xf32>
    %21 = arith.addf %19, %20 : vector<8x1xf32>
    %22 = math.rsqrt %21 : vector<8x1xf32>
    %23 = vector.broadcast %22 : vector<8x1xf32> to vector<8x32xf32>
    %24 = arith.mulf %14, %23 : vector<8x32xf32>
    %25 = vector.broadcast %1 : vector<1x32xf32> to vector<8x32xf32>
    %26 = arith.mulf %24, %25 : vector<8x32xf32>
    %27 = vector.broadcast %2 : vector<1x32xf32> to vector<8x32xf32>
    %28 = arith.addf %26, %27 : vector<8x32xf32>
    %cst_14 = arith.constant 0.000000e+00 : f32
    %29 = vector.broadcast %cst_14 : f32 to vector<8x32xf32>
    %c0_15 = arith.constant 0 : index
    %c0_16 = arith.constant 0 : index
    %c0_17 = arith.constant 0 : index
    %c0_18 = arith.constant 0 : index
    %c0_19 = arith.constant 0 : index
    %30 = vector.load %arg2[%c0_15, %c0_16, %c0_17, %c0_18, %c0_19] : memref<3x2x3x32x16xf32, #tpu.memory_space<vmem>>, vector<1x1x1x32x16xf32>
    %31 = vector.shape_cast %30 : vector<1x1x1x32x16xf32> to vector<32x16xf32>
    %cst_20 = arith.constant dense<0.000000e+00> : vector<8x16xf32>
    %32 = tpu.matmul %28, %31, %cst_20 {dimension_numbers = #tpu.dot_dimension_numbers<[1], [0], [0], [1], [0, 0, 1, 1], [], []>} : vector<8x32xf32>, vector<32x16xf32>, vector<8x16xf32> -> vector<8x16xf32>
    %c0_21 = arith.constant 0 : index
    %c0_22 = arith.constant 0 : index
    %c0_23 = arith.constant 0 : index
    %c0_24 = arith.constant 0 : index
    %c0_25 = arith.constant 0 : index
    %33 = vector.load %arg3[%c0_21, %c0_22, %c0_23, %c0_24, %c0_25] : memref<3x2x3x1x16xf32, #tpu.memory_space<vmem>>, vector<1x1x1x1x16xf32>
    %34 = vector.shape_cast %33 : vector<1x1x1x1x16xf32> to vector<1x16xf32>
    %35 = vector.broadcast %34 : vector<1x16xf32> to vector<8x16xf32>
    %36 = arith.addf %32, %35 : vector<8x16xf32>
    %c0_26 = arith.constant 0 : index
    %c0_27 = arith.constant 0 : index
    %c1_28 = arith.constant 1 : index
    %c0_29 = arith.constant 0 : index
    %c0_30 = arith.constant 0 : index
    %37 = vector.load %arg2[%c0_26, %c0_27, %c1_28, %c0_29, %c0_30] : memref<3x2x3x32x16xf32, #tpu.memory_space<vmem>>, vector<1x1x1x32x16xf32>
    %38 = vector.shape_cast %37 : vector<1x1x1x32x16xf32> to vector<32x16xf32>
    %cst_31 = arith.constant dense<0.000000e+00> : vector<8x16xf32>
    %39 = tpu.matmul %28, %38, %cst_31 {dimension_numbers = #tpu.dot_dimension_numbers<[1], [0], [0], [1], [0, 0, 1, 1], [], []>} : vector<8x32xf32>, vector<32x16xf32>, vector<8x16xf32> -> vector<8x16xf32>
    %c0_32 = arith.constant 0 : index
    %c0_33 = arith.constant 0 : index
    %c1_34 = arith.constant 1 : index
    %c0_35 = arith.constant 0 : index
    %c0_36 = arith.constant 0 : index
    %40 = vector.load %arg3[%c0_32, %c0_33, %c1_34, %c0_35, %c0_36] : memref<3x2x3x1x16xf32, #tpu.memory_space<vmem>>, vector<1x1x1x1x16xf32>
    %41 = vector.shape_cast %40 : vector<1x1x1x1x16xf32> to vector<1x16xf32>
    %42 = vector.broadcast %41 : vector<1x16xf32> to vector<8x16xf32>
    %43 = arith.addf %39, %42 : vector<8x16xf32>
    %c0_37 = arith.constant 0 : index
    %c0_38 = arith.constant 0 : index
    %c2_39 = arith.constant 2 : index
    %c0_40 = arith.constant 0 : index
    %c0_41 = arith.constant 0 : index
    %44 = vector.load %arg2[%c0_37, %c0_38, %c2_39, %c0_40, %c0_41] : memref<3x2x3x32x16xf32, #tpu.memory_space<vmem>>, vector<1x1x1x32x16xf32>
    %45 = vector.shape_cast %44 : vector<1x1x1x32x16xf32> to vector<32x16xf32>
    %cst_42 = arith.constant dense<0.000000e+00> : vector<8x16xf32>
    %46 = tpu.matmul %28, %45, %cst_42 {dimension_numbers = #tpu.dot_dimension_numbers<[1], [0], [0], [1], [0, 0, 1, 1], [], []>} : vector<8x32xf32>, vector<32x16xf32>, vector<8x16xf32> -> vector<8x16xf32>
    %c0_43 = arith.constant 0 : index
    %c0_44 = arith.constant 0 : index
    %c2_45 = arith.constant 2 : index
    %c0_46 = arith.constant 0 : index
    %c0_47 = arith.constant 0 : index
    %47 = vector.load %arg3[%c0_43, %c0_44, %c2_45, %c0_46, %c0_47] : memref<3x2x3x1x16xf32, #tpu.memory_space<vmem>>, vector<1x1x1x1x16xf32>
    %48 = vector.shape_cast %47 : vector<1x1x1x1x16xf32> to vector<1x16xf32>
    %49 = vector.broadcast %48 : vector<1x16xf32> to vector<8x16xf32>
    %50 = arith.addf %46, %49 : vector<8x16xf32>
    %cst_48 = arith.constant dense<0.000000e+00> : vector<8x8xf32>
    %51 = tpu.matmul %36, %43, %cst_48 {dimension_numbers = #tpu.dot_dimension_numbers<[1], [1], [0], [0], [0, 0, 1, 0], [], []>} : vector<8x16xf32>, vector<8x16xf32>, vector<8x8xf32> -> vector<8x8xf32>
    %cst_49 = arith.constant dense<0xFF800000> : vector<8xf32>
    %52 = vector.multi_reduction <maximumf>, %51, %cst_49 [1] : vector<8x8xf32> to vector<8xf32>
    %53 = vector.shape_cast %52 : vector<8xf32> to vector<8x1xf32>
    %54 = vector.broadcast %53 : vector<8x1xf32> to vector<8x8xf32>
    %55 = arith.subf %51, %54 : vector<8x8xf32>
    %56 = math.exp %55 : vector<8x8xf32>
    %cst_50 = arith.constant dense<0.000000e+00> : vector<8xf32>
    %57 = vector.multi_reduction <add>, %56, %cst_50 [1] : vector<8x8xf32> to vector<8xf32>
    %58 = vector.shape_cast %57 : vector<8xf32> to vector<8x1xf32>
    %59 = vector.broadcast %58 : vector<8x1xf32> to vector<8x8xf32>
    %60 = arith.divf %56, %59 : vector<8x8xf32>
    %cst_51 = arith.constant dense<0.000000e+00> : vector<8x16xf32>
    %61 = tpu.matmul %60, %50, %cst_51 {dimension_numbers = #tpu.dot_dimension_numbers<[1], [0], [0], [1], [0, 0, 1, 1], [], []>} : vector<8x8xf32>, vector<8x16xf32>, vector<8x16xf32> -> vector<8x16xf32>
    %c0_52 = arith.constant 0 : index
    %c0_53 = arith.constant 0 : index
    %c0_54 = arith.constant 0 : index
    %c0_55 = arith.constant 0 : index
    %62 = vector.load %arg4[%c0_52, %c0_53, %c0_54, %c0_55] : memref<3x2x16x32xf32, #tpu.memory_space<vmem>>, vector<1x1x16x32xf32>
    %63 = vector.shape_cast %62 : vector<1x1x16x32xf32> to vector<16x32xf32>
    %cst_56 = arith.constant dense<0.000000e+00> : vector<8x32xf32>
    %64 = tpu.matmul %61, %63, %cst_56 {dimension_numbers = #tpu.dot_dimension_numbers<[1], [0], [0], [1], [0, 0, 1, 1], [], []>} : vector<8x16xf32>, vector<16x32xf32>, vector<8x32xf32> -> vector<8x32xf32>
    %65 = arith.addf %29, %64 : vector<8x32xf32>
    %c0_57 = arith.constant 0 : index
    %c1_58 = arith.constant 1 : index
    %c0_59 = arith.constant 0 : index
    %c0_60 = arith.constant 0 : index
    %c0_61 = arith.constant 0 : index
    %66 = vector.load %arg2[%c0_57, %c1_58, %c0_59, %c0_60, %c0_61] : memref<3x2x3x32x16xf32, #tpu.memory_space<vmem>>, vector<1x1x1x32x16xf32>
    %67 = vector.shape_cast %66 : vector<1x1x1x32x16xf32> to vector<32x16xf32>
    %cst_62 = arith.constant dense<0.000000e+00> : vector<8x16xf32>
    %68 = tpu.matmul %28, %67, %cst_62 {dimension_numbers = #tpu.dot_dimension_numbers<[1], [0], [0], [1], [0, 0, 1, 1], [], []>} : vector<8x32xf32>, vector<32x16xf32>, vector<8x16xf32> -> vector<8x16xf32>
    %c0_63 = arith.constant 0 : index
    %c1_64 = arith.constant 1 : index
    %c0_65 = arith.constant 0 : index
    %c0_66 = arith.constant 0 : index
    %c0_67 = arith.constant 0 : index
    %69 = vector.load %arg3[%c0_63, %c1_64, %c0_65, %c0_66, %c0_67] : memref<3x2x3x1x16xf32, #tpu.memory_space<vmem>>, vector<1x1x1x1x16xf32>
    %70 = vector.shape_cast %69 : vector<1x1x1x1x16xf32> to vector<1x16xf32>
    %71 = vector.broadcast %70 : vector<1x16xf32> to vector<8x16xf32>
    %72 = arith.addf %68, %71 : vector<8x16xf32>
    %c0_68 = arith.constant 0 : index
    %c1_69 = arith.constant 1 : index
    %c1_70 = arith.constant 1 : index
    %c0_71 = arith.constant 0 : index
    %c0_72 = arith.constant 0 : index
    %73 = vector.load %arg2[%c0_68, %c1_69, %c1_70, %c0_71, %c0_72] : memref<3x2x3x32x16xf32, #tpu.memory_space<vmem>>, vector<1x1x1x32x16xf32>
    %74 = vector.shape_cast %73 : vector<1x1x1x32x16xf32> to vector<32x16xf32>
    %cst_73 = arith.constant dense<0.000000e+00> : vector<8x16xf32>
    %75 = tpu.matmul %28, %74, %cst_73 {dimension_numbers = #tpu.dot_dimension_numbers<[1], [0], [0], [1], [0, 0, 1, 1], [], []>} : vector<8x32xf32>, vector<32x16xf32>, vector<8x16xf32> -> vector<8x16xf32>
    %c0_74 = arith.constant 0 : index
    %c1_75 = arith.constant 1 : index
    %c1_76 = arith.constant 1 : index
    %c0_77 = arith.constant 0 : index
    %c0_78 = arith.constant 0 : index
    %76 = vector.load %arg3[%c0_74, %c1_75, %c1_76, %c0_77, %c0_78] : memref<3x2x3x1x16xf32, #tpu.memory_space<vmem>>, vector<1x1x1x1x16xf32>
    %77 = vector.shape_cast %76 : vector<1x1x1x1x16xf32> to vector<1x16xf32>
    %78 = vector.broadcast %77 : vector<1x16xf32> to vector<8x16xf32>
    %79 = arith.addf %75, %78 : vector<8x16xf32>
    %c0_79 = arith.constant 0 : index
    %c1_80 = arith.constant 1 : index
    %c2_81 = arith.constant 2 : index
    %c0_82 = arith.constant 0 : index
    %c0_83 = arith.constant 0 : index
    %80 = vector.load %arg2[%c0_79, %c1_80, %c2_81, %c0_82, %c0_83] : memref<3x2x3x32x16xf32, #tpu.memory_space<vmem>>, vector<1x1x1x32x16xf32>
    %81 = vector.shape_cast %80 : vector<1x1x1x32x16xf32> to vector<32x16xf32>
    %cst_84 = arith.constant dense<0.000000e+00> : vector<8x16xf32>
    %82 = tpu.matmul %28, %81, %cst_84 {dimension_numbers = #tpu.dot_dimension_numbers<[1], [0], [0], [1], [0, 0, 1, 1], [], []>} : vector<8x32xf32>, vector<32x16xf32>, vector<8x16xf32> -> vector<8x16xf32>
    %c0_85 = arith.constant 0 : index
    %c1_86 = arith.constant 1 : index
    %c2_87 = arith.constant 2 : index
    %c0_88 = arith.constant 0 : index
    %c0_89 = arith.constant 0 : index
    %83 = vector.load %arg3[%c0_85, %c1_86, %c2_87, %c0_88, %c0_89] : memref<3x2x3x1x16xf32, #tpu.memory_space<vmem>>, vector<1x1x1x1x16xf32>
    %84 = vector.shape_cast %83 : vector<1x1x1x1x16xf32> to vector<1x16xf32>
    %85 = vector.broadcast %84 : vector<1x16xf32> to vector<8x16xf32>
    %86 = arith.addf %82, %85 : vector<8x16xf32>
    %cst_90 = arith.constant dense<0.000000e+00> : vector<8x8xf32>
    %87 = tpu.matmul %72, %79, %cst_90 {dimension_numbers = #tpu.dot_dimension_numbers<[1], [1], [0], [0], [0, 0, 1, 0], [], []>} : vector<8x16xf32>, vector<8x16xf32>, vector<8x8xf32> -> vector<8x8xf32>
    %cst_91 = arith.constant dense<0xFF800000> : vector<8xf32>
    %88 = vector.multi_reduction <maximumf>, %87, %cst_91 [1] : vector<8x8xf32> to vector<8xf32>
    %89 = vector.shape_cast %88 : vector<8xf32> to vector<8x1xf32>
    %90 = vector.broadcast %89 : vector<8x1xf32> to vector<8x8xf32>
    %91 = arith.subf %87, %90 : vector<8x8xf32>
    %92 = math.exp %91 : vector<8x8xf32>
    %cst_92 = arith.constant dense<0.000000e+00> : vector<8xf32>
    %93 = vector.multi_reduction <add>, %92, %cst_92 [1] : vector<8x8xf32> to vector<8xf32>
    %94 = vector.shape_cast %93 : vector<8xf32> to vector<8x1xf32>
    %95 = vector.broadcast %94 : vector<8x1xf32> to vector<8x8xf32>
    %96 = arith.divf %92, %95 : vector<8x8xf32>
    %cst_93 = arith.constant dense<0.000000e+00> : vector<8x16xf32>
    %97 = tpu.matmul %96, %86, %cst_93 {dimension_numbers = #tpu.dot_dimension_numbers<[1], [0], [0], [1], [0, 0, 1, 1], [], []>} : vector<8x8xf32>, vector<8x16xf32>, vector<8x16xf32> -> vector<8x16xf32>
    %c0_94 = arith.constant 0 : index
    %c1_95 = arith.constant 1 : index
    %c0_96 = arith.constant 0 : index
    %c0_97 = arith.constant 0 : index
    %98 = vector.load %arg4[%c0_94, %c1_95, %c0_96, %c0_97] : memref<3x2x16x32xf32, #tpu.memory_space<vmem>>, vector<1x1x16x32xf32>
    %99 = vector.shape_cast %98 : vector<1x1x16x32xf32> to vector<16x32xf32>
    %cst_98 = arith.constant dense<0.000000e+00> : vector<8x32xf32>
    %100 = tpu.matmul %97, %99, %cst_98 {dimension_numbers = #tpu.dot_dimension_numbers<[1], [0], [0], [1], [0, 0, 1, 1], [], []>} : vector<8x16xf32>, vector<16x32xf32>, vector<8x32xf32> -> vector<8x32xf32>
    %101 = arith.addf %65, %100 : vector<8x32xf32>
    %102 = vector.broadcast %7 : vector<1x32xf32> to vector<8x32xf32>
    %103 = arith.addf %101, %102 : vector<8x32xf32>
    %cst_99 = arith.constant dense<0.000000e+00> : vector<8xf32>
    %104 = vector.multi_reduction <add>, %103, %cst_99 [1] : vector<8x32xf32> to vector<8xf32>
    %105 = vector.shape_cast %104 : vector<8xf32> to vector<8x1xf32>
    %cst_100 = arith.constant 3.200000e+01 : f32
    %106 = vector.broadcast %cst_100 : f32 to vector<8x1xf32>
    %107 = arith.divf %105, %106 : vector<8x1xf32>
    %108 = vector.broadcast %107 : vector<8x1xf32> to vector<8x32xf32>
    %109 = arith.subf %103, %108 : vector<8x32xf32>
    %110 = arith.mulf %109, %109 : vector<8x32xf32>
    %cst_101 = arith.constant dense<0.000000e+00> : vector<8xf32>
    %111 = vector.multi_reduction <add>, %110, %cst_101 [1] : vector<8x32xf32> to vector<8xf32>
    %112 = vector.shape_cast %111 : vector<8xf32> to vector<8x1xf32>
    %cst_102 = arith.constant 3.200000e+01 : f32
    %113 = vector.broadcast %cst_102 : f32 to vector<8x1xf32>
    %114 = arith.divf %112, %113 : vector<8x1xf32>
    %cst_103 = arith.constant 9.99999974E-6 : f32
    %115 = vector.broadcast %cst_103 : f32 to vector<8x1xf32>
    %116 = arith.addf %114, %115 : vector<8x1xf32>
    %117 = math.rsqrt %116 : vector<8x1xf32>
    %118 = vector.broadcast %117 : vector<8x1xf32> to vector<8x32xf32>
    %119 = arith.mulf %109, %118 : vector<8x32xf32>
    %120 = vector.broadcast %3 : vector<1x32xf32> to vector<8x32xf32>
    %121 = arith.mulf %119, %120 : vector<8x32xf32>
    %122 = vector.broadcast %4 : vector<1x32xf32> to vector<8x32xf32>
    %123 = arith.addf %121, %122 : vector<8x32xf32>
    %124 = arith.addf %0, %123 : vector<8x32xf32>
    %cst_104 = arith.constant dense<0.000000e+00> : vector<8xf32>
    %125 = vector.multi_reduction <add>, %124, %cst_104 [1] : vector<8x32xf32> to vector<8xf32>
    %126 = vector.shape_cast %125 : vector<8xf32> to vector<8x1xf32>
    %cst_105 = arith.constant 3.200000e+01 : f32
    %127 = vector.broadcast %cst_105 : f32 to vector<8x1xf32>
    %128 = arith.divf %126, %127 : vector<8x1xf32>
    %129 = vector.broadcast %128 : vector<8x1xf32> to vector<8x32xf32>
    %130 = arith.subf %124, %129 : vector<8x32xf32>
    %131 = arith.mulf %130, %130 : vector<8x32xf32>
    %cst_106 = arith.constant dense<0.000000e+00> : vector<8xf32>
    %132 = vector.multi_reduction <add>, %131, %cst_106 [1] : vector<8x32xf32> to vector<8xf32>
    %133 = vector.shape_cast %132 : vector<8xf32> to vector<8x1xf32>
    %cst_107 = arith.constant 3.200000e+01 : f32
    %134 = vector.broadcast %cst_107 : f32 to vector<8x1xf32>
    %135 = arith.divf %133, %134 : vector<8x1xf32>
    %cst_108 = arith.constant 9.99999974E-6 : f32
    %136 = vector.broadcast %cst_108 : f32 to vector<8x1xf32>
    %137 = arith.addf %135, %136 : vector<8x1xf32>
    %138 = math.rsqrt %137 : vector<8x1xf32>
    %139 = vector.broadcast %138 : vector<8x1xf32> to vector<8x32xf32>
    %140 = arith.mulf %130, %139 : vector<8x32xf32>
    %141 = vector.broadcast %5 : vector<1x32xf32> to vector<8x32xf32>
    %142 = arith.mulf %140, %141 : vector<8x32xf32>
    %143 = vector.broadcast %6 : vector<1x32xf32> to vector<8x32xf32>
    %144 = arith.addf %142, %143 : vector<8x32xf32>
    %c0_109 = arith.constant 0 : index
    %c0_110 = arith.constant 0 : index
    %c0_111 = arith.constant 0 : index
    %145 = vector.load %arg5[%c0_109, %c0_110, %c0_111] : memref<3x32x64xf32, #tpu.memory_space<vmem>>, vector<1x32x64xf32>
    %146 = vector.shape_cast %145 : vector<1x32x64xf32> to vector<32x64xf32>
    %cst_112 = arith.constant dense<0.000000e+00> : vector<8x64xf32>
    %147 = tpu.matmul %144, %146, %cst_112 {dimension_numbers = #tpu.dot_dimension_numbers<[1], [0], [0], [1], [0, 0, 1, 1], [], []>} : vector<8x32xf32>, vector<32x64xf32>, vector<8x64xf32> -> vector<8x64xf32>
    %c0_113 = arith.constant 0 : index
    %c0_114 = arith.constant 0 : index
    %c0_115 = arith.constant 0 : index
    %148 = vector.load %arg6[%c0_113, %c0_114, %c0_115] : memref<3x1x64xf32, #tpu.memory_space<vmem>>, vector<1x1x64xf32>
    %149 = vector.shape_cast %148 : vector<1x1x64xf32> to vector<1x64xf32>
    %150 = vector.broadcast %149 : vector<1x64xf32> to vector<8x64xf32>
    %151 = arith.addf %147, %150 : vector<8x64xf32>
    %152 = arith.mulf %151, %151 : vector<8x64xf32>
    %153 = arith.mulf %151, %152 : vector<8x64xf32>
    %cst_116 = arith.constant 4.471500e-02 : f32
    %154 = vector.broadcast %cst_116 : f32 to vector<8x64xf32>
    %155 = arith.mulf %154, %153 : vector<8x64xf32>
    %156 = arith.addf %151, %155 : vector<8x64xf32>
    %cst_117 = arith.constant 0.797884583 : f32
    %157 = vector.broadcast %cst_117 : f32 to vector<8x64xf32>
    %158 = arith.mulf %157, %156 : vector<8x64xf32>
    %159 = math.tanh %158 : vector<8x64xf32>
    %cst_118 = arith.constant 1.000000e+00 : f32
    %160 = vector.broadcast %cst_118 : f32 to vector<8x64xf32>
    %161 = arith.addf %160, %159 : vector<8x64xf32>
    %cst_119 = arith.constant 5.000000e-01 : f32
    %162 = vector.broadcast %cst_119 : f32 to vector<8x64xf32>
    %163 = arith.mulf %162, %161 : vector<8x64xf32>
    %164 = arith.mulf %151, %163 : vector<8x64xf32>
    %c0_120 = arith.constant 0 : index
    %c0_121 = arith.constant 0 : index
    %c0_122 = arith.constant 0 : index
    %165 = vector.load %arg7[%c0_120, %c0_121, %c0_122] : memref<3x64x32xf32, #tpu.memory_space<vmem>>, vector<1x64x32xf32>
    %166 = vector.shape_cast %165 : vector<1x64x32xf32> to vector<64x32xf32>
    %cst_123 = arith.constant dense<0.000000e+00> : vector<8x32xf32>
    %167 = tpu.matmul %164, %166, %cst_123 {dimension_numbers = #tpu.dot_dimension_numbers<[1], [0], [0], [1], [0, 0, 1, 1], [], []>} : vector<8x64xf32>, vector<64x32xf32>, vector<8x32xf32> -> vector<8x32xf32>
    %168 = arith.addf %124, %167 : vector<8x32xf32>
    %169 = vector.broadcast %8 : vector<1x32xf32> to vector<8x32xf32>
    %170 = arith.addf %168, %169 : vector<8x32xf32>
    %c8 = arith.constant 8 : index
    %c0_124 = arith.constant 0 : index
    %171 = vector.load %arg8[%c8, %c0_124] : memref<26x32xf32, #tpu.memory_space<vmem>>, vector<1x32xf32>
    %c9 = arith.constant 9 : index
    %c0_125 = arith.constant 0 : index
    %172 = vector.load %arg8[%c9, %c0_125] : memref<26x32xf32, #tpu.memory_space<vmem>>, vector<1x32xf32>
    %c10 = arith.constant 10 : index
    %c0_126 = arith.constant 0 : index
    %173 = vector.load %arg8[%c10, %c0_126] : memref<26x32xf32, #tpu.memory_space<vmem>>, vector<1x32xf32>
    %c11 = arith.constant 11 : index
    %c0_127 = arith.constant 0 : index
    %174 = vector.load %arg8[%c11, %c0_127] : memref<26x32xf32, #tpu.memory_space<vmem>>, vector<1x32xf32>
    %c12 = arith.constant 12 : index
    %c0_128 = arith.constant 0 : index
    %175 = vector.load %arg8[%c12, %c0_128] : memref<26x32xf32, #tpu.memory_space<vmem>>, vector<1x32xf32>
    %c13 = arith.constant 13 : index
    %c0_129 = arith.constant 0 : index
    %176 = vector.load %arg8[%c13, %c0_129] : memref<26x32xf32, #tpu.memory_space<vmem>>, vector<1x32xf32>
    %c14 = arith.constant 14 : index
    %c0_130 = arith.constant 0 : index
    %177 = vector.load %arg8[%c14, %c0_130] : memref<26x32xf32, #tpu.memory_space<vmem>>, vector<1x32xf32>
    %c15 = arith.constant 15 : index
    %c0_131 = arith.constant 0 : index
    %178 = vector.load %arg8[%c15, %c0_131] : memref<26x32xf32, #tpu.memory_space<vmem>>, vector<1x32xf32>
    %cst_132 = arith.constant dense<0.000000e+00> : vector<8xf32>
    %179 = vector.multi_reduction <add>, %170, %cst_132 [1] : vector<8x32xf32> to vector<8xf32>
    %180 = vector.shape_cast %179 : vector<8xf32> to vector<8x1xf32>
    %cst_133 = arith.constant 3.200000e+01 : f32
    %181 = vector.broadcast %cst_133 : f32 to vector<8x1xf32>
    %182 = arith.divf %180, %181 : vector<8x1xf32>
    %183 = vector.broadcast %182 : vector<8x1xf32> to vector<8x32xf32>
    %184 = arith.subf %170, %183 : vector<8x32xf32>
    %185 = arith.mulf %184, %184 : vector<8x32xf32>
    %cst_134 = arith.constant dense<0.000000e+00> : vector<8xf32>
    %186 = vector.multi_reduction <add>, %185, %cst_134 [1] : vector<8x32xf32> to vector<8xf32>
    %187 = vector.shape_cast %186 : vector<8xf32> to vector<8x1xf32>
    %cst_135 = arith.constant 3.200000e+01 : f32
    %188 = vector.broadcast %cst_135 : f32 to vector<8x1xf32>
    %189 = arith.divf %187, %188 : vector<8x1xf32>
    %cst_136 = arith.constant 9.99999974E-6 : f32
    %190 = vector.broadcast %cst_136 : f32 to vector<8x1xf32>
    %191 = arith.addf %189, %190 : vector<8x1xf32>
    %192 = math.rsqrt %191 : vector<8x1xf32>
    %193 = vector.broadcast %192 : vector<8x1xf32> to vector<8x32xf32>
    %194 = arith.mulf %184, %193 : vector<8x32xf32>
    %195 = vector.broadcast %171 : vector<1x32xf32> to vector<8x32xf32>
    %196 = arith.mulf %194, %195 : vector<8x32xf32>
    %197 = vector.broadcast %172 : vector<1x32xf32> to vector<8x32xf32>
    %198 = arith.addf %196, %197 : vector<8x32xf32>
    %cst_137 = arith.constant 0.000000e+00 : f32
    %199 = vector.broadcast %cst_137 : f32 to vector<8x32xf32>
    %c1_138 = arith.constant 1 : index
    %c0_139 = arith.constant 0 : index
    %c0_140 = arith.constant 0 : index
    %c0_141 = arith.constant 0 : index
    %c0_142 = arith.constant 0 : index
    %200 = vector.load %arg2[%c1_138, %c0_139, %c0_140, %c0_141, %c0_142] : memref<3x2x3x32x16xf32, #tpu.memory_space<vmem>>, vector<1x1x1x32x16xf32>
    %201 = vector.shape_cast %200 : vector<1x1x1x32x16xf32> to vector<32x16xf32>
    %cst_143 = arith.constant dense<0.000000e+00> : vector<8x16xf32>
    %202 = tpu.matmul %198, %201, %cst_143 {dimension_numbers = #tpu.dot_dimension_numbers<[1], [0], [0], [1], [0, 0, 1, 1], [], []>} : vector<8x32xf32>, vector<32x16xf32>, vector<8x16xf32> -> vector<8x16xf32>
    %c1_144 = arith.constant 1 : index
    %c0_145 = arith.constant 0 : index
    %c0_146 = arith.constant 0 : index
    %c0_147 = arith.constant 0 : index
    %c0_148 = arith.constant 0 : index
    %203 = vector.load %arg3[%c1_144, %c0_145, %c0_146, %c0_147, %c0_148] : memref<3x2x3x1x16xf32, #tpu.memory_space<vmem>>, vector<1x1x1x1x16xf32>
    %204 = vector.shape_cast %203 : vector<1x1x1x1x16xf32> to vector<1x16xf32>
    %205 = vector.broadcast %204 : vector<1x16xf32> to vector<8x16xf32>
    %206 = arith.addf %202, %205 : vector<8x16xf32>
    %c1_149 = arith.constant 1 : index
    %c0_150 = arith.constant 0 : index
    %c1_151 = arith.constant 1 : index
    %c0_152 = arith.constant 0 : index
    %c0_153 = arith.constant 0 : index
    %207 = vector.load %arg2[%c1_149, %c0_150, %c1_151, %c0_152, %c0_153] : memref<3x2x3x32x16xf32, #tpu.memory_space<vmem>>, vector<1x1x1x32x16xf32>
    %208 = vector.shape_cast %207 : vector<1x1x1x32x16xf32> to vector<32x16xf32>
    %cst_154 = arith.constant dense<0.000000e+00> : vector<8x16xf32>
    %209 = tpu.matmul %198, %208, %cst_154 {dimension_numbers = #tpu.dot_dimension_numbers<[1], [0], [0], [1], [0, 0, 1, 1], [], []>} : vector<8x32xf32>, vector<32x16xf32>, vector<8x16xf32> -> vector<8x16xf32>
    %c1_155 = arith.constant 1 : index
    %c0_156 = arith.constant 0 : index
    %c1_157 = arith.constant 1 : index
    %c0_158 = arith.constant 0 : index
    %c0_159 = arith.constant 0 : index
    %210 = vector.load %arg3[%c1_155, %c0_156, %c1_157, %c0_158, %c0_159] : memref<3x2x3x1x16xf32, #tpu.memory_space<vmem>>, vector<1x1x1x1x16xf32>
    %211 = vector.shape_cast %210 : vector<1x1x1x1x16xf32> to vector<1x16xf32>
    %212 = vector.broadcast %211 : vector<1x16xf32> to vector<8x16xf32>
    %213 = arith.addf %209, %212 : vector<8x16xf32>
    %c1_160 = arith.constant 1 : index
    %c0_161 = arith.constant 0 : index
    %c2_162 = arith.constant 2 : index
    %c0_163 = arith.constant 0 : index
    %c0_164 = arith.constant 0 : index
    %214 = vector.load %arg2[%c1_160, %c0_161, %c2_162, %c0_163, %c0_164] : memref<3x2x3x32x16xf32, #tpu.memory_space<vmem>>, vector<1x1x1x32x16xf32>
    %215 = vector.shape_cast %214 : vector<1x1x1x32x16xf32> to vector<32x16xf32>
    %cst_165 = arith.constant dense<0.000000e+00> : vector<8x16xf32>
    %216 = tpu.matmul %198, %215, %cst_165 {dimension_numbers = #tpu.dot_dimension_numbers<[1], [0], [0], [1], [0, 0, 1, 1], [], []>} : vector<8x32xf32>, vector<32x16xf32>, vector<8x16xf32> -> vector<8x16xf32>
    %c1_166 = arith.constant 1 : index
    %c0_167 = arith.constant 0 : index
    %c2_168 = arith.constant 2 : index
    %c0_169 = arith.constant 0 : index
    %c0_170 = arith.constant 0 : index
    %217 = vector.load %arg3[%c1_166, %c0_167, %c2_168, %c0_169, %c0_170] : memref<3x2x3x1x16xf32, #tpu.memory_space<vmem>>, vector<1x1x1x1x16xf32>
    %218 = vector.shape_cast %217 : vector<1x1x1x1x16xf32> to vector<1x16xf32>
    %219 = vector.broadcast %218 : vector<1x16xf32> to vector<8x16xf32>
    %220 = arith.addf %216, %219 : vector<8x16xf32>
    %cst_171 = arith.constant dense<0.000000e+00> : vector<8x8xf32>
    %221 = tpu.matmul %206, %213, %cst_171 {dimension_numbers = #tpu.dot_dimension_numbers<[1], [1], [0], [0], [0, 0, 1, 0], [], []>} : vector<8x16xf32>, vector<8x16xf32>, vector<8x8xf32> -> vector<8x8xf32>
    %cst_172 = arith.constant dense<0xFF800000> : vector<8xf32>
    %222 = vector.multi_reduction <maximumf>, %221, %cst_172 [1] : vector<8x8xf32> to vector<8xf32>
    %223 = vector.shape_cast %222 : vector<8xf32> to vector<8x1xf32>
    %224 = vector.broadcast %223 : vector<8x1xf32> to vector<8x8xf32>
    %225 = arith.subf %221, %224 : vector<8x8xf32>
    %226 = math.exp %225 : vector<8x8xf32>
    %cst_173 = arith.constant dense<0.000000e+00> : vector<8xf32>
    %227 = vector.multi_reduction <add>, %226, %cst_173 [1] : vector<8x8xf32> to vector<8xf32>
    %228 = vector.shape_cast %227 : vector<8xf32> to vector<8x1xf32>
    %229 = vector.broadcast %228 : vector<8x1xf32> to vector<8x8xf32>
    %230 = arith.divf %226, %229 : vector<8x8xf32>
    %cst_174 = arith.constant dense<0.000000e+00> : vector<8x16xf32>
    %231 = tpu.matmul %230, %220, %cst_174 {dimension_numbers = #tpu.dot_dimension_numbers<[1], [0], [0], [1], [0, 0, 1, 1], [], []>} : vector<8x8xf32>, vector<8x16xf32>, vector<8x16xf32> -> vector<8x16xf32>
    %c1_175 = arith.constant 1 : index
    %c0_176 = arith.constant 0 : index
    %c0_177 = arith.constant 0 : index
    %c0_178 = arith.constant 0 : index
    %232 = vector.load %arg4[%c1_175, %c0_176, %c0_177, %c0_178] : memref<3x2x16x32xf32, #tpu.memory_space<vmem>>, vector<1x1x16x32xf32>
    %233 = vector.shape_cast %232 : vector<1x1x16x32xf32> to vector<16x32xf32>
    %cst_179 = arith.constant dense<0.000000e+00> : vector<8x32xf32>
    %234 = tpu.matmul %231, %233, %cst_179 {dimension_numbers = #tpu.dot_dimension_numbers<[1], [0], [0], [1], [0, 0, 1, 1], [], []>} : vector<8x16xf32>, vector<16x32xf32>, vector<8x32xf32> -> vector<8x32xf32>
    %235 = arith.addf %199, %234 : vector<8x32xf32>
    %c1_180 = arith.constant 1 : index
    %c1_181 = arith.constant 1 : index
    %c0_182 = arith.constant 0 : index
    %c0_183 = arith.constant 0 : index
    %c0_184 = arith.constant 0 : index
    %236 = vector.load %arg2[%c1_180, %c1_181, %c0_182, %c0_183, %c0_184] : memref<3x2x3x32x16xf32, #tpu.memory_space<vmem>>, vector<1x1x1x32x16xf32>
    %237 = vector.shape_cast %236 : vector<1x1x1x32x16xf32> to vector<32x16xf32>
    %cst_185 = arith.constant dense<0.000000e+00> : vector<8x16xf32>
    %238 = tpu.matmul %198, %237, %cst_185 {dimension_numbers = #tpu.dot_dimension_numbers<[1], [0], [0], [1], [0, 0, 1, 1], [], []>} : vector<8x32xf32>, vector<32x16xf32>, vector<8x16xf32> -> vector<8x16xf32>
    %c1_186 = arith.constant 1 : index
    %c1_187 = arith.constant 1 : index
    %c0_188 = arith.constant 0 : index
    %c0_189 = arith.constant 0 : index
    %c0_190 = arith.constant 0 : index
    %239 = vector.load %arg3[%c1_186, %c1_187, %c0_188, %c0_189, %c0_190] : memref<3x2x3x1x16xf32, #tpu.memory_space<vmem>>, vector<1x1x1x1x16xf32>
    %240 = vector.shape_cast %239 : vector<1x1x1x1x16xf32> to vector<1x16xf32>
    %241 = vector.broadcast %240 : vector<1x16xf32> to vector<8x16xf32>
    %242 = arith.addf %238, %241 : vector<8x16xf32>
    %c1_191 = arith.constant 1 : index
    %c1_192 = arith.constant 1 : index
    %c1_193 = arith.constant 1 : index
    %c0_194 = arith.constant 0 : index
    %c0_195 = arith.constant 0 : index
    %243 = vector.load %arg2[%c1_191, %c1_192, %c1_193, %c0_194, %c0_195] : memref<3x2x3x32x16xf32, #tpu.memory_space<vmem>>, vector<1x1x1x32x16xf32>
    %244 = vector.shape_cast %243 : vector<1x1x1x32x16xf32> to vector<32x16xf32>
    %cst_196 = arith.constant dense<0.000000e+00> : vector<8x16xf32>
    %245 = tpu.matmul %198, %244, %cst_196 {dimension_numbers = #tpu.dot_dimension_numbers<[1], [0], [0], [1], [0, 0, 1, 1], [], []>} : vector<8x32xf32>, vector<32x16xf32>, vector<8x16xf32> -> vector<8x16xf32>
    %c1_197 = arith.constant 1 : index
    %c1_198 = arith.constant 1 : index
    %c1_199 = arith.constant 1 : index
    %c0_200 = arith.constant 0 : index
    %c0_201 = arith.constant 0 : index
    %246 = vector.load %arg3[%c1_197, %c1_198, %c1_199, %c0_200, %c0_201] : memref<3x2x3x1x16xf32, #tpu.memory_space<vmem>>, vector<1x1x1x1x16xf32>
    %247 = vector.shape_cast %246 : vector<1x1x1x1x16xf32> to vector<1x16xf32>
    %248 = vector.broadcast %247 : vector<1x16xf32> to vector<8x16xf32>
    %249 = arith.addf %245, %248 : vector<8x16xf32>
    %c1_202 = arith.constant 1 : index
    %c1_203 = arith.constant 1 : index
    %c2_204 = arith.constant 2 : index
    %c0_205 = arith.constant 0 : index
    %c0_206 = arith.constant 0 : index
    %250 = vector.load %arg2[%c1_202, %c1_203, %c2_204, %c0_205, %c0_206] : memref<3x2x3x32x16xf32, #tpu.memory_space<vmem>>, vector<1x1x1x32x16xf32>
    %251 = vector.shape_cast %250 : vector<1x1x1x32x16xf32> to vector<32x16xf32>
    %cst_207 = arith.constant dense<0.000000e+00> : vector<8x16xf32>
    %252 = tpu.matmul %198, %251, %cst_207 {dimension_numbers = #tpu.dot_dimension_numbers<[1], [0], [0], [1], [0, 0, 1, 1], [], []>} : vector<8x32xf32>, vector<32x16xf32>, vector<8x16xf32> -> vector<8x16xf32>
    %c1_208 = arith.constant 1 : index
    %c1_209 = arith.constant 1 : index
    %c2_210 = arith.constant 2 : index
    %c0_211 = arith.constant 0 : index
    %c0_212 = arith.constant 0 : index
    %253 = vector.load %arg3[%c1_208, %c1_209, %c2_210, %c0_211, %c0_212] : memref<3x2x3x1x16xf32, #tpu.memory_space<vmem>>, vector<1x1x1x1x16xf32>
    %254 = vector.shape_cast %253 : vector<1x1x1x1x16xf32> to vector<1x16xf32>
    %255 = vector.broadcast %254 : vector<1x16xf32> to vector<8x16xf32>
    %256 = arith.addf %252, %255 : vector<8x16xf32>
    %cst_213 = arith.constant dense<0.000000e+00> : vector<8x8xf32>
    %257 = tpu.matmul %242, %249, %cst_213 {dimension_numbers = #tpu.dot_dimension_numbers<[1], [1], [0], [0], [0, 0, 1, 0], [], []>} : vector<8x16xf32>, vector<8x16xf32>, vector<8x8xf32> -> vector<8x8xf32>
    %cst_214 = arith.constant dense<0xFF800000> : vector<8xf32>
    %258 = vector.multi_reduction <maximumf>, %257, %cst_214 [1] : vector<8x8xf32> to vector<8xf32>
    %259 = vector.shape_cast %258 : vector<8xf32> to vector<8x1xf32>
    %260 = vector.broadcast %259 : vector<8x1xf32> to vector<8x8xf32>
    %261 = arith.subf %257, %260 : vector<8x8xf32>
    %262 = math.exp %261 : vector<8x8xf32>
    %cst_215 = arith.constant dense<0.000000e+00> : vector<8xf32>
    %263 = vector.multi_reduction <add>, %262, %cst_215 [1] : vector<8x8xf32> to vector<8xf32>
    %264 = vector.shape_cast %263 : vector<8xf32> to vector<8x1xf32>
    %265 = vector.broadcast %264 : vector<8x1xf32> to vector<8x8xf32>
    %266 = arith.divf %262, %265 : vector<8x8xf32>
    %cst_216 = arith.constant dense<0.000000e+00> : vector<8x16xf32>
    %267 = tpu.matmul %266, %256, %cst_216 {dimension_numbers = #tpu.dot_dimension_numbers<[1], [0], [0], [1], [0, 0, 1, 1], [], []>} : vector<8x8xf32>, vector<8x16xf32>, vector<8x16xf32> -> vector<8x16xf32>
    %c1_217 = arith.constant 1 : index
    %c1_218 = arith.constant 1 : index
    %c0_219 = arith.constant 0 : index
    %c0_220 = arith.constant 0 : index
    %268 = vector.load %arg4[%c1_217, %c1_218, %c0_219, %c0_220] : memref<3x2x16x32xf32, #tpu.memory_space<vmem>>, vector<1x1x16x32xf32>
    %269 = vector.shape_cast %268 : vector<1x1x16x32xf32> to vector<16x32xf32>
    %cst_221 = arith.constant dense<0.000000e+00> : vector<8x32xf32>
    %270 = tpu.matmul %267, %269, %cst_221 {dimension_numbers = #tpu.dot_dimension_numbers<[1], [0], [0], [1], [0, 0, 1, 1], [], []>} : vector<8x16xf32>, vector<16x32xf32>, vector<8x32xf32> -> vector<8x32xf32>
    %271 = arith.addf %235, %270 : vector<8x32xf32>
    %272 = vector.broadcast %177 : vector<1x32xf32> to vector<8x32xf32>
    %273 = arith.addf %271, %272 : vector<8x32xf32>
    %cst_222 = arith.constant dense<0.000000e+00> : vector<8xf32>
    %274 = vector.multi_reduction <add>, %273, %cst_222 [1] : vector<8x32xf32> to vector<8xf32>
    %275 = vector.shape_cast %274 : vector<8xf32> to vector<8x1xf32>
    %cst_223 = arith.constant 3.200000e+01 : f32
    %276 = vector.broadcast %cst_223 : f32 to vector<8x1xf32>
    %277 = arith.divf %275, %276 : vector<8x1xf32>
    %278 = vector.broadcast %277 : vector<8x1xf32> to vector<8x32xf32>
    %279 = arith.subf %273, %278 : vector<8x32xf32>
    %280 = arith.mulf %279, %279 : vector<8x32xf32>
    %cst_224 = arith.constant dense<0.000000e+00> : vector<8xf32>
    %281 = vector.multi_reduction <add>, %280, %cst_224 [1] : vector<8x32xf32> to vector<8xf32>
    %282 = vector.shape_cast %281 : vector<8xf32> to vector<8x1xf32>
    %cst_225 = arith.constant 3.200000e+01 : f32
    %283 = vector.broadcast %cst_225 : f32 to vector<8x1xf32>
    %284 = arith.divf %282, %283 : vector<8x1xf32>
    %cst_226 = arith.constant 9.99999974E-6 : f32
    %285 = vector.broadcast %cst_226 : f32 to vector<8x1xf32>
    %286 = arith.addf %284, %285 : vector<8x1xf32>
    %287 = math.rsqrt %286 : vector<8x1xf32>
    %288 = vector.broadcast %287 : vector<8x1xf32> to vector<8x32xf32>
    %289 = arith.mulf %279, %288 : vector<8x32xf32>
    %290 = vector.broadcast %173 : vector<1x32xf32> to vector<8x32xf32>
    %291 = arith.mulf %289, %290 : vector<8x32xf32>
    %292 = vector.broadcast %174 : vector<1x32xf32> to vector<8x32xf32>
    %293 = arith.addf %291, %292 : vector<8x32xf32>
    %294 = arith.addf %170, %293 : vector<8x32xf32>
    %cst_227 = arith.constant dense<0.000000e+00> : vector<8xf32>
    %295 = vector.multi_reduction <add>, %294, %cst_227 [1] : vector<8x32xf32> to vector<8xf32>
    %296 = vector.shape_cast %295 : vector<8xf32> to vector<8x1xf32>
    %cst_228 = arith.constant 3.200000e+01 : f32
    %297 = vector.broadcast %cst_228 : f32 to vector<8x1xf32>
    %298 = arith.divf %296, %297 : vector<8x1xf32>
    %299 = vector.broadcast %298 : vector<8x1xf32> to vector<8x32xf32>
    %300 = arith.subf %294, %299 : vector<8x32xf32>
    %301 = arith.mulf %300, %300 : vector<8x32xf32>
    %cst_229 = arith.constant dense<0.000000e+00> : vector<8xf32>
    %302 = vector.multi_reduction <add>, %301, %cst_229 [1] : vector<8x32xf32> to vector<8xf32>
    %303 = vector.shape_cast %302 : vector<8xf32> to vector<8x1xf32>
    %cst_230 = arith.constant 3.200000e+01 : f32
    %304 = vector.broadcast %cst_230 : f32 to vector<8x1xf32>
    %305 = arith.divf %303, %304 : vector<8x1xf32>
    %cst_231 = arith.constant 9.99999974E-6 : f32
    %306 = vector.broadcast %cst_231 : f32 to vector<8x1xf32>
    %307 = arith.addf %305, %306 : vector<8x1xf32>
    %308 = math.rsqrt %307 : vector<8x1xf32>
    %309 = vector.broadcast %308 : vector<8x1xf32> to vector<8x32xf32>
    %310 = arith.mulf %300, %309 : vector<8x32xf32>
    %311 = vector.broadcast %175 : vector<1x32xf32> to vector<8x32xf32>
    %312 = arith.mulf %310, %311 : vector<8x32xf32>
    %313 = vector.broadcast %176 : vector<1x32xf32> to vector<8x32xf32>
    %314 = arith.addf %312, %313 : vector<8x32xf32>
    %c1_232 = arith.constant 1 : index
    %c0_233 = arith.constant 0 : index
    %c0_234 = arith.constant 0 : index
    %315 = vector.load %arg5[%c1_232, %c0_233, %c0_234] : memref<3x32x64xf32, #tpu.memory_space<vmem>>, vector<1x32x64xf32>
    %316 = vector.shape_cast %315 : vector<1x32x64xf32> to vector<32x64xf32>
    %cst_235 = arith.constant dense<0.000000e+00> : vector<8x64xf32>
    %317 = tpu.matmul %314, %316, %cst_235 {dimension_numbers = #tpu.dot_dimension_numbers<[1], [0], [0], [1], [0, 0, 1, 1], [], []>} : vector<8x32xf32>, vector<32x64xf32>, vector<8x64xf32> -> vector<8x64xf32>
    %c1_236 = arith.constant 1 : index
    %c0_237 = arith.constant 0 : index
    %c0_238 = arith.constant 0 : index
    %318 = vector.load %arg6[%c1_236, %c0_237, %c0_238] : memref<3x1x64xf32, #tpu.memory_space<vmem>>, vector<1x1x64xf32>
    %319 = vector.shape_cast %318 : vector<1x1x64xf32> to vector<1x64xf32>
    %320 = vector.broadcast %319 : vector<1x64xf32> to vector<8x64xf32>
    %321 = arith.addf %317, %320 : vector<8x64xf32>
    %322 = arith.mulf %321, %321 : vector<8x64xf32>
    %323 = arith.mulf %321, %322 : vector<8x64xf32>
    %cst_239 = arith.constant 4.471500e-02 : f32
    %324 = vector.broadcast %cst_239 : f32 to vector<8x64xf32>
    %325 = arith.mulf %324, %323 : vector<8x64xf32>
    %326 = arith.addf %321, %325 : vector<8x64xf32>
    %cst_240 = arith.constant 0.797884583 : f32
    %327 = vector.broadcast %cst_240 : f32 to vector<8x64xf32>
    %328 = arith.mulf %327, %326 : vector<8x64xf32>
    %329 = math.tanh %328 : vector<8x64xf32>
    %cst_241 = arith.constant 1.000000e+00 : f32
    %330 = vector.broadcast %cst_241 : f32 to vector<8x64xf32>
    %331 = arith.addf %330, %329 : vector<8x64xf32>
    %cst_242 = arith.constant 5.000000e-01 : f32
    %332 = vector.broadcast %cst_242 : f32 to vector<8x64xf32>
    %333 = arith.mulf %332, %331 : vector<8x64xf32>
    %334 = arith.mulf %321, %333 : vector<8x64xf32>
    %c1_243 = arith.constant 1 : index
    %c0_244 = arith.constant 0 : index
    %c0_245 = arith.constant 0 : index
    %335 = vector.load %arg7[%c1_243, %c0_244, %c0_245] : memref<3x64x32xf32, #tpu.memory_space<vmem>>, vector<1x64x32xf32>
    %336 = vector.shape_cast %335 : vector<1x64x32xf32> to vector<64x32xf32>
    %cst_246 = arith.constant dense<0.000000e+00> : vector<8x32xf32>
    %337 = tpu.matmul %334, %336, %cst_246 {dimension_numbers = #tpu.dot_dimension_numbers<[1], [0], [0], [1], [0, 0, 1, 1], [], []>} : vector<8x64xf32>, vector<64x32xf32>, vector<8x32xf32> -> vector<8x32xf32>
    %338 = arith.addf %294, %337 : vector<8x32xf32>
    %339 = vector.broadcast %178 : vector<1x32xf32> to vector<8x32xf32>
    %340 = arith.addf %338, %339 : vector<8x32xf32>
    %c16 = arith.constant 16 : index
    %c0_247 = arith.constant 0 : index
    %341 = vector.load %arg8[%c16, %c0_247] : memref<26x32xf32, #tpu.memory_space<vmem>>, vector<1x32xf32>
    %c17 = arith.constant 17 : index
    %c0_248 = arith.constant 0 : index
    %342 = vector.load %arg8[%c17, %c0_248] : memref<26x32xf32, #tpu.memory_space<vmem>>, vector<1x32xf32>
    %c18 = arith.constant 18 : index
    %c0_249 = arith.constant 0 : index
    %343 = vector.load %arg8[%c18, %c0_249] : memref<26x32xf32, #tpu.memory_space<vmem>>, vector<1x32xf32>
    %c19 = arith.constant 19 : index
    %c0_250 = arith.constant 0 : index
    %344 = vector.load %arg8[%c19, %c0_250] : memref<26x32xf32, #tpu.memory_space<vmem>>, vector<1x32xf32>
    %c20 = arith.constant 20 : index
    %c0_251 = arith.constant 0 : index
    %345 = vector.load %arg8[%c20, %c0_251] : memref<26x32xf32, #tpu.memory_space<vmem>>, vector<1x32xf32>
    %c21 = arith.constant 21 : index
    %c0_252 = arith.constant 0 : index
    %346 = vector.load %arg8[%c21, %c0_252] : memref<26x32xf32, #tpu.memory_space<vmem>>, vector<1x32xf32>
    %c22 = arith.constant 22 : index
    %c0_253 = arith.constant 0 : index
    %347 = vector.load %arg8[%c22, %c0_253] : memref<26x32xf32, #tpu.memory_space<vmem>>, vector<1x32xf32>
    %c23 = arith.constant 23 : index
    %c0_254 = arith.constant 0 : index
    %348 = vector.load %arg8[%c23, %c0_254] : memref<26x32xf32, #tpu.memory_space<vmem>>, vector<1x32xf32>
    %cst_255 = arith.constant dense<0.000000e+00> : vector<8xf32>
    %349 = vector.multi_reduction <add>, %340, %cst_255 [1] : vector<8x32xf32> to vector<8xf32>
    %350 = vector.shape_cast %349 : vector<8xf32> to vector<8x1xf32>
    %cst_256 = arith.constant 3.200000e+01 : f32
    %351 = vector.broadcast %cst_256 : f32 to vector<8x1xf32>
    %352 = arith.divf %350, %351 : vector<8x1xf32>
    %353 = vector.broadcast %352 : vector<8x1xf32> to vector<8x32xf32>
    %354 = arith.subf %340, %353 : vector<8x32xf32>
    %355 = arith.mulf %354, %354 : vector<8x32xf32>
    %cst_257 = arith.constant dense<0.000000e+00> : vector<8xf32>
    %356 = vector.multi_reduction <add>, %355, %cst_257 [1] : vector<8x32xf32> to vector<8xf32>
    %357 = vector.shape_cast %356 : vector<8xf32> to vector<8x1xf32>
    %cst_258 = arith.constant 3.200000e+01 : f32
    %358 = vector.broadcast %cst_258 : f32 to vector<8x1xf32>
    %359 = arith.divf %357, %358 : vector<8x1xf32>
    %cst_259 = arith.constant 9.99999974E-6 : f32
    %360 = vector.broadcast %cst_259 : f32 to vector<8x1xf32>
    %361 = arith.addf %359, %360 : vector<8x1xf32>
    %362 = math.rsqrt %361 : vector<8x1xf32>
    %363 = vector.broadcast %362 : vector<8x1xf32> to vector<8x32xf32>
    %364 = arith.mulf %354, %363 : vector<8x32xf32>
    %365 = vector.broadcast %341 : vector<1x32xf32> to vector<8x32xf32>
    %366 = arith.mulf %364, %365 : vector<8x32xf32>
    %367 = vector.broadcast %342 : vector<1x32xf32> to vector<8x32xf32>
    %368 = arith.addf %366, %367 : vector<8x32xf32>
    %cst_260 = arith.constant 0.000000e+00 : f32
    %369 = vector.broadcast %cst_260 : f32 to vector<8x32xf32>
    %c2_261 = arith.constant 2 : index
    %c0_262 = arith.constant 0 : index
    %c0_263 = arith.constant 0 : index
    %c0_264 = arith.constant 0 : index
    %c0_265 = arith.constant 0 : index
    %370 = vector.load %arg2[%c2_261, %c0_262, %c0_263, %c0_264, %c0_265] : memref<3x2x3x32x16xf32, #tpu.memory_space<vmem>>, vector<1x1x1x32x16xf32>
    %371 = vector.shape_cast %370 : vector<1x1x1x32x16xf32> to vector<32x16xf32>
    %cst_266 = arith.constant dense<0.000000e+00> : vector<8x16xf32>
    %372 = tpu.matmul %368, %371, %cst_266 {dimension_numbers = #tpu.dot_dimension_numbers<[1], [0], [0], [1], [0, 0, 1, 1], [], []>} : vector<8x32xf32>, vector<32x16xf32>, vector<8x16xf32> -> vector<8x16xf32>
    %c2_267 = arith.constant 2 : index
    %c0_268 = arith.constant 0 : index
    %c0_269 = arith.constant 0 : index
    %c0_270 = arith.constant 0 : index
    %c0_271 = arith.constant 0 : index
    %373 = vector.load %arg3[%c2_267, %c0_268, %c0_269, %c0_270, %c0_271] : memref<3x2x3x1x16xf32, #tpu.memory_space<vmem>>, vector<1x1x1x1x16xf32>
    %374 = vector.shape_cast %373 : vector<1x1x1x1x16xf32> to vector<1x16xf32>
    %375 = vector.broadcast %374 : vector<1x16xf32> to vector<8x16xf32>
    %376 = arith.addf %372, %375 : vector<8x16xf32>
    %c2_272 = arith.constant 2 : index
    %c0_273 = arith.constant 0 : index
    %c1_274 = arith.constant 1 : index
    %c0_275 = arith.constant 0 : index
    %c0_276 = arith.constant 0 : index
    %377 = vector.load %arg2[%c2_272, %c0_273, %c1_274, %c0_275, %c0_276] : memref<3x2x3x32x16xf32, #tpu.memory_space<vmem>>, vector<1x1x1x32x16xf32>
    %378 = vector.shape_cast %377 : vector<1x1x1x32x16xf32> to vector<32x16xf32>
    %cst_277 = arith.constant dense<0.000000e+00> : vector<8x16xf32>
    %379 = tpu.matmul %368, %378, %cst_277 {dimension_numbers = #tpu.dot_dimension_numbers<[1], [0], [0], [1], [0, 0, 1, 1], [], []>} : vector<8x32xf32>, vector<32x16xf32>, vector<8x16xf32> -> vector<8x16xf32>
    %c2_278 = arith.constant 2 : index
    %c0_279 = arith.constant 0 : index
    %c1_280 = arith.constant 1 : index
    %c0_281 = arith.constant 0 : index
    %c0_282 = arith.constant 0 : index
    %380 = vector.load %arg3[%c2_278, %c0_279, %c1_280, %c0_281, %c0_282] : memref<3x2x3x1x16xf32, #tpu.memory_space<vmem>>, vector<1x1x1x1x16xf32>
    %381 = vector.shape_cast %380 : vector<1x1x1x1x16xf32> to vector<1x16xf32>
    %382 = vector.broadcast %381 : vector<1x16xf32> to vector<8x16xf32>
    %383 = arith.addf %379, %382 : vector<8x16xf32>
    %c2_283 = arith.constant 2 : index
    %c0_284 = arith.constant 0 : index
    %c2_285 = arith.constant 2 : index
    %c0_286 = arith.constant 0 : index
    %c0_287 = arith.constant 0 : index
    %384 = vector.load %arg2[%c2_283, %c0_284, %c2_285, %c0_286, %c0_287] : memref<3x2x3x32x16xf32, #tpu.memory_space<vmem>>, vector<1x1x1x32x16xf32>
    %385 = vector.shape_cast %384 : vector<1x1x1x32x16xf32> to vector<32x16xf32>
    %cst_288 = arith.constant dense<0.000000e+00> : vector<8x16xf32>
    %386 = tpu.matmul %368, %385, %cst_288 {dimension_numbers = #tpu.dot_dimension_numbers<[1], [0], [0], [1], [0, 0, 1, 1], [], []>} : vector<8x32xf32>, vector<32x16xf32>, vector<8x16xf32> -> vector<8x16xf32>
    %c2_289 = arith.constant 2 : index
    %c0_290 = arith.constant 0 : index
    %c2_291 = arith.constant 2 : index
    %c0_292 = arith.constant 0 : index
    %c0_293 = arith.constant 0 : index
    %387 = vector.load %arg3[%c2_289, %c0_290, %c2_291, %c0_292, %c0_293] : memref<3x2x3x1x16xf32, #tpu.memory_space<vmem>>, vector<1x1x1x1x16xf32>
    %388 = vector.shape_cast %387 : vector<1x1x1x1x16xf32> to vector<1x16xf32>
    %389 = vector.broadcast %388 : vector<1x16xf32> to vector<8x16xf32>
    %390 = arith.addf %386, %389 : vector<8x16xf32>
    %cst_294 = arith.constant dense<0.000000e+00> : vector<8x8xf32>
    %391 = tpu.matmul %376, %383, %cst_294 {dimension_numbers = #tpu.dot_dimension_numbers<[1], [1], [0], [0], [0, 0, 1, 0], [], []>} : vector<8x16xf32>, vector<8x16xf32>, vector<8x8xf32> -> vector<8x8xf32>
    %cst_295 = arith.constant dense<0xFF800000> : vector<8xf32>
    %392 = vector.multi_reduction <maximumf>, %391, %cst_295 [1] : vector<8x8xf32> to vector<8xf32>
    %393 = vector.shape_cast %392 : vector<8xf32> to vector<8x1xf32>
    %394 = vector.broadcast %393 : vector<8x1xf32> to vector<8x8xf32>
    %395 = arith.subf %391, %394 : vector<8x8xf32>
    %396 = math.exp %395 : vector<8x8xf32>
    %cst_296 = arith.constant dense<0.000000e+00> : vector<8xf32>
    %397 = vector.multi_reduction <add>, %396, %cst_296 [1] : vector<8x8xf32> to vector<8xf32>
    %398 = vector.shape_cast %397 : vector<8xf32> to vector<8x1xf32>
    %399 = vector.broadcast %398 : vector<8x1xf32> to vector<8x8xf32>
    %400 = arith.divf %396, %399 : vector<8x8xf32>
    %cst_297 = arith.constant dense<0.000000e+00> : vector<8x16xf32>
    %401 = tpu.matmul %400, %390, %cst_297 {dimension_numbers = #tpu.dot_dimension_numbers<[1], [0], [0], [1], [0, 0, 1, 1], [], []>} : vector<8x8xf32>, vector<8x16xf32>, vector<8x16xf32> -> vector<8x16xf32>
    %c2_298 = arith.constant 2 : index
    %c0_299 = arith.constant 0 : index
    %c0_300 = arith.constant 0 : index
    %c0_301 = arith.constant 0 : index
    %402 = vector.load %arg4[%c2_298, %c0_299, %c0_300, %c0_301] : memref<3x2x16x32xf32, #tpu.memory_space<vmem>>, vector<1x1x16x32xf32>
    %403 = vector.shape_cast %402 : vector<1x1x16x32xf32> to vector<16x32xf32>
    %cst_302 = arith.constant dense<0.000000e+00> : vector<8x32xf32>
    %404 = tpu.matmul %401, %403, %cst_302 {dimension_numbers = #tpu.dot_dimension_numbers<[1], [0], [0], [1], [0, 0, 1, 1], [], []>} : vector<8x16xf32>, vector<16x32xf32>, vector<8x32xf32> -> vector<8x32xf32>
    %405 = arith.addf %369, %404 : vector<8x32xf32>
    %c2_303 = arith.constant 2 : index
    %c1_304 = arith.constant 1 : index
    %c0_305 = arith.constant 0 : index
    %c0_306 = arith.constant 0 : index
    %c0_307 = arith.constant 0 : index
    %406 = vector.load %arg2[%c2_303, %c1_304, %c0_305, %c0_306, %c0_307] : memref<3x2x3x32x16xf32, #tpu.memory_space<vmem>>, vector<1x1x1x32x16xf32>
    %407 = vector.shape_cast %406 : vector<1x1x1x32x16xf32> to vector<32x16xf32>
    %cst_308 = arith.constant dense<0.000000e+00> : vector<8x16xf32>
    %408 = tpu.matmul %368, %407, %cst_308 {dimension_numbers = #tpu.dot_dimension_numbers<[1], [0], [0], [1], [0, 0, 1, 1], [], []>} : vector<8x32xf32>, vector<32x16xf32>, vector<8x16xf32> -> vector<8x16xf32>
    %c2_309 = arith.constant 2 : index
    %c1_310 = arith.constant 1 : index
    %c0_311 = arith.constant 0 : index
    %c0_312 = arith.constant 0 : index
    %c0_313 = arith.constant 0 : index
    %409 = vector.load %arg3[%c2_309, %c1_310, %c0_311, %c0_312, %c0_313] : memref<3x2x3x1x16xf32, #tpu.memory_space<vmem>>, vector<1x1x1x1x16xf32>
    %410 = vector.shape_cast %409 : vector<1x1x1x1x16xf32> to vector<1x16xf32>
    %411 = vector.broadcast %410 : vector<1x16xf32> to vector<8x16xf32>
    %412 = arith.addf %408, %411 : vector<8x16xf32>
    %c2_314 = arith.constant 2 : index
    %c1_315 = arith.constant 1 : index
    %c1_316 = arith.constant 1 : index
    %c0_317 = arith.constant 0 : index
    %c0_318 = arith.constant 0 : index
    %413 = vector.load %arg2[%c2_314, %c1_315, %c1_316, %c0_317, %c0_318] : memref<3x2x3x32x16xf32, #tpu.memory_space<vmem>>, vector<1x1x1x32x16xf32>
    %414 = vector.shape_cast %413 : vector<1x1x1x32x16xf32> to vector<32x16xf32>
    %cst_319 = arith.constant dense<0.000000e+00> : vector<8x16xf32>
    %415 = tpu.matmul %368, %414, %cst_319 {dimension_numbers = #tpu.dot_dimension_numbers<[1], [0], [0], [1], [0, 0, 1, 1], [], []>} : vector<8x32xf32>, vector<32x16xf32>, vector<8x16xf32> -> vector<8x16xf32>
    %c2_320 = arith.constant 2 : index
    %c1_321 = arith.constant 1 : index
    %c1_322 = arith.constant 1 : index
    %c0_323 = arith.constant 0 : index
    %c0_324 = arith.constant 0 : index
    %416 = vector.load %arg3[%c2_320, %c1_321, %c1_322, %c0_323, %c0_324] : memref<3x2x3x1x16xf32, #tpu.memory_space<vmem>>, vector<1x1x1x1x16xf32>
    %417 = vector.shape_cast %416 : vector<1x1x1x1x16xf32> to vector<1x16xf32>
    %418 = vector.broadcast %417 : vector<1x16xf32> to vector<8x16xf32>
    %419 = arith.addf %415, %418 : vector<8x16xf32>
    %c2_325 = arith.constant 2 : index
    %c1_326 = arith.constant 1 : index
    %c2_327 = arith.constant 2 : index
    %c0_328 = arith.constant 0 : index
    %c0_329 = arith.constant 0 : index
    %420 = vector.load %arg2[%c2_325, %c1_326, %c2_327, %c0_328, %c0_329] : memref<3x2x3x32x16xf32, #tpu.memory_space<vmem>>, vector<1x1x1x32x16xf32>
    %421 = vector.shape_cast %420 : vector<1x1x1x32x16xf32> to vector<32x16xf32>
    %cst_330 = arith.constant dense<0.000000e+00> : vector<8x16xf32>
    %422 = tpu.matmul %368, %421, %cst_330 {dimension_numbers = #tpu.dot_dimension_numbers<[1], [0], [0], [1], [0, 0, 1, 1], [], []>} : vector<8x32xf32>, vector<32x16xf32>, vector<8x16xf32> -> vector<8x16xf32>
    %c2_331 = arith.constant 2 : index
    %c1_332 = arith.constant 1 : index
    %c2_333 = arith.constant 2 : index
    %c0_334 = arith.constant 0 : index
    %c0_335 = arith.constant 0 : index
    %423 = vector.load %arg3[%c2_331, %c1_332, %c2_333, %c0_334, %c0_335] : memref<3x2x3x1x16xf32, #tpu.memory_space<vmem>>, vector<1x1x1x1x16xf32>
    %424 = vector.shape_cast %423 : vector<1x1x1x1x16xf32> to vector<1x16xf32>
    %425 = vector.broadcast %424 : vector<1x16xf32> to vector<8x16xf32>
    %426 = arith.addf %422, %425 : vector<8x16xf32>
    %cst_336 = arith.constant dense<0.000000e+00> : vector<8x8xf32>
    %427 = tpu.matmul %412, %419, %cst_336 {dimension_numbers = #tpu.dot_dimension_numbers<[1], [1], [0], [0], [0, 0, 1, 0], [], []>} : vector<8x16xf32>, vector<8x16xf32>, vector<8x8xf32> -> vector<8x8xf32>
    %cst_337 = arith.constant dense<0xFF800000> : vector<8xf32>
    %428 = vector.multi_reduction <maximumf>, %427, %cst_337 [1] : vector<8x8xf32> to vector<8xf32>
    %429 = vector.shape_cast %428 : vector<8xf32> to vector<8x1xf32>
    %430 = vector.broadcast %429 : vector<8x1xf32> to vector<8x8xf32>
    %431 = arith.subf %427, %430 : vector<8x8xf32>
    %432 = math.exp %431 : vector<8x8xf32>
    %cst_338 = arith.constant dense<0.000000e+00> : vector<8xf32>
    %433 = vector.multi_reduction <add>, %432, %cst_338 [1] : vector<8x8xf32> to vector<8xf32>
    %434 = vector.shape_cast %433 : vector<8xf32> to vector<8x1xf32>
    %435 = vector.broadcast %434 : vector<8x1xf32> to vector<8x8xf32>
    %436 = arith.divf %432, %435 : vector<8x8xf32>
    %cst_339 = arith.constant dense<0.000000e+00> : vector<8x16xf32>
    %437 = tpu.matmul %436, %426, %cst_339 {dimension_numbers = #tpu.dot_dimension_numbers<[1], [0], [0], [1], [0, 0, 1, 1], [], []>} : vector<8x8xf32>, vector<8x16xf32>, vector<8x16xf32> -> vector<8x16xf32>
    %c2_340 = arith.constant 2 : index
    %c1_341 = arith.constant 1 : index
    %c0_342 = arith.constant 0 : index
    %c0_343 = arith.constant 0 : index
    %438 = vector.load %arg4[%c2_340, %c1_341, %c0_342, %c0_343] : memref<3x2x16x32xf32, #tpu.memory_space<vmem>>, vector<1x1x16x32xf32>
    %439 = vector.shape_cast %438 : vector<1x1x16x32xf32> to vector<16x32xf32>
    %cst_344 = arith.constant dense<0.000000e+00> : vector<8x32xf32>
    %440 = tpu.matmul %437, %439, %cst_344 {dimension_numbers = #tpu.dot_dimension_numbers<[1], [0], [0], [1], [0, 0, 1, 1], [], []>} : vector<8x16xf32>, vector<16x32xf32>, vector<8x32xf32> -> vector<8x32xf32>
    %441 = arith.addf %405, %440 : vector<8x32xf32>
    %442 = vector.broadcast %347 : vector<1x32xf32> to vector<8x32xf32>
    %443 = arith.addf %441, %442 : vector<8x32xf32>
    %cst_345 = arith.constant dense<0.000000e+00> : vector<8xf32>
    %444 = vector.multi_reduction <add>, %443, %cst_345 [1] : vector<8x32xf32> to vector<8xf32>
    %445 = vector.shape_cast %444 : vector<8xf32> to vector<8x1xf32>
    %cst_346 = arith.constant 3.200000e+01 : f32
    %446 = vector.broadcast %cst_346 : f32 to vector<8x1xf32>
    %447 = arith.divf %445, %446 : vector<8x1xf32>
    %448 = vector.broadcast %447 : vector<8x1xf32> to vector<8x32xf32>
    %449 = arith.subf %443, %448 : vector<8x32xf32>
    %450 = arith.mulf %449, %449 : vector<8x32xf32>
    %cst_347 = arith.constant dense<0.000000e+00> : vector<8xf32>
    %451 = vector.multi_reduction <add>, %450, %cst_347 [1] : vector<8x32xf32> to vector<8xf32>
    %452 = vector.shape_cast %451 : vector<8xf32> to vector<8x1xf32>
    %cst_348 = arith.constant 3.200000e+01 : f32
    %453 = vector.broadcast %cst_348 : f32 to vector<8x1xf32>
    %454 = arith.divf %452, %453 : vector<8x1xf32>
    %cst_349 = arith.constant 9.99999974E-6 : f32
    %455 = vector.broadcast %cst_349 : f32 to vector<8x1xf32>
    %456 = arith.addf %454, %455 : vector<8x1xf32>
    %457 = math.rsqrt %456 : vector<8x1xf32>
    %458 = vector.broadcast %457 : vector<8x1xf32> to vector<8x32xf32>
    %459 = arith.mulf %449, %458 : vector<8x32xf32>
    %460 = vector.broadcast %343 : vector<1x32xf32> to vector<8x32xf32>
    %461 = arith.mulf %459, %460 : vector<8x32xf32>
    %462 = vector.broadcast %344 : vector<1x32xf32> to vector<8x32xf32>
    %463 = arith.addf %461, %462 : vector<8x32xf32>
    %464 = arith.addf %340, %463 : vector<8x32xf32>
    %cst_350 = arith.constant dense<0.000000e+00> : vector<8xf32>
    %465 = vector.multi_reduction <add>, %464, %cst_350 [1] : vector<8x32xf32> to vector<8xf32>
    %466 = vector.shape_cast %465 : vector<8xf32> to vector<8x1xf32>
    %cst_351 = arith.constant 3.200000e+01 : f32
    %467 = vector.broadcast %cst_351 : f32 to vector<8x1xf32>
    %468 = arith.divf %466, %467 : vector<8x1xf32>
    %469 = vector.broadcast %468 : vector<8x1xf32> to vector<8x32xf32>
    %470 = arith.subf %464, %469 : vector<8x32xf32>
    %471 = arith.mulf %470, %470 : vector<8x32xf32>
    %cst_352 = arith.constant dense<0.000000e+00> : vector<8xf32>
    %472 = vector.multi_reduction <add>, %471, %cst_352 [1] : vector<8x32xf32> to vector<8xf32>
    %473 = vector.shape_cast %472 : vector<8xf32> to vector<8x1xf32>
    %cst_353 = arith.constant 3.200000e+01 : f32
    %474 = vector.broadcast %cst_353 : f32 to vector<8x1xf32>
    %475 = arith.divf %473, %474 : vector<8x1xf32>
    %cst_354 = arith.constant 9.99999974E-6 : f32
    %476 = vector.broadcast %cst_354 : f32 to vector<8x1xf32>
    %477 = arith.addf %475, %476 : vector<8x1xf32>
    %478 = math.rsqrt %477 : vector<8x1xf32>
    %479 = vector.broadcast %478 : vector<8x1xf32> to vector<8x32xf32>
    %480 = arith.mulf %470, %479 : vector<8x32xf32>
    %481 = vector.broadcast %345 : vector<1x32xf32> to vector<8x32xf32>
    %482 = arith.mulf %480, %481 : vector<8x32xf32>
    %483 = vector.broadcast %346 : vector<1x32xf32> to vector<8x32xf32>
    %484 = arith.addf %482, %483 : vector<8x32xf32>
    %c2_355 = arith.constant 2 : index
    %c0_356 = arith.constant 0 : index
    %c0_357 = arith.constant 0 : index
    %485 = vector.load %arg5[%c2_355, %c0_356, %c0_357] : memref<3x32x64xf32, #tpu.memory_space<vmem>>, vector<1x32x64xf32>
    %486 = vector.shape_cast %485 : vector<1x32x64xf32> to vector<32x64xf32>
    %cst_358 = arith.constant dense<0.000000e+00> : vector<8x64xf32>
    %487 = tpu.matmul %484, %486, %cst_358 {dimension_numbers = #tpu.dot_dimension_numbers<[1], [0], [0], [1], [0, 0, 1, 1], [], []>} : vector<8x32xf32>, vector<32x64xf32>, vector<8x64xf32> -> vector<8x64xf32>
    %c2_359 = arith.constant 2 : index
    %c0_360 = arith.constant 0 : index
    %c0_361 = arith.constant 0 : index
    %488 = vector.load %arg6[%c2_359, %c0_360, %c0_361] : memref<3x1x64xf32, #tpu.memory_space<vmem>>, vector<1x1x64xf32>
    %489 = vector.shape_cast %488 : vector<1x1x64xf32> to vector<1x64xf32>
    %490 = vector.broadcast %489 : vector<1x64xf32> to vector<8x64xf32>
    %491 = arith.addf %487, %490 : vector<8x64xf32>
    %492 = arith.mulf %491, %491 : vector<8x64xf32>
    %493 = arith.mulf %491, %492 : vector<8x64xf32>
    %cst_362 = arith.constant 4.471500e-02 : f32
    %494 = vector.broadcast %cst_362 : f32 to vector<8x64xf32>
    %495 = arith.mulf %494, %493 : vector<8x64xf32>
    %496 = arith.addf %491, %495 : vector<8x64xf32>
    %cst_363 = arith.constant 0.797884583 : f32
    %497 = vector.broadcast %cst_363 : f32 to vector<8x64xf32>
    %498 = arith.mulf %497, %496 : vector<8x64xf32>
    %499 = math.tanh %498 : vector<8x64xf32>
    %cst_364 = arith.constant 1.000000e+00 : f32
    %500 = vector.broadcast %cst_364 : f32 to vector<8x64xf32>
    %501 = arith.addf %500, %499 : vector<8x64xf32>
    %cst_365 = arith.constant 5.000000e-01 : f32
    %502 = vector.broadcast %cst_365 : f32 to vector<8x64xf32>
    %503 = arith.mulf %502, %501 : vector<8x64xf32>
    %504 = arith.mulf %491, %503 : vector<8x64xf32>
    %c2_366 = arith.constant 2 : index
    %c0_367 = arith.constant 0 : index
    %c0_368 = arith.constant 0 : index
    %505 = vector.load %arg7[%c2_366, %c0_367, %c0_368] : memref<3x64x32xf32, #tpu.memory_space<vmem>>, vector<1x64x32xf32>
    %506 = vector.shape_cast %505 : vector<1x64x32xf32> to vector<64x32xf32>
    %cst_369 = arith.constant dense<0.000000e+00> : vector<8x32xf32>
    %507 = tpu.matmul %504, %506, %cst_369 {dimension_numbers = #tpu.dot_dimension_numbers<[1], [0], [0], [1], [0, 0, 1, 1], [], []>} : vector<8x64xf32>, vector<64x32xf32>, vector<8x32xf32> -> vector<8x32xf32>
    %508 = arith.addf %464, %507 : vector<8x32xf32>
    %509 = vector.broadcast %348 : vector<1x32xf32> to vector<8x32xf32>
    %510 = arith.addf %508, %509 : vector<8x32xf32>
    %c24 = arith.constant 24 : index
    %c0_370 = arith.constant 0 : index
    %511 = vector.load %arg8[%c24, %c0_370] : memref<26x32xf32, #tpu.memory_space<vmem>>, vector<1x32xf32>
    %c25 = arith.constant 25 : index
    %c0_371 = arith.constant 0 : index
    %512 = vector.load %arg8[%c25, %c0_371] : memref<26x32xf32, #tpu.memory_space<vmem>>, vector<1x32xf32>
    %cst_372 = arith.constant dense<0.000000e+00> : vector<8xf32>
    %513 = vector.multi_reduction <add>, %510, %cst_372 [1] : vector<8x32xf32> to vector<8xf32>
    %514 = vector.shape_cast %513 : vector<8xf32> to vector<8x1xf32>
    %cst_373 = arith.constant 3.200000e+01 : f32
    %515 = vector.broadcast %cst_373 : f32 to vector<8x1xf32>
    %516 = arith.divf %514, %515 : vector<8x1xf32>
    %517 = vector.broadcast %516 : vector<8x1xf32> to vector<8x32xf32>
    %518 = arith.subf %510, %517 : vector<8x32xf32>
    %519 = arith.mulf %518, %518 : vector<8x32xf32>
    %cst_374 = arith.constant dense<0.000000e+00> : vector<8xf32>
    %520 = vector.multi_reduction <add>, %519, %cst_374 [1] : vector<8x32xf32> to vector<8xf32>
    %521 = vector.shape_cast %520 : vector<8xf32> to vector<8x1xf32>
    %cst_375 = arith.constant 3.200000e+01 : f32
    %522 = vector.broadcast %cst_375 : f32 to vector<8x1xf32>
    %523 = arith.divf %521, %522 : vector<8x1xf32>
    %cst_376 = arith.constant 9.99999974E-6 : f32
    %524 = vector.broadcast %cst_376 : f32 to vector<8x1xf32>
    %525 = arith.addf %523, %524 : vector<8x1xf32>
    %526 = math.rsqrt %525 : vector<8x1xf32>
    %527 = vector.broadcast %526 : vector<8x1xf32> to vector<8x32xf32>
    %528 = arith.mulf %518, %527 : vector<8x32xf32>
    %529 = vector.broadcast %511 : vector<1x32xf32> to vector<8x32xf32>
    %530 = arith.mulf %528, %529 : vector<8x32xf32>
    %531 = vector.broadcast %512 : vector<1x32xf32> to vector<8x32xf32>
    %532 = arith.addf %530, %531 : vector<8x32xf32>
    %c0_377 = arith.constant 0 : index
    %c0_378 = arith.constant 0 : index
    %533 = vector.load %arg9[%c0_377, %c0_378] : memref<8x32xf32, #tpu.memory_space<vmem>>, vector<8x32xf32>
    tpu.vector_store %arg9[%c0_377, %c0_378], %532 {strides = array<i32>} : memref<8x32xf32, #tpu.memory_space<vmem>>, vector<8x32xf32>,
    return
  }
  func.func @transform_0(%arg0: i32) -> (i32, i32) {
    %c0_i32 = arith.constant 0 : i32
    %c0_i32_0 = arith.constant 0 : i32
    return %arg0, %c0_i32 : i32, i32
  }
  func.func @transform_1(%arg0: i32) -> (i32, i32, i32, i32, i32) {
    %c0_i32 = arith.constant 0 : i32
    %c0_i32_0 = arith.constant 0 : i32
    %c0_i32_1 = arith.constant 0 : i32
    %c0_i32_2 = arith.constant 0 : i32
    %c0_i32_3 = arith.constant 0 : i32
    %c0_i32_4 = arith.constant 0 : i32
    return %c0_i32, %c0_i32_0, %c0_i32_1, %c0_i32_2, %c0_i32_3 : i32, i32, i32, i32, i32
  }
  func.func @transform_2(%arg0: i32) -> (i32, i32, i32, i32, i32) {
    %c0_i32 = arith.constant 0 : i32
    %c0_i32_0 = arith.constant 0 : i32
    %c0_i32_1 = arith.constant 0 : i32
    %c0_i32_2 = arith.constant 0 : i32
    %c0_i32_3 = arith.constant 0 : i32
    %c0_i32_4 = arith.constant 0 : i32
    return %c0_i32, %c0_i32_0, %c0_i32_1, %c0_i32_2, %c0_i32_3 : i32, i32, i32, i32, i32
  }
  func.func @transform_3(%arg0: i32) -> (i32, i32, i32, i32) {
    %c0_i32 = arith.constant 0 : i32
    %c0_i32_0 = arith.constant 0 : i32
    %c0_i32_1 = arith.constant 0 : i32
    %c0_i32_2 = arith.constant 0 : i32
    %c0_i32_3 = arith.constant 0 : i32
    return %c0_i32, %c0_i32_0, %c0_i32_1, %c0_i32_2 : i32, i32, i32, i32
  }
  func.func @transform_4(%arg0: i32) -> (i32, i32, i32) {
    %c0_i32 = arith.constant 0 : i32
    %c0_i32_0 = arith.constant 0 : i32
    %c0_i32_1 = arith.constant 0 : i32
    %c0_i32_2 = arith.constant 0 : i32
    return %c0_i32, %c0_i32_0, %c0_i32_1 : i32, i32, i32
  }
  func.func @transform_5(%arg0: i32) -> (i32, i32, i32) {
    %c0_i32 = arith.constant 0 : i32
    %c0_i32_0 = arith.constant 0 : i32
    %c0_i32_1 = arith.constant 0 : i32
    %c0_i32_2 = arith.constant 0 : i32
    return %c0_i32, %c0_i32_0, %c0_i32_1 : i32, i32, i32
  }
  func.func @transform_6(%arg0: i32) -> (i32, i32, i32) {
    %c0_i32 = arith.constant 0 : i32
    %c0_i32_0 = arith.constant 0 : i32
    %c0_i32_1 = arith.constant 0 : i32
    %c0_i32_2 = arith.constant 0 : i32
    return %c0_i32, %c0_i32_0, %c0_i32_1 : i32, i32, i32
  }
  func.func @transform_7(%arg0: i32) -> (i32, i32) {
    %c0_i32 = arith.constant 0 : i32
    %c0_i32_0 = arith.constant 0 : i32
    %c0_i32_1 = arith.constant 0 : i32
    return %c0_i32, %c0_i32_0 : i32, i32
  }
  func.func @transform_8(%arg0: i32) -> (i32, i32) {
    %c0_i32 = arith.constant 0 : i32
    %c0_i32_0 = arith.constant 0 : i32
    return %arg0, %c0_i32 : i32, i32
  }
}

</mosaic_0001>

<llo_original>
// kernel: tpu_custom_call.1
$region0: #{tpu_custom_call.1}
  #allocation0 [shape = 'u32[]', space=smem, size = 0x4, offset = 0x4, fixed_abs, tag = 'smem constant byte address 0x4 - core index']
  #allocation1 [shape = 'u32[144,128]{1,0:T(1,128)}', space=vmem, size = 0x12000, scoped, tag = 'internal scratch']
  %s0 = inlined_call_operand.vmem [shape: f32[16,32], index: 0, kind: input, shape index: {}]
  %s1 = inlined_call_operand.vmem [shape: f32[3,2,3,32,16], index: 1, kind: input, shape index: {}]
  %s2 = inlined_call_operand.vmem [shape: f32[3,2,3,1,16], index: 2, kind: input, shape index: {}]
  %s3 = inlined_call_operand.vmem [shape: f32[3,2,16,32], index: 3, kind: input, shape index: {}]
  %s4 = inlined_call_operand.vmem [shape: f32[3,32,64], index: 4, kind: input, shape index: {}]
  %s5 = inlined_call_operand.vmem [shape: f32[3,1,64], index: 5, kind: input, shape index: {}]
  %s6 = inlined_call_operand.vmem [shape: f32[3,64,32], index: 6, kind: input, shape index: {}]
  %s7 = inlined_call_operand.vmem [shape: f32[26,32], index: 7, kind: input, shape index: {}]
  %s8 = inlined_call_operand.hbm [shape: f32[16,32], index: 8, kind: output, shape index: {}]
  %s9 = sld [smem:[#allocation0]]
  $region65: #{tpu_custom_call.1} parent=0
    _
  %s11 = ssub.s32 1, %s9
  %s12 = scalar_select 0, %s11, %s9
  $region1: #{tpu_custom_call.1} parent=0
    #allocation2 [shape = 'u8[8192]{0}', space=vmem, size = 0x2000, scoped, tag = 'output window, operand 0']
    #allocation3 [shape = 's32[2]{0}', space=sflag, size = 0x8, scoped, tag = 'scoped memory for tpu_custom_call.1']
    %13 = vsyncpa [#allocation3], 0
    %s14 = scalar_lea.sflag [#allocation3], 1
    %15 = vsyncpa %s14, 0
    loop: start=0, step=1, limit=4
    $region2: #{tpu_custom_call.1} parent=1 // loop_pre_header
      _
    $region3: #{tpu_custom_call.1} parent=1 // loop_header
      %s17 = sphi 0, %s21
      %p18 = scmp.ge.s32.totalorder %s17, 4
      %s27 = sphi 0, %s29
      %s30 = sphi 0, %s27
      %s31 = sphi 0, %s30
      %s47 = sphi 0, %s31
      %s51 = sphi 0, %s51
      %s53 = sphi 0, %s51
      %s54 = sphi 0, %s53
      %s68 = sphi 0, %s54
      %s72 = sphi 0, %s72
      %s74 = sphi 0, %s72
      %s75 = sphi 0, %s74
      %s89 = sphi 0, %s75
      %s93 = sphi 0, %s93
      %s95 = sphi 0, %s93
      %s96 = sphi 0, %s95
      %s110 = sphi 0, %s96
      %s114 = sphi 0, %s114
      %s116 = sphi 0, %s114
      %s117 = sphi 0, %s116
      %s131 = sphi 0, %s117
      %s135 = sphi 0, %s135
      %s137 = sphi 0, %s135
      %s138 = sphi 0, %s137
      %s152 = sphi 0, %s138
      %s156 = sphi 0, %s156
      %s158 = sphi 0, %s156
      %s159 = sphi 0, %s158
      %s173 = sphi 0, %s159
      %s177 = sphi 0, %s177
      %s179 = sphi 0, %s177
      %s180 = sphi 0, %s179
      %s194 = sphi 0, %s180
      %s200 = sphi 0, %s202
      %s203 = sphi 0, %s200
      %s204 = sphi 0, %s203
      %s220 = sphi 0, %s204
    $region4: #{tpu_custom_call.1} parent=1 // loop_header_branch
      %20 = sbr.rel (%p18) target = $region8
    $region5: #{tpu_custom_call.1} parent=1 // loop_body
      %s22 = ssub.s32 %s17, 1
      %s23 = ssub.s32 %s17, 2
      %s24 = sadd.s32 %s17, 1
      %s25 = ssub.s32 %s17, %s24
      %p26 = scmp.eq.s32.totalorder %s25, 0
      %s28 = sadd.s32 %s27, 1
      %s29 = scalar_select %p26, %s27, %s28
      %p32 = pneg %p26
      %p33 = scmp.eq.s32.totalorder %s17, 1
      %p34 = por %p32, %p33
      %p35 = scmp.ne.s32.totalorder %s27, %s30
      %p36 = scmp.eq.s32.totalorder %s17, 0
      %p37 = por %p35, %p36
      %p38 = scmp.ne.s32.totalorder %s27, %s30
      %p39 = scmp.eq.s32.totalorder %s22, 1
      %p40 = por %p38, %p39
      %p41 = scmp.ne.s32.totalorder %s30, %s31
      %p42 = scmp.eq.s32.totalorder %s22, 0
      %p43 = por %p41, %p42
      %p44 = scmp.ne.s32.totalorder %s30, %s31
      %p45 = scmp.eq.s32.totalorder %s23, 1
      %p46 = por %p44, %p45
      %p48 = scmp.ne.s32.totalorder %s31, %s47
      %p49 = scmp.eq.s32.totalorder %s23, 0
      %p50 = por %p48, %p49
      %s52 = sadd.s32 %s51, 1
      %p55 = scmp.eq.s32.totalorder %s17, 1
      %p56 = scmp.ne.s32.totalorder %s51, %s53
      %p57 = scmp.eq.s32.totalorder %s17, 0
      %p58 = por %p56, %p57
      %p59 = scmp.ne.s32.totalorder %s51, %s53
      %p60 = scmp.eq.s32.totalorder %s22, 1
      %p61 = por %p59, %p60
      %p62 = scmp.ne.s32.totalorder %s53, %s54
      %p63 = scmp.eq.s32.totalorder %s22, 0
      %p64 = por %p62, %p63
      %p65 = scmp.ne.s32.totalorder %s53, %s54
      %p66 = scmp.eq.s32.totalorder %s23, 1
      %p67 = por %p65, %p66
      %p69 = scmp.ne.s32.totalorder %s54, %s68
      %p70 = scmp.eq.s32.totalorder %s23, 0
      %p71 = por %p69, %p70
      %s73 = sadd.s32 %s72, 1
      %p76 = scmp.eq.s32.totalorder %s17, 1
      %p77 = scmp.ne.s32.totalorder %s72, %s74
      %p78 = scmp.eq.s32.totalorder %s17, 0
      %p79 = por %p77, %p78
      %p80 = scmp.ne.s32.totalorder %s72, %s74
      %p81 = scmp.eq.s32.totalorder %s22, 1
      %p82 = por %p80, %p81
      %p83 = scmp.ne.s32.totalorder %s74, %s75
      %p84 = scmp.eq.s32.totalorder %s22, 0
      %p85 = por %p83, %p84
      %p86 = scmp.ne.s32.totalorder %s74, %s75
      %p87 = scmp.eq.s32.totalorder %s23, 1
      %p88 = por %p86, %p87
      %p90 = scmp.ne.s32.totalorder %s75, %s89
      %p91 = scmp.eq.s32.totalorder %s23, 0
      %p92 = por %p90, %p91
      %s94 = sadd.s32 %s93, 1
      %p97 = scmp.eq.s32.totalorder %s17, 1
      %p98 = scmp.ne.s32.totalorder %s93, %s95
      %p99 = scmp.eq.s32.totalorder %s17, 0
      %p100 = por %p98, %p99
      %p101 = scmp.ne.s32.totalorder %s93, %s95
      %p102 = scmp.eq.s32.totalorder %s22, 1
      %p103 = por %p101, %p102
      %p104 = scmp.ne.s32.totalorder %s95, %s96
      %p105 = scmp.eq.s32.totalorder %s22, 0
      %p106 = por %p104, %p105
      %p107 = scmp.ne.s32.totalorder %s95, %s96
      %p108 = scmp.eq.s32.totalorder %s23, 1
      %p109 = por %p107, %p108
      %p111 = scmp.ne.s32.totalorder %s96, %s110
      %p112 = scmp.eq.s32.totalorder %s23, 0
      %p113 = por %p111, %p112
      %s115 = sadd.s32 %s114, 1
      %p118 = scmp.eq.s32.totalorder %s17, 1
      %p119 = scmp.ne.s32.totalorder %s114, %s116
      %p120 = scmp.eq.s32.totalorder %s17, 0
      %p121 = por %p119, %p120
      %p122 = scmp.ne.s32.totalorder %s114, %s116
      %p123 = scmp.eq.s32.totalorder %s22, 1
      %p124 = por %p122, %p123
      %p125 = scmp.ne.s32.totalorder %s116, %s117
      %p126 = scmp.eq.s32.totalorder %s22, 0
      %p127 = por %p125, %p126
      %p128 = scmp.ne.s32.totalorder %s116, %s117
      %p129 = scmp.eq.s32.totalorder %s23, 1
      %p130 = por %p128, %p129
      %p132 = scmp.ne.s32.totalorder %s117, %s131
      %p133 = scmp.eq.s32.totalorder %s23, 0
      %p134 = por %p132, %p133
      %s136 = sadd.s32 %s135, 1
      %p139 = scmp.eq.s32.totalorder %s17, 1
      %p140 = scmp.ne.s32.totalorder %s135, %s137
      %p141 = scmp.eq.s32.totalorder %s17, 0
      %p142 = por %p140, %p141
      %p143 = scmp.ne.s32.totalorder %s135, %s137
      %p144 = scmp.eq.s32.totalorder %s22, 1
      %p145 = por %p143, %p144
      %p146 = scmp.ne.s32.totalorder %s137, %s138
      %p147 = scmp.eq.s32.totalorder %s22, 0
      %p148 = por %p146, %p147
      %p149 = scmp.ne.s32.totalorder %s137, %s138
      %p150 = scmp.eq.s32.totalorder %s23, 1
      %p151 = por %p149, %p150
      %p153 = scmp.ne.s32.totalorder %s138, %s152
      %p154 = scmp.eq.s32.totalorder %s23, 0
      %p155 = por %p153, %p154
      %s157 = sadd.s32 %s156, 1
      %p160 = scmp.eq.s32.totalorder %s17, 1
      %p161 = scmp.ne.s32.totalorder %s156, %s158
      %p162 = scmp.eq.s32.totalorder %s17, 0
      %p163 = por %p161, %p162
      %p164 = scmp.ne.s32.totalorder %s156, %s158
      %p165 = scmp.eq.s32.totalorder %s22, 1
      %p166 = por %p164, %p165
      %p167 = scmp.ne.s32.totalorder %s158, %s159
      %p168 = scmp.eq.s32.totalorder %s22, 0
      %p169 = por %p167, %p168
      %p170 = scmp.ne.s32.totalorder %s158, %s159
      %p171 = scmp.eq.s32.totalorder %s23, 1
      %p172 = por %p170, %p171
      %p174 = scmp.ne.s32.totalorder %s159, %s173
      %p175 = scmp.eq.s32.totalorder %s23, 0
      %p176 = por %p174, %p175
      %s178 = sadd.s32 %s177, 1
      %p181 = scmp.eq.s32.totalorder %s17, 1
      %p182 = scmp.ne.s32.totalorder %s177, %s179
      %p183 = scmp.eq.s32.totalorder %s17, 0
      %p184 = por %p182, %p183
      %p185 = scmp.ne.s32.totalorder %s177, %s179
      %p186 = scmp.eq.s32.totalorder %s22, 1
      %p187 = por %p185, %p186
      %p188 = scmp.ne.s32.totalorder %s179, %s180
      %p189 = scmp.eq.s32.totalorder %s22, 0
      %p190 = por %p188, %p189
      %p191 = scmp.ne.s32.totalorder %s179, %s180
      %p192 = scmp.eq.s32.totalorder %s23, 1
      %p193 = por %p191, %p192
      %p195 = scmp.ne.s32.totalorder %s180, %s194
      %p196 = scmp.eq.s32.totalorder %s23, 0
      %p197 = por %p195, %p196
      %s198 = ssub.s32 %s17, %s24
      %p199 = scmp.eq.s32.totalorder %s198, 0
      %s201 = sadd.s32 %s200, 1
      %s202 = scalar_select %p199, %s200, %s201
      %p205 = pneg %p199
      %p206 = scmp.eq.s32.totalorder %s17, 1
      %p207 = por %p205, %p206
      %p208 = scmp.ne.s32.totalorder %s200, %s203
      %p209 = scmp.eq.s32.totalorder %s17, 0
      %p210 = por %p208, %p209
      %p211 = scmp.ne.s32.totalorder %s200, %s203
      %p212 = scmp.eq.s32.totalorder %s22, 1
      %p213 = por %p211, %p212
      %p214 = scmp.ne.s32.totalorder %s203, %s204
      %p215 = scmp.eq.s32.totalorder %s22, 0
      %p216 = por %p214, %p215
      %p217 = scmp.ne.s32.totalorder %s203, %s204
      %p218 = scmp.eq.s32.totalorder %s23, 1
      %p219 = por %p217, %p218
      %p221 = scmp.ne.s32.totalorder %s204, %s220
      %p222 = scmp.eq.s32.totalorder %s23, 0
      %p223 = por %p221, %p222
      %p224 = scmp.le.s32.totalorder 1, %s17
      %p225 = scmp.lt.s32.totalorder %s17, 3
      %p226 = pnand %p224, %p225
      %p227 = pneg %p226
      // Predicated region
      $region9: #{tpu_custom_call.1} parent=5 // pred_check
        _
      $region10: #{tpu_custom_call.1} parent=5 // pred_check_branch
        %229 = sbr.rel (%p226) target = $region12
      $region11: #{tpu_custom_call.1} parent=5 // pred_region
        %s230 = ssub.s32 %s17, 1
        // Predicated region
        $region13: #{tpu_custom_call.1} parent=11 // pred_check
          %p231 = pneg %p64
        $region14: #{tpu_custom_call.1} parent=11 // pred_check_branch
          %233 = sbr.rel (%p231) target = $region16
        $region15: #{tpu_custom_call.1} parent=11 // pred_region
          _
        $region16: #{tpu_custom_call.1} parent=11 // pred_fallthru
          _
        // Predicated region
        $region17: #{tpu_custom_call.1} parent=11 // pred_check
          %p234 = pneg %p85
        $region18: #{tpu_custom_call.1} parent=11 // pred_check_branch
          %236 = sbr.rel (%p234) target = $region20
        $region19: #{tpu_custom_call.1} parent=11 // pred_region
          _
        $region20: #{tpu_custom_call.1} parent=11 // pred_fallthru
          _
        // Predicated region
        $region21: #{tpu_custom_call.1} parent=11 // pred_check
          %p237 = pneg %p106
        $region22: #{tpu_custom_call.1} parent=11 // pred_check_branch
          %239 = sbr.rel (%p237) target = $region24
        $region23: #{tpu_custom_call.1} parent=11 // pred_region
          _
        $region24: #{tpu_custom_call.1} parent=11 // pred_fallthru
          _
        // Predicated region
        $region25: #{tpu_custom_call.1} parent=11 // pred_check
          %p240 = pneg %p127
        $region26: #{tpu_custom_call.1} parent=11 // pred_check_branch
          %242 = sbr.rel (%p240) target = $region28
        $region27: #{tpu_custom_call.1} parent=11 // pred_region
          _
        $region28: #{tpu_custom_call.1} parent=11 // pred_fallthru
          _
        // Predicated region
        $region29: #{tpu_custom_call.1} parent=11 // pred_check
          %p243 = pneg %p148
        $region30: #{tpu_custom_call.1} parent=11 // pred_check_branch
          %245 = sbr.rel (%p243) target = $region32
        $region31: #{tpu_custom_call.1} parent=11 // pred_region
          _
        $region32: #{tpu_custom_call.1} parent=11 // pred_fallthru
          _
        // Predicated region
        $region33: #{tpu_custom_call.1} parent=11 // pred_check
          %p246 = pneg %p169
        $region34: #{tpu_custom_call.1} parent=11 // pred_check_branch
          %248 = sbr.rel (%p246) target = $region36
        $region35: #{tpu_custom_call.1} parent=11 // pred_region
          _
        $region36: #{tpu_custom_call.1} parent=11 // pred_fallthru
          _
        // Predicated region
        $region37: #{tpu_custom_call.1} parent=11 // pred_check
          %p249 = pneg %p190
        $region38: #{tpu_custom_call.1} parent=11 // pred_check_branch
          %251 = sbr.rel (%p249) target = $region40
        $region39: #{tpu_custom_call.1} parent=11 // pred_region
          _
        $region40: #{tpu_custom_call.1} parent=11 // pred_fallthru
          _
      $region12: #{tpu_custom_call.1} parent=5 // pred_fallthru
        _
      %p252 = scmp.lt.s32.totalorder %s17, 2
      // Predicated region
      $region41: #{tpu_custom_call.1} parent=5 // pred_check
        %p253 = pneg %p252
      $region42: #{tpu_custom_call.1} parent=5 // pred_check_branch
        %255 = sbr.rel (%p253) target = $region44
      $region43: #{tpu_custom_call.1} parent=5 // pred_region
        // Predicated region
        $region45: #{tpu_custom_call.1} parent=43 // pred_check
          %p256 = pneg %p37
        $region46: #{tpu_custom_call.1} parent=43 // pred_check_branch
          %258 = sbr.rel (%p256) target = $region48
        $region47: #{tpu_custom_call.1} parent=43 // pred_region
          %p259 = scmp.lt.s32.totalorder %s17, 1
          %s260 = scalar_select %p259, %s17, 1
          %s261 = smul.addr %s260, 8
          %s262 = scalar_lea.vmem %s0, %s261
        $region48: #{tpu_custom_call.1} parent=43 // pred_fallthru
          _
      $region44: #{tpu_custom_call.1} parent=5 // pred_fallthru
        _
      %p263 = scmp.le.s32.totalorder 1, %s17
      %p264 = scmp.lt.s32.totalorder %s17, 3
      %p265 = pnand %p263, %p264
      %p266 = pneg %p265
      // Predicated region
      $region49: #{tpu_custom_call.1} parent=5 // pred_check
        _
      $region50: #{tpu_custom_call.1} parent=5 // pred_check_branch
        %268 = sbr.rel (%p265) target = $region52
      $region51: #{tpu_custom_call.1} parent=5 // pred_region
        %s269 = ssub.s32 %s17, 1
        %p270 = scmp.lt.s32.totalorder %s22, 1
        %s271 = scalar_select %p270, %s22, 1
        %s272 = smul.addr %s271, 8
        %s273 = scalar_lea.vmem %s0, %s272
        %p274 = pneg %p43
        %p275 = pneg %p40
        %p276 = pneg %p64
        %p277 = pneg %p61
        %p278 = pneg %p85
        %p279 = pneg %p82
        %p280 = pneg %p106
        %p281 = pneg %p103
        %p282 = pneg %p127
        %p283 = pneg %p124
        %p284 = pneg %p148
        %p285 = pneg %p145
        %p286 = pneg %p169
        %p287 = pneg %p166
        %p288 = pneg %p190
        %p289 = pneg %p187
        %p290 = pneg %p216
        %p291 = pneg %p213
        %s292 = sand.u32 %s203, 1
        %s293 = scalar_lea.sflag [#allocation3], %s292
        %s294 = sand.u32 %s203, 1
        %s295 = smul.addr %s294, 8
        %s296 = scalar_lea.vmem [#allocation2], %s295
        %p297 = scmp.lt.s32.totalorder %s22, 1
        %s298 = scalar_select %p297, %s22, 1
        %s299 = smul.addr %s298, 8
        %s300 = scalar_lea.vmem %s0, %s299
        %v301 = vld [vmem:[%s300] sm:$0xff]
        %v302 = vld [vmem:[%s7] sm:$0x1]
        %v303 = vld [vmem:[%s7 + $0x1] sm:$0x1]
        %v304 = vld [vmem:[%s7 + $0x2] sm:$0x1]
        %v305 = vld [vmem:[%s7 + $0x3] sm:$0x1]
        %v306 = vld [vmem:[%s7 + $0x4] sm:$0x1]
        %v307 = vld [vmem:[%s7 + $0x5] sm:$0x1]
        %v308 = vld [vmem:[%s7 + $0x6] sm:$0x1]
        %v309 = vld [vmem:[%s7 + $0x7] sm:$0x1]
        %vm310 = vcmask 261120
        %v311 = vsel %vm310, %v301, 0.0
        %312 = vadd.xlane.f32.xlu0 %v311
        %v313 = vpop.xlane.xlu0 %312
        %v314 = vrcp.pop 32.0
        %v315 = vmul.f32 %v313, %v314
        %v316 = vsub.f32 %v301, %v315
        %v317 = vmul.f32 %v316, %v316
        %v318 = vsel %vm310, %v317, 0.0
        %319 = vadd.xlane.f32.xlu0 %v318
        %v320 = vpop.xlane.xlu0 %319
        %v321 = vmul.f32 %v320, %v314
        %v322 = vadd.f32 %v321, 1e-05
        %v323 = vrsqrt.pop %v322
        %v324 = vmul.f32 %v316, %v323
        %v325 = vlaneseq
        %v326 = vshrl.u32 %v325, 7
        %v327 = vsub.s32 0, %v326
        %v328 = vrot.slane %v302, %v327
        %v329 = vmul.f32 %v324, %v328
        %v330 = vlaneseq
        %v331 = vshrl.u32 %v330, 7
        %v332 = vsub.s32 0, %v331
        %v333 = vrot.slane %v303, %v332
        %v334 = vadd.f32 %v329, %v333
        %v335 = vld [vmem:[%s1] sm:$0xff]
        %v336 = vld [vmem:[%s1 + $0x8] sm:$0xff]
        %v337 = vld [vmem:[%s1 + $0x10] sm:$0xff]
        %v338 = vld [vmem:[%s1 + $0x18] sm:$0xff]
        %v339 = vld [vmem:[%s2] sm:$0x1]
        %v341 = vlaneseq
        %v342 = vshrl.u32 %v341, 7
        %v343 = vsub.s32 0, %v342
        %v344 = vrot.slane %v339, %v343
        %v347 = vsel %vm310, %v334, 0
        %349 = vmatprep.subr.mxu0 0.0
        %350 = vmatpush1.msra.mxu0 %v335
        %351 = vmatprep.subr.mxu0 0.0
        %352 = vmatpush1.msra.mxu0 %v336
        %353 = vmatprep.subr.mxu0 0.0
        %354 = vmatpush1.msra.mxu0 %v337
        %355 = vmatprep.subr.mxu0 0.0
        %356 = vmatpush1.msra.mxu0 %v338
        %357 = vmatprep.subr.mxu0 0.0
        %358 = vmatpush1.msra.mxu0 0.0
        %359 = vmatprep.subr.mxu0 0.0
        %360 = vmatpush1.msra.mxu0 0.0
        %361 = vmatprep.subr.mxu0 0.0
        %362 = vmatpush1.msra.mxu0 0.0
        %363 = vmatprep.subr.mxu0 0.0
        %364 = vmatpush1.msra.mxu0 0.0
        %365 = vmatprep.subr.mxu0 0.0
        %366 = vmatpush1.msra.mxu0 0.0
        %367 = vmatprep.subr.mxu0 0.0
        %368 = vmatpush1.msra.mxu0 0.0
        %369 = vmatprep.subr.mxu0 0.0
        %370 = vmatpush1.msra.mxu0 0.0
        %371 = vmatprep.subr.mxu0 0.0
        %372 = vmatpush1.msra.mxu0 0.0
        %373 = vmatprep.subr.mxu0 0.0
        %374 = vmatpush1.msra.mxu0 0.0
        %375 = vmatprep.subr.mxu0 0.0
        %376 = vmatpush1.msra.mxu0 0.0
        %377 = vmatprep.subr.mxu0 0.0
        %378 = vmatpush1.msra.mxu0 0.0
        %379 = vmatprep.subr.mxu0 0.0
        %380 = vmatpush1.msra.mxu0 0.0
        %381 = vmatprep.subr.mxu0 0.0
        %382 = vmatpush1.msra.mxu0 0.0
        %383 = vmatprep.subr.mxu0 0.0
        %384 = vmatpush1.msra.mxu0 0.0
        %385 = vmatprep.subr.mxu0 0.0
        %386 = vmatpush1.msra.mxu0 0.0
        %387 = vmatprep.subr.mxu0 0.0
        %388 = vmatpush1.msra.mxu0 0.0
        %389 = vmatprep.subr.mxu0 0.0
        %390 = vmatpush1.msra.mxu0 0.0
        %391 = vmatprep.subr.mxu0 0.0
        %392 = vmatpush1.msra.mxu0 0.0
        %393 = vmatprep.subr.mxu0 0.0
        %394 = vmatpush1.msra.mxu0 0.0
        %395 = vmatprep.subr.mxu0 0.0
        %396 = vmatpush1.msra.mxu0 0.0
        %397 = vmatprep.subr.mxu0 0.0
        %398 = vmatpush1.msra.mxu0 0.0
        %399 = vmatprep.subr.mxu0 0.0
        %400 = vmatpush1.msra.mxu0 0.0
        %401 = vmatprep.subr.mxu0 0.0
        %402 = vmatpush1.msra.mxu0 0.0
        %403 = vmatprep.subr.mxu0 0.0
        %404 = vmatpush1.msra.mxu0 0.0
        %405 = vmatprep.subr.mxu0 0.0
        %406 = vmatpush1.msra.mxu0 0.0
        %407 = vmatprep.subr.mxu0 0.0
        %408 = vmatpush1.msra.mxu0 0.0
        %409 = vmatprep.subr.mxu0 0.0
        %410 = vmatpush1.msra.mxu0 0.0
        %411 = vmatprep.subr.mxu0 0.0
        %412 = vmatpush1.msra.mxu0 0.0
        %413 = vmatprep.mubr.f32.mxu0 0.0
        %414 = vmatmul.mubr.f32.gmra.mrb[0].mxu0 %v347
        %v415 = vpop.f32.mrb[0].mxu0
        %v416 = vadd.f32 %v344, %v415
        %v417 = vpop.f32.mrb[0].mxu0
        %418 = vdwg.mxu0
        %s419 = scalar_lea.vmem %s1, 32
        %v420 = vld [vmem:[%s419] sm:$0xff]
        %v421 = vld [vmem:[%s419 + $0x8] sm:$0xff]
        %v422 = vld [vmem:[%s419 + $0x10] sm:$0xff]
        %v423 = vld [vmem:[%s419 + $0x18] sm:$0xff]
        %s424 = scalar_lea.vmem %s2, 1
        %v425 = vld [vmem:[%s424] sm:$0x1]
        %v427 = vlaneseq
        %v428 = vshrl.u32 %v427, 7
        %v429 = vsub.s32 0, %v428
        %v430 = vrot.slane %v425, %v429
        %432 = vmatprep.subr.mxu0 0.0
        %433 = vmatpush1.msra.mxu0 %v420
        %434 = vmatprep.subr.mxu0 0.0
        %435 = vmatpush1.msra.mxu0 %v421
        %436 = vmatprep.subr.mxu0 0.0
        %437 = vmatpush1.msra.mxu0 %v422
        %438 = vmatprep.subr.mxu0 0.0
        %439 = vmatpush1.msra.mxu0 %v423
        %440 = vmatprep.subr.mxu0 0.0
        %441 = vmatpush1.msra.mxu0 0.0
        %442 = vmatprep.subr.mxu0 0.0
        %443 = vmatpush1.msra.mxu0 0.0
        %444 = vmatprep.subr.mxu0 0.0
        %445 = vmatpush1.msra.mxu0 0.0
        %446 = vmatprep.subr.mxu0 0.0
        %447 = vmatpush1.msra.mxu0 0.0
        %448 = vmatprep.subr.mxu0 0.0
        %449 = vmatpush1.msra.mxu0 0.0
        %450 = vmatprep.subr.mxu0 0.0
        %451 = vmatpush1.msra.mxu0 0.0
        %452 = vmatprep.subr.mxu0 0.0
        %453 = vmatpush1.msra.mxu0 0.0
        %454 = vmatprep.subr.mxu0 0.0
        %455 = vmatpush1.msra.mxu0 0.0
        %456 = vmatprep.subr.mxu0 0.0
        %457 = vmatpush1.msra.mxu0 0.0
        %458 = vmatprep.subr.mxu0 0.0
        %459 = vmatpush1.msra.mxu0 0.0
        %460 = vmatprep.subr.mxu0 0.0
        %461 = vmatpush1.msra.mxu0 0.0
        %462 = vmatprep.subr.mxu0 0.0
        %463 = vmatpush1.msra.mxu0 0.0
        %464 = vmatprep.subr.mxu0 0.0
        %465 = vmatpush1.msra.mxu0 0.0
        %466 = vmatprep.subr.mxu0 0.0
        %467 = vmatpush1.msra.mxu0 0.0
        %468 = vmatprep.subr.mxu0 0.0
        %469 = vmatpush1.msra.mxu0 0.0
        %470 = vmatprep.subr.mxu0 0.0
        %471 = vmatpush1.msra.mxu0 0.0
        %472 = vmatprep.subr.mxu0 0.0
        %473 = vmatpush1.msra.mxu0 0.0
        %474 = vmatprep.subr.mxu0 0.0
        %475 = vmatpush1.msra.mxu0 0.0
        %476 = vmatprep.subr.mxu0 0.0
        %477 = vmatpush1.msra.mxu0 0.0
        %478 = vmatprep.subr.mxu0 0.0
        %479 = vmatpush1.msra.mxu0 0.0
        %480 = vmatprep.subr.mxu0 0.0
        %481 = vmatpush1.msra.mxu0 0.0
        %482 = vmatprep.subr.mxu0 0.0
        %483 = vmatpush1.msra.mxu0 0.0
        %484 = vmatprep.subr.mxu0 0.0
        %485 = vmatpush1.msra.mxu0 0.0
        %486 = vmatprep.subr.mxu0 0.0
        %487 = vmatpush1.msra.mxu0 0.0
        %488 = vmatprep.subr.mxu0 0.0
        %489 = vmatpush1.msra.mxu0 0.0
        %490 = vmatprep.subr.mxu0 0.0
        %491 = vmatpush1.msra.mxu0 0.0
        %492 = vmatprep.subr.mxu0 0.0
        %493 = vmatpush1.msra.mxu0 0.0
        %494 = vmatprep.subr.mxu0 0.0
        %495 = vmatpush1.msra.mxu0 0.0
        %496 = vmatprep.mubr.f32.mxu0 0.0
        %497 = vmatmul.mubr.f32.gmra.mrb[0].mxu0 %v347
        %v498 = vpop.f32.mrb[0].mxu0
        %v499 = vadd.f32 %v430, %v498
        %v500 = vpop.f32.mrb[0].mxu0
        %501 = vdwg.mxu0
        %s502 = scalar_lea.vmem %s1, 64
        %v503 = vld [vmem:[%s502] sm:$0xff]
        %v504 = vld [vmem:[%s502 + $0x8] sm:$0xff]
        %v505 = vld [vmem:[%s502 + $0x10] sm:$0xff]
        %v506 = vld [vmem:[%s502 + $0x18] sm:$0xff]
        %s507 = scalar_lea.vmem %s2, 2
        %v508 = vld [vmem:[%s507] sm:$0x1]
        %v510 = vlaneseq
        %v511 = vshrl.u32 %v510, 7
        %v512 = vsub.s32 0, %v511
        %v513 = vrot.slane %v508, %v512
        %515 = vmatprep.subr.mxu0 0.0
        %516 = vmatpush1.msra.mxu0 %v503
        %517 = vmatprep.subr.mxu0 0.0
        %518 = vmatpush1.msra.mxu0 %v504
        %519 = vmatprep.subr.mxu0 0.0
        %520 = vmatpush1.msra.mxu0 %v505
        %521 = vmatprep.subr.mxu0 0.0
        %522 = vmatpush1.msra.mxu0 %v506
        %523 = vmatprep.subr.mxu0 0.0
        %524 = vmatpush1.msra.mxu0 0.0
        %525 = vmatprep.subr.mxu0 0.0
        %526 = vmatpush1.msra.mxu0 0.0
        %527 = vmatprep.subr.mxu0 0.0
        %528 = vmatpush1.msra.mxu0 0.0
        %529 = vmatprep.subr.mxu0 0.0
        %530 = vmatpush1.msra.mxu0 0.0
        %531 = vmatprep.subr.mxu0 0.0
        %532 = vmatpush1.msra.mxu0 0.0
        %533 = vmatprep.subr.mxu0 0.0
        %534 = vmatpush1.msra.mxu0 0.0
        %535 = vmatprep.subr.mxu0 0.0
        %536 = vmatpush1.msra.mxu0 0.0
        %537 = vmatprep.subr.mxu0 0.0
        %538 = vmatpush1.msra.mxu0 0.0
        %539 = vmatprep.subr.mxu0 0.0
        %540 = vmatpush1.msra.mxu0 0.0
        %541 = vmatprep.subr.mxu0 0.0
        %542 = vmatpush1.msra.mxu0 0.0
        %543 = vmatprep.subr.mxu0 0.0
        %544 = vmatpush1.msra.mxu0 0.0
        %545 = vmatprep.subr.mxu0 0.0
        %546 = vmatpush1.msra.mxu0 0.0
        %547 = vmatprep.subr.mxu0 0.0
        %548 = vmatpush1.msra.mxu0 0.0
        %549 = vmatprep.subr.mxu0 0.0
        %550 = vmatpush1.msra.mxu0 0.0
        %551 = vmatprep.subr.mxu0 0.0
        %552 = vmatpush1.msra.mxu0 0.0
        %553 = vmatprep.subr.mxu0 0.0
        %554 = vmatpush1.msra.mxu0 0.0
        %555 = vmatprep.subr.mxu0 0.0
        %556 = vmatpush1.msra.mxu0 0.0
        %557 = vmatprep.subr.mxu0 0.0
        %558 = vmatpush1.msra.mxu0 0.0
        %559 = vmatprep.subr.mxu0 0.0
        %560 = vmatpush1.msra.mxu0 0.0
        %561 = vmatprep.subr.mxu0 0.0
        %562 = vmatpush1.msra.mxu0 0.0
        %563 = vmatprep.subr.mxu0 0.0
        %564 = vmatpush1.msra.mxu0 0.0
        %565 = vmatprep.subr.mxu0 0.0
        %566 = vmatpush1.msra.mxu0 0.0
        %567 = vmatprep.subr.mxu0 0.0
        %568 = vmatpush1.msra.mxu0 0.0
        %569 = vmatprep.subr.mxu0 0.0
        %570 = vmatpush1.msra.mxu0 0.0
        %571 = vmatprep.subr.mxu0 0.0
        %572 = vmatpush1.msra.mxu0 0.0
        %573 = vmatprep.subr.mxu0 0.0
        %574 = vmatpush1.msra.mxu0 0.0
        %575 = vmatprep.subr.mxu0 0.0
        %576 = vmatpush1.msra.mxu0 0.0
        %577 = vmatprep.subr.mxu0 0.0
        %578 = vmatpush1.msra.mxu0 0.0
        %579 = vmatprep.mubr.f32.mxu0 0.0
        %580 = vmatmul.mubr.f32.gmra.mrb[0].mxu0 %v347
        %v581 = vpop.f32.mrb[0].mxu0
        %v582 = vadd.f32 %v513, %v581
        %v583 = vpop.f32.mrb[0].mxu0
        %584 = vdwg.mxu0
        %vm585 = vcmask 130048
        %v587 = vsel %vm585, %v416, 0
        %v590 = vsel %vm585, %v499, 0
        %592 = vmatprep.subr.mxu0 0.0
        %593 = vmatpush1.xpose.msra.mxu0 %v590
        %594 = vmatprep.subr.mxu0 0.0
        %595 = vmatpush1.xpose.msra.mxu0 0.0
        %596 = vmatprep.subr.mxu0 0.0
        %597 = vmatpush1.xpose.msra.mxu0 0.0
        %598 = vmatprep.subr.mxu0 0.0
        %599 = vmatpush1.xpose.msra.mxu0 0.0
        %600 = vmatprep.subr.mxu0 0.0
        %601 = vmatpush1.xpose.msra.mxu0 0.0
        %602 = vmatprep.subr.mxu0 0.0
        %603 = vmatpush1.xpose.msra.mxu0 0.0
        %604 = vmatprep.subr.mxu0 0.0
        %605 = vmatpush1.xpose.msra.mxu0 0.0
        %606 = vmatprep.subr.mxu0 0.0
        %607 = vmatpush1.xpose.msra.mxu0 0.0
        %608 = vmatprep.subr.mxu0 0.0
        %609 = vmatpush1.xpose.msra.mxu0 0.0
        %610 = vmatprep.subr.mxu0 0.0
        %611 = vmatpush1.xpose.msra.mxu0 0.0
        %612 = vmatprep.subr.mxu0 0.0
        %613 = vmatpush1.xpose.msra.mxu0 0.0
        %614 = vmatprep.subr.mxu0 0.0
        %615 = vmatpush1.xpose.msra.mxu0 0.0
        %616 = vmatprep.subr.mxu0 0.0
        %617 = vmatpush1.xpose.msra.mxu0 0.0
        %618 = vmatprep.subr.mxu0 0.0
        %619 = vmatpush1.xpose.msra.mxu0 0.0
        %620 = vmatprep.subr.mxu0 0.0
        %621 = vmatpush1.xpose.msra.mxu0 0.0
        %622 = vmatprep.subr.mxu0 0.0
        %623 = vmatpush1.xpose.msra.mxu0 0.0
        %624 = vmatprep.subr.mxu0 0.0
        %625 = vmatpush1.xpose.msra.mxu0 0.0
        %626 = vmatprep.subr.mxu0 0.0
        %627 = vmatpush1.xpose.msra.mxu0 0.0
        %628 = vmatprep.subr.mxu0 0.0
        %629 = vmatpush1.xpose.msra.mxu0 0.0
        %630 = vmatprep.subr.mxu0 0.0
        %631 = vmatpush1.xpose.msra.mxu0 0.0
        %632 = vmatprep.subr.mxu0 0.0
        %633 = vmatpush1.xpose.msra.mxu0 0.0
        %634 = vmatprep.subr.mxu0 0.0
        %635 = vmatpush1.xpose.msra.mxu0 0.0
        %636 = vmatprep.subr.mxu0 0.0
        %637 = vmatpush1.xpose.msra.mxu0 0.0
        %638 = vmatprep.subr.mxu0 0.0
        %639 = vmatpush1.xpose.msra.mxu0 0.0
        %640 = vmatprep.subr.mxu0 0.0
        %641 = vmatpush1.xpose.msra.mxu0 0.0
        %642 = vmatprep.subr.mxu0 0.0
        %643 = vmatpush1.xpose.msra.mxu0 0.0
        %644 = vmatprep.subr.mxu0 0.0
        %645 = vmatpush1.xpose.msra.mxu0 0.0
        %646 = vmatprep.subr.mxu0 0.0
        %647 = vmatpush1.xpose.msra.mxu0 0.0
        %648 = vmatprep.subr.mxu0 0.0
        %649 = vmatpush1.xpose.msra.mxu0 0.0
        %650 = vmatprep.subr.mxu0 0.0
        %651 = vmatpush1.xpose.msra.mxu0 0.0
        %652 = vmatprep.subr.mxu0 0.0
        %653 = vmatpush1.xpose.msra.mxu0 0.0
        %654 = vmatprep.subr.mxu0 0.0
        %655 = vmatpush1.xpose.msra.mxu0 0.0
        %656 = vmatprep.mubr.f32.mxu0 0.0
        %657 = vmatmul.mubr.f32.gmra.mrb[0].mxu0 %v587
        %v658 = vpop.f32.mrb[0].mxu0
        %v659 = vadd.f32 0.0, %v658
        %v660 = vpop.f32.mrb[0].mxu0
        %661 = vdwg.mxu0
        %vm662 = vcmask 64512
        %v663 = vsel %vm662, %v659, -inf
        %664 = vmax.xlane.f32.xlu0 %v663
        %v665 = vpop.xlane.xlu0 %664
        %v666 = vsub.f32 %v659, %v665
        %v667 = vmul.f32 %v666, 1.442695
        %v668 = vpow.pop %v667
        %v669 = vsel %vm662, %v668, 0.0
        %670 = vadd.xlane.f32.xlu0 %v669
        %v671 = vpop.xlane.xlu0 %670
        %v672 = vrcp.pop %v671
        %v673 = vmul.f32 %v668, %v672
        %v675 = vsel %vm662, %v673, 0
        %677 = vmatprep.subr.mxu0 0.0
        %678 = vmatpush1.msra.mxu0 %v582
        %679 = vmatprep.subr.mxu0 0.0
        %680 = vmatpush1.msra.mxu0 0.0
        %681 = vmatprep.subr.mxu0 0.0
        %682 = vmatpush1.msra.mxu0 0.0
        %683 = vmatprep.subr.mxu0 0.0
        %684 = vmatpush1.msra.mxu0 0.0
        %685 = vmatprep.subr.mxu0 0.0
        %686 = vmatpush1.msra.mxu0 0.0
        %687 = vmatprep.subr.mxu0 0.0
        %688 = vmatpush1.msra.mxu0 0.0
        %689 = vmatprep.subr.mxu0 0.0
        %690 = vmatpush1.msra.mxu0 0.0
        %691 = vmatprep.subr.mxu0 0.0
        %692 = vmatpush1.msra.mxu0 0.0
        %693 = vmatprep.subr.mxu0 0.0
        %694 = vmatpush1.msra.mxu0 0.0
        %695 = vmatprep.subr.mxu0 0.0
        %696 = vmatpush1.msra.mxu0 0.0
        %697 = vmatprep.subr.mxu0 0.0
        %698 = vmatpush1.msra.mxu0 0.0
        %699 = vmatprep.subr.mxu0 0.0
        %700 = vmatpush1.msra.mxu0 0.0
        %701 = vmatprep.subr.mxu0 0.0
        %702 = vmatpush1.msra.mxu0 0.0
        %703 = vmatprep.subr.mxu0 0.0
        %704 = vmatpush1.msra.mxu0 0.0
        %705 = vmatprep.subr.mxu0 0.0
        %706 = vmatpush1.msra.mxu0 0.0
        %707 = vmatprep.subr.mxu0 0.0
        %708 = vmatpush1.msra.mxu0 0.0
        %709 = vmatprep.subr.mxu0 0.0
        %710 = vmatpush1.msra.mxu0 0.0
        %711 = vmatprep.subr.mxu0 0.0
        %712 = vmatpush1.msra.mxu0 0.0
        %713 = vmatprep.subr.mxu0 0.0
        %714 = vmatpush1.msra.mxu0 0.0
        %715 = vmatprep.subr.mxu0 0.0
        %716 = vmatpush1.msra.mxu0 0.0
        %717 = vmatprep.subr.mxu0 0.0
        %718 = vmatpush1.msra.mxu0 0.0
        %719 = vmatprep.subr.mxu0 0.0
        %720 = vmatpush1.msra.mxu0 0.0
        %721 = vmatprep.subr.mxu0 0.0
        %722 = vmatpush1.msra.mxu0 0.0
        %723 = vmatprep.subr.mxu0 0.0
        %724 = vmatpush1.msra.mxu0 0.0
        %725 = vmatprep.subr.mxu0 0.0
        %726 = vmatpush1.msra.mxu0 0.0
        %727 = vmatprep.subr.mxu0 0.0
        %728 = vmatpush1.msra.mxu0 0.0
        %729 = vmatprep.subr.mxu0 0.0
        %730 = vmatpush1.msra.mxu0 0.0
        %731 = vmatprep.subr.mxu0 0.0
        %732 = vmatpush1.msra.mxu0 0.0
        %733 = vmatprep.subr.mxu0 0.0
        %734 = vmatpush1.msra.mxu0 0.0
        %735 = vmatprep.subr.mxu0 0.0
        %736 = vmatpush1.msra.mxu0 0.0
        %737 = vmatprep.subr.mxu0 0.0
        %738 = vmatpush1.msra.mxu0 0.0
        %739 = vmatprep.subr.mxu0 0.0
        %740 = vmatpush1.msra.mxu0 0.0
        %741 = vmatprep.mubr.f32.mxu0 0.0
        %742 = vmatmul.mubr.f32.gmra.mrb[0].mxu0 %v675
        %v743 = vpop.f32.mrb[0].mxu0
        %v744 = vadd.f32 0.0, %v743
        %v745 = vpop.f32.mrb[0].mxu0
        %746 = vdwg.mxu0
        %v747 = vld [vmem:[%s3] sm:$0xff]
        %v748 = vld [vmem:[%s3 + $0x8] sm:$0xff]
        %s749 = scalar_lea.vmem %s1, 96
        %v750 = vld [vmem:[%s749] sm:$0xff]
        %v751 = vld [vmem:[%s749 + $0x8] sm:$0xff]
        %v752 = vld [vmem:[%s749 + $0x10] sm:$0xff]
        %v753 = vld [vmem:[%s749 + $0x18] sm:$0xff]
        %s754 = scalar_lea.vmem %s2, 3
        %v755 = vld [vmem:[%s754] sm:$0x1]
        %v757 = vlaneseq
        %v758 = vshrl.u32 %v757, 7
        %v759 = vsub.s32 0, %v758
        %v760 = vrot.slane %v755, %v759
        %762 = vmatprep.subr.mxu0 0.0
        %763 = vmatpush1.msra.mxu0 %v750
        %764 = vmatprep.subr.mxu0 0.0
        %765 = vmatpush1.msra.mxu0 %v751
        %766 = vmatprep.subr.mxu0 0.0
        %767 = vmatpush1.msra.mxu0 %v752
        %768 = vmatprep.subr.mxu0 0.0
        %769 = vmatpush1.msra.mxu0 %v753
        %770 = vmatprep.subr.mxu0 0.0
        %771 = vmatpush1.msra.mxu0 0.0
        %772 = vmatprep.subr.mxu0 0.0
        %773 = vmatpush1.msra.mxu0 0.0
        %774 = vmatprep.subr.mxu0 0.0
        %775 = vmatpush1.msra.mxu0 0.0
        %776 = vmatprep.subr.mxu0 0.0
        %777 = vmatpush1.msra.mxu0 0.0
        %778 = vmatprep.subr.mxu0 0.0
        %779 = vmatpush1.msra.mxu0 0.0
        %780 = vmatprep.subr.mxu0 0.0
        %781 = vmatpush1.msra.mxu0 0.0
        %782 = vmatprep.subr.mxu0 0.0
        %783 = vmatpush1.msra.mxu0 0.0
        %784 = vmatprep.subr.mxu0 0.0
        %785 = vmatpush1.msra.mxu0 0.0
        %786 = vmatprep.subr.mxu0 0.0
        %787 = vmatpush1.msra.mxu0 0.0
        %788 = vmatprep.subr.mxu0 0.0
        %789 = vmatpush1.msra.mxu0 0.0
        %790 = vmatprep.subr.mxu0 0.0
        %791 = vmatpush1.msra.mxu0 0.0
        %792 = vmatprep.subr.mxu0 0.0
        %793 = vmatpush1.msra.mxu0 0.0
        %794 = vmatprep.subr.mxu0 0.0
        %795 = vmatpush1.msra.mxu0 0.0
        %796 = vmatprep.subr.mxu0 0.0
        %797 = vmatpush1.msra.mxu0 0.0
        %798 = vmatprep.subr.mxu0 0.0
        %799 = vmatpush1.msra.mxu0 0.0
        %800 = vmatprep.subr.mxu0 0.0
        %801 = vmatpush1.msra.mxu0 0.0
        %802 = vmatprep.subr.mxu0 0.0
        %803 = vmatpush1.msra.mxu0 0.0
        %804 = vmatprep.subr.mxu0 0.0
        %805 = vmatpush1.msra.mxu0 0.0
        %806 = vmatprep.subr.mxu0 0.0
        %807 = vmatpush1.msra.mxu0 0.0
        %808 = vmatprep.subr.mxu0 0.0
        %809 = vmatpush1.msra.mxu0 0.0
        %810 = vmatprep.subr.mxu0 0.0
        %811 = vmatpush1.msra.mxu0 0.0
        %812 = vmatprep.subr.mxu0 0.0
        %813 = vmatpush1.msra.mxu0 0.0
        %814 = vmatprep.subr.mxu0 0.0
        %815 = vmatpush1.msra.mxu0 0.0
        %816 = vmatprep.subr.mxu0 0.0
        %817 = vmatpush1.msra.mxu0 0.0
        %818 = vmatprep.subr.mxu0 0.0
        %819 = vmatpush1.msra.mxu0 0.0
        %820 = vmatprep.subr.mxu0 0.0
        %821 = vmatpush1.msra.mxu0 0.0
        %822 = vmatprep.subr.mxu0 0.0
        %823 = vmatpush1.msra.mxu0 0.0
        %824 = vmatprep.subr.mxu0 0.0
        %825 = vmatpush1.msra.mxu0 0.0
        %826 = vmatprep.mubr.f32.mxu0 0.0
        %827 = vmatmul.mubr.f32.gmra.mrb[0].mxu0 %v347
        %v828 = vpop.f32.mrb[0].mxu0
        %v829 = vadd.f32 %v760, %v828
        %v830 = vpop.f32.mrb[0].mxu0
        %831 = vdwg.mxu0
        %s832 = scalar_lea.vmem %s1, 128
        %v833 = vld [vmem:[%s832] sm:$0xff]
        %v834 = vld [vmem:[%s832 + $0x8] sm:$0xff]
        %v835 = vld [vmem:[%s832 + $0x10] sm:$0xff]
        %v836 = vld [vmem:[%s832 + $0x18] sm:$0xff]
        %s837 = scalar_lea.vmem %s2, 4
        %v838 = vld [vmem:[%s837] sm:$0x1]
        %v840 = vlaneseq
        %v841 = vshrl.u32 %v840, 7
        %v842 = vsub.s32 0, %v841
        %v843 = vrot.slane %v838, %v842
        %845 = vmatprep.subr.mxu0 0.0
        %846 = vmatpush1.msra.mxu0 %v833
        %847 = vmatprep.subr.mxu0 0.0
        %848 = vmatpush1.msra.mxu0 %v834
        %849 = vmatprep.subr.mxu0 0.0
        %850 = vmatpush1.msra.mxu0 %v835
        %851 = vmatprep.subr.mxu0 0.0
        %852 = vmatpush1.msra.mxu0 %v836
        %853 = vmatprep.subr.mxu0 0.0
        %854 = vmatpush1.msra.mxu0 0.0
        %855 = vmatprep.subr.mxu0 0.0
        %856 = vmatpush1.msra.mxu0 0.0
        %857 = vmatprep.subr.mxu0 0.0
        %858 = vmatpush1.msra.mxu0 0.0
        %859 = vmatprep.subr.mxu0 0.0
        %860 = vmatpush1.msra.mxu0 0.0
        %861 = vmatprep.subr.mxu0 0.0
        %862 = vmatpush1.msra.mxu0 0.0
        %863 = vmatprep.subr.mxu0 0.0
        %864 = vmatpush1.msra.mxu0 0.0
        %865 = vmatprep.subr.mxu0 0.0
        %866 = vmatpush1.msra.mxu0 0.0
        %867 = vmatprep.subr.mxu0 0.0
        %868 = vmatpush1.msra.mxu0 0.0
        %869 = vmatprep.subr.mxu0 0.0
        %870 = vmatpush1.msra.mxu0 0.0
        %871 = vmatprep.subr.mxu0 0.0
        %872 = vmatpush1.msra.mxu0 0.0
        %873 = vmatprep.subr.mxu0 0.0
        %874 = vmatpush1.msra.mxu0 0.0
        %875 = vmatprep.subr.mxu0 0.0
        %876 = vmatpush1.msra.mxu0 0.0
        %877 = vmatprep.subr.mxu0 0.0
        %878 = vmatpush1.msra.mxu0 0.0
        %879 = vmatprep.subr.mxu0 0.0
        %880 = vmatpush1.msra.mxu0 0.0
        %881 = vmatprep.subr.mxu0 0.0
        %882 = vmatpush1.msra.mxu0 0.0
        %883 = vmatprep.subr.mxu0 0.0
        %884 = vmatpush1.msra.mxu0 0.0
        %885 = vmatprep.subr.mxu0 0.0
        %886 = vmatpush1.msra.mxu0 0.0
        %887 = vmatprep.subr.mxu0 0.0
        %888 = vmatpush1.msra.mxu0 0.0
        %889 = vmatprep.subr.mxu0 0.0
        %890 = vmatpush1.msra.mxu0 0.0
        %891 = vmatprep.subr.mxu0 0.0
        %892 = vmatpush1.msra.mxu0 0.0
        %893 = vmatprep.subr.mxu0 0.0
        %894 = vmatpush1.msra.mxu0 0.0
        %895 = vmatprep.subr.mxu0 0.0
        %896 = vmatpush1.msra.mxu0 0.0
        %897 = vmatprep.subr.mxu0 0.0
        %898 = vmatpush1.msra.mxu0 0.0
        %899 = vmatprep.subr.mxu0 0.0
        %900 = vmatpush1.msra.mxu0 0.0
        %901 = vmatprep.subr.mxu0 0.0
        %902 = vmatpush1.msra.mxu0 0.0
        %903 = vmatprep.subr.mxu0 0.0
        %904 = vmatpush1.msra.mxu0 0.0
        %905 = vmatprep.subr.mxu0 0.0
        %906 = vmatpush1.msra.mxu0 0.0
        %907 = vmatprep.subr.mxu0 0.0
        %908 = vmatpush1.msra.mxu0 0.0
        %909 = vmatprep.mubr.f32.mxu0 0.0
        %910 = vmatmul.mubr.f32.gmra.mrb[0].mxu0 %v347
        %v911 = vpop.f32.mrb[0].mxu0
        %v912 = vadd.f32 %v843, %v911
        %v913 = vpop.f32.mrb[0].mxu0
        %914 = vdwg.mxu0
        %s915 = scalar_lea.vmem %s1, 160
        %v916 = vld [vmem:[%s915] sm:$0xff]
        %v917 = vld [vmem:[%s915 + $0x8] sm:$0xff]
        %v918 = vld [vmem:[%s915 + $0x10] sm:$0xff]
        %v919 = vld [vmem:[%s915 + $0x18] sm:$0xff]
        %s920 = scalar_lea.vmem %s2, 5
        %v921 = vld [vmem:[%s920] sm:$0x1]
        %v923 = vlaneseq
        %v924 = vshrl.u32 %v923, 7
        %v925 = vsub.s32 0, %v924
        %v926 = vrot.slane %v921, %v925
        %928 = vmatprep.subr.mxu0 0.0
        %929 = vmatpush1.msra.mxu0 %v916
        %930 = vmatprep.subr.mxu0 0.0
        %931 = vmatpush1.msra.mxu0 %v917
        %932 = vmatprep.subr.mxu0 0.0
        %933 = vmatpush1.msra.mxu0 %v918
        %934 = vmatprep.subr.mxu0 0.0
        %935 = vmatpush1.msra.mxu0 %v919
        %936 = vmatprep.subr.mxu0 0.0
        %937 = vmatpush1.msra.mxu0 0.0
        %938 = vmatprep.subr.mxu0 0.0
        %939 = vmatpush1.msra.mxu0 0.0
        %940 = vmatprep.subr.mxu0 0.0
        %941 = vmatpush1.msra.mxu0 0.0
        %942 = vmatprep.subr.mxu0 0.0
        %943 = vmatpush1.msra.mxu0 0.0
        %944 = vmatprep.subr.mxu0 0.0
        %945 = vmatpush1.msra.mxu0 0.0
        %946 = vmatprep.subr.mxu0 0.0
        %947 = vmatpush1.msra.mxu0 0.0
        %948 = vmatprep.subr.mxu0 0.0
        %949 = vmatpush1.msra.mxu0 0.0
        %950 = vmatprep.subr.mxu0 0.0
        %951 = vmatpush1.msra.mxu0 0.0
        %952 = vmatprep.subr.mxu0 0.0
        %953 = vmatpush1.msra.mxu0 0.0
        %954 = vmatprep.subr.mxu0 0.0
        %955 = vmatpush1.msra.mxu0 0.0
        %956 = vmatprep.subr.mxu0 0.0
        %957 = vmatpush1.msra.mxu0 0.0
        %958 = vmatprep.subr.mxu0 0.0
        %959 = vmatpush1.msra.mxu0 0.0
        %960 = vmatprep.subr.mxu0 0.0
        %961 = vmatpush1.msra.mxu0 0.0
        %962 = vmatprep.subr.mxu0 0.0
        %963 = vmatpush1.msra.mxu0 0.0
        %964 = vmatprep.subr.mxu0 0.0
        %965 = vmatpush1.msra.mxu0 0.0
        %966 = vmatprep.subr.mxu0 0.0
        %967 = vmatpush1.msra.mxu0 0.0
        %968 = vmatprep.subr.mxu0 0.0
        %969 = vmatpush1.msra.mxu0 0.0
        %970 = vmatprep.subr.mxu0 0.0
        %971 = vmatpush1.msra.mxu0 0.0
        %972 = vmatprep.subr.mxu0 0.0
        %973 = vmatpush1.msra.mxu0 0.0
        %974 = vmatprep.subr.mxu0 0.0
        %975 = vmatpush1.msra.mxu0 0.0
        %976 = vmatprep.subr.mxu0 0.0
        %977 = vmatpush1.msra.mxu0 0.0
        %978 = vmatprep.subr.mxu0 0.0
        %979 = vmatpush1.msra.mxu0 0.0
        %980 = vmatprep.subr.mxu0 0.0
        %981 = vmatpush1.msra.mxu0 0.0
        %982 = vmatprep.subr.mxu0 0.0
        %983 = vmatpush1.msra.mxu0 0.0
        %984 = vmatprep.subr.mxu0 0.0
        %985 = vmatpush1.msra.mxu0 0.0
        %986 = vmatprep.subr.mxu0 0.0
        %987 = vmatpush1.msra.mxu0 0.0
        %988 = vmatprep.subr.mxu0 0.0
        %989 = vmatpush1.msra.mxu0 0.0
        %990 = vmatprep.subr.mxu0 0.0
        %991 = vmatpush1.msra.mxu0 0.0
        %992 = vmatprep.mubr.f32.mxu0 0.0
        %993 = vmatmul.mubr.f32.gmra.mrb[0].mxu0 %v347
        %v994 = vpop.f32.mrb[0].mxu0
        %v995 = vadd.f32 %v926, %v994
        %v996 = vpop.f32.mrb[0].mxu0
        %997 = vdwg.mxu0
        %v999 = vsel %vm585, %v829, 0
        %v1002 = vsel %vm585, %v912, 0
        %1004 = vmatprep.subr.mxu0 0.0
        %1005 = vmatpush1.xpose.msra.mxu0 %v1002
        %1006 = vmatprep.subr.mxu0 0.0
        %1007 = vmatpush1.xpose.msra.mxu0 0.0
        %1008 = vmatprep.subr.mxu0 0.0
        %1009 = vmatpush1.xpose.msra.mxu0 0.0
        %1010 = vmatprep.subr.mxu0 0.0
        %1011 = vmatpush1.xpose.msra.mxu0 0.0
        %1012 = vmatprep.subr.mxu0 0.0
        %1013 = vmatpush1.xpose.msra.mxu0 0.0
        %1014 = vmatprep.subr.mxu0 0.0
        %1015 = vmatpush1.xpose.msra.mxu0 0.0
        %1016 = vmatprep.subr.mxu0 0.0
        %1017 = vmatpush1.xpose.msra.mxu0 0.0
        %1018 = vmatprep.subr.mxu0 0.0
        %1019 = vmatpush1.xpose.msra.mxu0 0.0
        %1020 = vmatprep.subr.mxu0 0.0
        %1021 = vmatpush1.xpose.msra.mxu0 0.0
        %1022 = vmatprep.subr.mxu0 0.0
        %1023 = vmatpush1.xpose.msra.mxu0 0.0
        %1024 = vmatprep.subr.mxu0 0.0
        %1025 = vmatpush1.xpose.msra.mxu0 0.0
        %1026 = vmatprep.subr.mxu0 0.0
        %1027 = vmatpush1.xpose.msra.mxu0 0.0
        %1028 = vmatprep.subr.mxu0 0.0
        %1029 = vmatpush1.xpose.msra.mxu0 0.0
        %1030 = vmatprep.subr.mxu0 0.0
        %1031 = vmatpush1.xpose.msra.mxu0 0.0
        %1032 = vmatprep.subr.mxu0 0.0
        %1033 = vmatpush1.xpose.msra.mxu0 0.0
        %1034 = vmatprep.subr.mxu0 0.0
        %1035 = vmatpush1.xpose.msra.mxu0 0.0
        %1036 = vmatprep.subr.mxu0 0.0
        %1037 = vmatpush1.xpose.msra.mxu0 0.0
        %1038 = vmatprep.subr.mxu0 0.0
        %1039 = vmatpush1.xpose.msra.mxu0 0.0
        %1040 = vmatprep.subr.mxu0 0.0
        %1041 = vmatpush1.xpose.msra.mxu0 0.0
        %1042 = vmatprep.subr.mxu0 0.0
        %1043 = vmatpush1.xpose.msra.mxu0 0.0
        %1044 = vmatprep.subr.mxu0 0.0
        %1045 = vmatpush1.xpose.msra.mxu0 0.0
        %1046 = vmatprep.subr.mxu0 0.0
        %1047 = vmatpush1.xpose.msra.mxu0 0.0
        %1048 = vmatprep.subr.mxu0 0.0
        %1049 = vmatpush1.xpose.msra.mxu0 0.0
        %1050 = vmatprep.subr.mxu0 0.0
        %1051 = vmatpush1.xpose.msra.mxu0 0.0
        %1052 = vmatprep.subr.mxu0 0.0
        %1053 = vmatpush1.xpose.msra.mxu0 0.0
        %1054 = vmatprep.subr.mxu0 0.0
        %1055 = vmatpush1.xpose.msra.mxu0 0.0
        %1056 = vmatprep.subr.mxu0 0.0
        %1057 = vmatpush1.xpose.msra.mxu0 0.0
        %1058 = vmatprep.subr.mxu0 0.0
        %1059 = vmatpush1.xpose.msra.mxu0 0.0
        %1060 = vmatprep.subr.mxu0 0.0
        %1061 = vmatpush1.xpose.msra.mxu0 0.0
        %1062 = vmatprep.subr.mxu0 0.0
        %1063 = vmatpush1.xpose.msra.mxu0 0.0
        %1064 = vmatprep.subr.mxu0 0.0
        %1065 = vmatpush1.xpose.msra.mxu0 0.0
        %1066 = vmatprep.subr.mxu0 0.0
        %1067 = vmatpush1.xpose.msra.mxu0 0.0
        %1068 = vmatprep.mubr.f32.mxu0 0.0
        %1069 = vmatmul.mubr.f32.gmra.mrb[0].mxu0 %v999
        %v1070 = vpop.f32.mrb[0].mxu0
        %v1071 = vadd.f32 0.0, %v1070
        %v1072 = vpop.f32.mrb[0].mxu0
        %1073 = vdwg.mxu0
        %v1074 = vsel %vm662, %v1071, -inf
        %1075 = vmax.xlane.f32.xlu0 %v1074
        %v1076 = vpop.xlane.xlu0 %1075
        %v1077 = vsub.f32 %v1071, %v1076
        %v1078 = vmul.f32 %v1077, 1.442695
        %v1079 = vpow.pop %v1078
        %v1080 = vsel %vm662, %v1079, 0.0
        %1081 = vadd.xlane.f32.xlu0 %v1080
        %v1082 = vpop.xlane.xlu0 %1081
        %v1083 = vrcp.pop %v1082
        %v1084 = vmul.f32 %v1079, %v1083
        %v1086 = vsel %vm662, %v1084, 0
        %1088 = vmatprep.subr.mxu0 0.0
        %1089 = vmatpush1.msra.mxu0 %v995
        %1090 = vmatprep.subr.mxu0 0.0
        %1091 = vmatpush1.msra.mxu0 0.0
        %1092 = vmatprep.subr.mxu0 0.0
        %1093 = vmatpush1.msra.mxu0 0.0
        %1094 = vmatprep.subr.mxu0 0.0
        %1095 = vmatpush1.msra.mxu0 0.0
        %1096 = vmatprep.subr.mxu0 0.0
        %1097 = vmatpush1.msra.mxu0 0.0
        %1098 = vmatprep.subr.mxu0 0.0
        %1099 = vmatpush1.msra.mxu0 0.0
        %1100 = vmatprep.subr.mxu0 0.0
        %1101 = vmatpush1.msra.mxu0 0.0
        %1102 = vmatprep.subr.mxu0 0.0
        %1103 = vmatpush1.msra.mxu0 0.0
        %1104 = vmatprep.subr.mxu0 0.0
        %1105 = vmatpush1.msra.mxu0 0.0
        %1106 = vmatprep.subr.mxu0 0.0
        %1107 = vmatpush1.msra.mxu0 0.0
        %1108 = vmatprep.subr.mxu0 0.0
        %1109 = vmatpush1.msra.mxu0 0.0
        %1110 = vmatprep.subr.mxu0 0.0
        %1111 = vmatpush1.msra.mxu0 0.0
        %1112 = vmatprep.subr.mxu0 0.0
        %1113 = vmatpush1.msra.mxu0 0.0
        %1114 = vmatprep.subr.mxu0 0.0
        %1115 = vmatpush1.msra.mxu0 0.0
        %1116 = vmatprep.subr.mxu0 0.0
        %1117 = vmatpush1.msra.mxu0 0.0
        %1118 = vmatprep.subr.mxu0 0.0
        %1119 = vmatpush1.msra.mxu0 0.0
        %1120 = vmatprep.subr.mxu0 0.0
        %1121 = vmatpush1.msra.mxu0 0.0
        %1122 = vmatprep.subr.mxu0 0.0
        %1123 = vmatpush1.msra.mxu0 0.0
        %1124 = vmatprep.subr.mxu0 0.0
        %1125 = vmatpush1.msra.mxu0 0.0
        %1126 = vmatprep.subr.mxu0 0.0
        %1127 = vmatpush1.msra.mxu0 0.0
        %1128 = vmatprep.subr.mxu0 0.0
        %1129 = vmatpush1.msra.mxu0 0.0
        %1130 = vmatprep.subr.mxu0 0.0
        %1131 = vmatpush1.msra.mxu0 0.0
        %1132 = vmatprep.subr.mxu0 0.0
        %1133 = vmatpush1.msra.mxu0 0.0
        %1134 = vmatprep.subr.mxu0 0.0
        %1135 = vmatpush1.msra.mxu0 0.0
        %1136 = vmatprep.subr.mxu0 0.0
        %1137 = vmatpush1.msra.mxu0 0.0
        %1138 = vmatprep.subr.mxu0 0.0
        %1139 = vmatpush1.msra.mxu0 0.0
        %1140 = vmatprep.subr.mxu0 0.0
        %1141 = vmatpush1.msra.mxu0 0.0
        %1142 = vmatprep.subr.mxu0 0.0
        %1143 = vmatpush1.msra.mxu0 0.0
        %1144 = vmatprep.subr.mxu0 0.0
        %1145 = vmatpush1.msra.mxu0 0.0
        %1146 = vmatprep.subr.mxu0 0.0
        %1147 = vmatpush1.msra.mxu0 0.0
        %1148 = vmatprep.subr.mxu0 0.0
        %1149 = vmatpush1.msra.mxu0 0.0
        %1150 = vmatprep.subr.mxu0 0.0
        %1151 = vmatpush1.msra.mxu0 0.0
        %1152 = vmatprep.mubr.f32.mxu0 0.0
        %1153 = vmatmul.mubr.f32.gmra.mrb[0].mxu0 %v1086
        %v1154 = vpop.f32.mrb[0].mxu0
        %v1155 = vadd.f32 0.0, %v1154
        %v1156 = vpop.f32.mrb[0].mxu0
        %1157 = vdwg.mxu0
        %s1158 = scalar_lea.vmem %s3, 16
        %v1159 = vld [vmem:[%s1158] sm:$0xff]
        %v1160 = vld [vmem:[%s1158 + $0x8] sm:$0xff]
        %v1162 = vsel %vm585, %v1155, 0
        %1164 = vmatprep.subr.mxu0 0.0
        %1165 = vmatpush1.msra.mxu0 %v1159
        %1166 = vmatprep.subr.mxu0 0.0
        %1167 = vmatpush1.msra.mxu0 %v1160
        %1168 = vmatprep.subr.mxu0 0.0
        %1169 = vmatpush1.msra.mxu0 0.0
        %1170 = vmatprep.subr.mxu0 0.0
        %1171 = vmatpush1.msra.mxu0 0.0
        %1172 = vmatprep.subr.mxu0 0.0
        %1173 = vmatpush1.msra.mxu0 0.0
        %1174 = vmatprep.subr.mxu0 0.0
        %1175 = vmatpush1.msra.mxu0 0.0
        %1176 = vmatprep.subr.mxu0 0.0
        %1177 = vmatpush1.msra.mxu0 0.0
        %1178 = vmatprep.subr.mxu0 0.0
        %1179 = vmatpush1.msra.mxu0 0.0
        %1180 = vmatprep.subr.mxu0 0.0
        %1181 = vmatpush1.msra.mxu0 0.0
        %1182 = vmatprep.subr.mxu0 0.0
        %1183 = vmatpush1.msra.mxu0 0.0
        %1184 = vmatprep.subr.mxu0 0.0
        %1185 = vmatpush1.msra.mxu0 0.0
        %1186 = vmatprep.subr.mxu0 0.0
        %1187 = vmatpush1.msra.mxu0 0.0
        %1188 = vmatprep.subr.mxu0 0.0
        %1189 = vmatpush1.msra.mxu0 0.0
        %1190 = vmatprep.subr.mxu0 0.0
        %1191 = vmatpush1.msra.mxu0 0.0
        %1192 = vmatprep.subr.mxu0 0.0
        %1193 = vmatpush1.msra.mxu0 0.0
        %1194 = vmatprep.subr.mxu0 0.0
        %1195 = vmatpush1.msra.mxu0 0.0
        %1196 = vmatprep.subr.mxu0 0.0
        %1197 = vmatpush1.msra.mxu0 0.0
        %1198 = vmatprep.subr.mxu0 0.0
        %1199 = vmatpush1.msra.mxu0 0.0
        %1200 = vmatprep.subr.mxu0 0.0
        %1201 = vmatpush1.msra.mxu0 0.0
        %1202 = vmatprep.subr.mxu0 0.0
        %1203 = vmatpush1.msra.mxu0 0.0
        %1204 = vmatprep.subr.mxu0 0.0
        %1205 = vmatpush1.msra.mxu0 0.0
        %1206 = vmatprep.subr.mxu0 0.0
        %1207 = vmatpush1.msra.mxu0 0.0
        %1208 = vmatprep.subr.mxu0 0.0
        %1209 = vmatpush1.msra.mxu0 0.0
        %1210 = vmatprep.subr.mxu0 0.0
        %1211 = vmatpush1.msra.mxu0 0.0
        %1212 = vmatprep.subr.mxu0 0.0
        %1213 = vmatpush1.msra.mxu0 0.0
        %1214 = vmatprep.subr.mxu0 0.0
        %1215 = vmatpush1.msra.mxu0 0.0
        %1216 = vmatprep.subr.mxu0 0.0
        %1217 = vmatpush1.msra.mxu0 0.0
        %1218 = vmatprep.subr.mxu0 0.0
        %1219 = vmatpush1.msra.mxu0 0.0
        %1220 = vmatprep.subr.mxu0 0.0
        %1221 = vmatpush1.msra.mxu0 0.0
        %1222 = vmatprep.subr.mxu0 0.0
        %1223 = vmatpush1.msra.mxu0 0.0
        %1224 = vmatprep.subr.mxu0 0.0
        %1225 = vmatpush1.msra.mxu0 0.0
        %1226 = vmatprep.subr.mxu0 0.0
        %1227 = vmatpush1.msra.mxu0 0.0
        %1228 = vmatprep.mubr.f32.mxu0 0.0
        %1229 = vmatmul.mubr.f32.gmra.mrb[0].mxu0 %v1162
        %v1230 = vpop.f32.mrb[0].mxu0
        %v1231 = vadd.f32 0.0, %v1230
        %v1232 = vpop.f32.mrb[0].mxu0
        %1233 = vdwg.mxu0
        %v1235 = vsel %vm585, %v744, 0
        %1237 = vmatprep.subr.mxu0 0.0
        %1238 = vmatpush1.msra.mxu0 %v747
        %1239 = vmatprep.subr.mxu0 0.0
        %1240 = vmatpush1.msra.mxu0 %v748
        %1241 = vmatprep.subr.mxu0 0.0
        %1242 = vmatpush1.msra.mxu0 0.0
        %1243 = vmatprep.subr.mxu0 0.0
        %1244 = vmatpush1.msra.mxu0 0.0
        %1245 = vmatprep.subr.mxu0 0.0
        %1246 = vmatpush1.msra.mxu0 0.0
        %1247 = vmatprep.subr.mxu0 0.0
        %1248 = vmatpush1.msra.mxu0 0.0
        %1249 = vmatprep.subr.mxu0 0.0
        %1250 = vmatpush1.msra.mxu0 0.0
        %1251 = vmatprep.subr.mxu0 0.0
        %1252 = vmatpush1.msra.mxu0 0.0
        %1253 = vmatprep.subr.mxu0 0.0
        %1254 = vmatpush1.msra.mxu0 0.0
        %1255 = vmatprep.subr.mxu0 0.0
        %1256 = vmatpush1.msra.mxu0 0.0
        %1257 = vmatprep.subr.mxu0 0.0
        %1258 = vmatpush1.msra.mxu0 0.0
        %1259 = vmatprep.subr.mxu0 0.0
        %1260 = vmatpush1.msra.mxu0 0.0
        %1261 = vmatprep.subr.mxu0 0.0
        %1262 = vmatpush1.msra.mxu0 0.0
        %1263 = vmatprep.subr.mxu0 0.0
        %1264 = vmatpush1.msra.mxu0 0.0
        %1265 = vmatprep.subr.mxu0 0.0
        %1266 = vmatpush1.msra.mxu0 0.0
        %1267 = vmatprep.subr.mxu0 0.0
        %1268 = vmatpush1.msra.mxu0 0.0
        %1269 = vmatprep.subr.mxu0 0.0
        %1270 = vmatpush1.msra.mxu0 0.0
        %1271 = vmatprep.subr.mxu0 0.0
        %1272 = vmatpush1.msra.mxu0 0.0
        %1273 = vmatprep.subr.mxu0 0.0
        %1274 = vmatpush1.msra.mxu0 0.0
        %1275 = vmatprep.subr.mxu0 0.0
        %1276 = vmatpush1.msra.mxu0 0.0
        %1277 = vmatprep.subr.mxu0 0.0
        %1278 = vmatpush1.msra.mxu0 0.0
        %1279 = vmatprep.subr.mxu0 0.0
        %1280 = vmatpush1.msra.mxu0 0.0
        %1281 = vmatprep.subr.mxu0 0.0
        %1282 = vmatpush1.msra.mxu0 0.0
        %1283 = vmatprep.subr.mxu0 0.0
        %1284 = vmatpush1.msra.mxu0 0.0
        %1285 = vmatprep.subr.mxu0 0.0
        %1286 = vmatpush1.msra.mxu0 0.0
        %1287 = vmatprep.subr.mxu0 0.0
        %1288 = vmatpush1.msra.mxu0 0.0
        %1289 = vmatprep.subr.mxu0 0.0
        %1290 = vmatpush1.msra.mxu0 0.0
        %1291 = vmatprep.subr.mxu0 0.0
        %1292 = vmatpush1.msra.mxu0 0.0
        %1293 = vmatprep.subr.mxu0 0.0
        %1294 = vmatpush1.msra.mxu0 0.0
        %1295 = vmatprep.subr.mxu0 0.0
        %1296 = vmatpush1.msra.mxu0 0.0
        %1297 = vmatprep.subr.mxu0 0.0
        %1298 = vmatpush1.msra.mxu0 0.0
        %1299 = vmatprep.subr.mxu0 0.0
        %1300 = vmatpush1.msra.mxu0 0.0
        %1301 = vmatprep.mubr.f32.mxu0 0.0
        %1302 = vmatmul.mubr.f32.gmra.mrb[0].mxu0 %v1235
        %v1303 = vpop.f32.mrb[0].mxu0
        %v1304 = vadd.f32 %v1231, %v1303
        %v1305 = vpop.f32.mrb[0].mxu0
        %1306 = vdwg.mxu0
        %v1307 = vlaneseq
        %v1308 = vshrl.u32 %v1307, 7
        %v1309 = vsub.s32 0, %v1308
        %v1310 = vrot.slane %v308, %v1309
        %v1311 = vadd.f32 %v1304, %v1310
        %v1312 = vsel %vm310, %v1311, 0.0
        %1313 = vadd.xlane.f32.xlu0 %v1312
        %v1314 = vpop.xlane.xlu0 %1313
        %v1315 = vmul.f32 %v1314, %v314
        %v1316 = vsub.f32 %v1311, %v1315
        %v1317 = vmul.f32 %v1316, %v1316
        %v1318 = vsel %vm310, %v1317, 0.0
        %1319 = vadd.xlane.f32.xlu0 %v1318
        %v1320 = vpop.xlane.xlu0 %1319
        %v1321 = vmul.f32 %v1320, %v314
        %v1322 = vadd.f32 %v1321, 1e-05
        %v1323 = vrsqrt.pop %v1322
        %v1324 = vmul.f32 %v1316, %v1323
        %v1325 = vlaneseq
        %v1326 = vshrl.u32 %v1325, 7
        %v1327 = vsub.s32 0, %v1326
        %v1328 = vrot.slane %v304, %v1327
        %v1329 = vmul.f32 %v1324, %v1328
        %v1330 = vlaneseq
        %v1331 = vshrl.u32 %v1330, 7
        %v1332 = vsub.s32 0, %v1331
        %v1333 = vrot.slane %v305, %v1332
        %v1334 = vadd.f32 %v1329, %v1333
        %v1335 = vadd.f32 %v301, %v1334
        %v1336 = vsel %vm310, %v1335, 0.0
        %1337 = vadd.xlane.f32.xlu0 %v1336
        %v1338 = vpop.xlane.xlu0 %1337
        %v1339 = vmul.f32 %v1338, %v314
        %v1340 = vsub.f32 %v1335, %v1339
        %v1341 = vmul.f32 %v1340, %v1340
        %v1342 = vsel %vm310, %v1341, 0.0
        %1343 = vadd.xlane.f32.xlu0 %v1342
        %v1344 = vpop.xlane.xlu0 %1343
        %v1345 = vmul.f32 %v1344, %v314
        %v1346 = vadd.f32 %v1345, 1e-05
        %v1347 = vrsqrt.pop %v1346
        %v1348 = vmul.f32 %v1340, %v1347
        %v1349 = vlaneseq
        %v1350 = vshrl.u32 %v1349, 7
        %v1351 = vsub.s32 0, %v1350
        %v1352 = vrot.slane %v306, %v1351
        %v1353 = vmul.f32 %v1348, %v1352
        %v1354 = vlaneseq
        %v1355 = vshrl.u32 %v1354, 7
        %v1356 = vsub.s32 0, %v1355
        %v1357 = vrot.slane %v307, %v1356
        %v1358 = vadd.f32 %v1353, %v1357
        %v1359 = vld [vmem:[%s4] sm:$0xff]
        %v1360 = vld [vmem:[%s4 + $0x8] sm:$0xff]
        %v1361 = vld [vmem:[%s4 + $0x10] sm:$0xff]
        %v1362 = vld [vmem:[%s4 + $0x18] sm:$0xff]
        %v1363 = vld [vmem:[%s5] sm:$0x1]
        %v1365 = vlaneseq
        %v1366 = vshrl.u32 %v1365, 7
        %v1367 = vsub.s32 0, %v1366
        %v1368 = vrot.slane %v1363, %v1367
        %v1371 = vsel %vm310, %v1358, 0
        %1373 = vmatprep.subr.mxu0 0.0
        %1374 = vmatpush1.msra.mxu0 %v1359
        %1375 = vmatprep.subr.mxu0 0.0
        %1376 = vmatpush1.msra.mxu0 %v1360
        %1377 = vmatprep.subr.mxu0 0.0
        %1378 = vmatpush1.msra.mxu0 %v1361
        %1379 = vmatprep.subr.mxu0 0.0
        %1380 = vmatpush1.msra.mxu0 %v1362
        %1381 = vmatprep.subr.mxu0 0.0
        %1382 = vmatpush1.msra.mxu0 0.0
        %1383 = vmatprep.subr.mxu0 0.0
        %1384 = vmatpush1.msra.mxu0 0.0
        %1385 = vmatprep.subr.mxu0 0.0
        %1386 = vmatpush1.msra.mxu0 0.0
        %1387 = vmatprep.subr.mxu0 0.0
        %1388 = vmatpush1.msra.mxu0 0.0
        %1389 = vmatprep.subr.mxu0 0.0
        %1390 = vmatpush1.msra.mxu0 0.0
        %1391 = vmatprep.subr.mxu0 0.0
        %1392 = vmatpush1.msra.mxu0 0.0
        %1393 = vmatprep.subr.mxu0 0.0
        %1394 = vmatpush1.msra.mxu0 0.0
        %1395 = vmatprep.subr.mxu0 0.0
        %1396 = vmatpush1.msra.mxu0 0.0
        %1397 = vmatprep.subr.mxu0 0.0
        %1398 = vmatpush1.msra.mxu0 0.0
        %1399 = vmatprep.subr.mxu0 0.0
        %1400 = vmatpush1.msra.mxu0 0.0
        %1401 = vmatprep.subr.mxu0 0.0
        %1402 = vmatpush1.msra.mxu0 0.0
        %1403 = vmatprep.subr.mxu0 0.0
        %1404 = vmatpush1.msra.mxu0 0.0
        %1405 = vmatprep.subr.mxu0 0.0
        %1406 = vmatpush1.msra.mxu0 0.0
        %1407 = vmatprep.subr.mxu0 0.0
        %1408 = vmatpush1.msra.mxu0 0.0
        %1409 = vmatprep.subr.mxu0 0.0
        %1410 = vmatpush1.msra.mxu0 0.0
        %1411 = vmatprep.subr.mxu0 0.0
        %1412 = vmatpush1.msra.mxu0 0.0
        %1413 = vmatprep.subr.mxu0 0.0
        %1414 = vmatpush1.msra.mxu0 0.0
        %1415 = vmatprep.subr.mxu0 0.0
        %1416 = vmatpush1.msra.mxu0 0.0
        %1417 = vmatprep.subr.mxu0 0.0
        %1418 = vmatpush1.msra.mxu0 0.0
        %1419 = vmatprep.subr.mxu0 0.0
        %1420 = vmatpush1.msra.mxu0 0.0
        %1421 = vmatprep.subr.mxu0 0.0
        %1422 = vmatpush1.msra.mxu0 0.0
        %1423 = vmatprep.subr.mxu0 0.0
        %1424 = vmatpush1.msra.mxu0 0.0
        %1425 = vmatprep.subr.mxu0 0.0
        %1426 = vmatpush1.msra.mxu0 0.0
        %1427 = vmatprep.subr.mxu0 0.0
        %1428 = vmatpush1.msra.mxu0 0.0
        %1429 = vmatprep.subr.mxu0 0.0
        %1430 = vmatpush1.msra.mxu0 0.0
        %1431 = vmatprep.subr.mxu0 0.0
        %1432 = vmatpush1.msra.mxu0 0.0
        %1433 = vmatprep.subr.mxu0 0.0
        %1434 = vmatpush1.msra.mxu0 0.0
        %1435 = vmatprep.subr.mxu0 0.0
        %1436 = vmatpush1.msra.mxu0 0.0
        %1437 = vmatprep.mubr.f32.mxu0 0.0
        %1438 = vmatmul.mubr.f32.gmra.mrb[0].mxu0 %v1371
        %v1439 = vpop.f32.mrb[0].mxu0
        %v1440 = vadd.f32 %v1368, %v1439
        %v1441 = vpop.f32.mrb[0].mxu0
        %1442 = vdwg.mxu0
        %v1443 = vmul.f32 %v1440, %v1440
        %v1444 = vmul.f32 %v1440, %v1443
        %v1445 = vmul.f32 %v1444, 0.044715
        %v1446 = vadd.f32 %v1440, %v1445
        %v1447 = vmul.f32 %v1446, 0.7978846
        %v1448 = vtanh.pop %v1447
        %v1449 = vadd.f32 %v1448, 1.0
        %v1450 = vmul.f32 %v1449, 0.5
        %v1451 = vmul.f32 %v1440, %v1450
        %v1452 = vld [vmem:[%s6] sm:$0xff]
        %v1453 = vld [vmem:[%s6 + $0x8] sm:$0xff]
        %v1454 = vld [vmem:[%s6 + $0x10] sm:$0xff]
        %v1455 = vld [vmem:[%s6 + $0x18] sm:$0xff]
        %v1456 = vld [vmem:[%s6 + $0x20] sm:$0xff]
        %v1457 = vld [vmem:[%s6 + $0x28] sm:$0xff]
        %v1458 = vld [vmem:[%s6 + $0x30] sm:$0xff]
        %v1459 = vld [vmem:[%s6 + $0x38] sm:$0xff]
        %vm1460 = vcmask 523264
        %v1462 = vsel %vm1460, %v1451, 0
        %1464 = vmatprep.subr.mxu0 0.0
        %1465 = vmatpush1.msra.mxu0 %v1452
        %1466 = vmatprep.subr.mxu0 0.0
        %1467 = vmatpush1.msra.mxu0 %v1453
        %1468 = vmatprep.subr.mxu0 0.0
        %1469 = vmatpush1.msra.mxu0 %v1454
        %1470 = vmatprep.subr.mxu0 0.0
        %1471 = vmatpush1.msra.mxu0 %v1455
        %1472 = vmatprep.subr.mxu0 0.0
        %1473 = vmatpush1.msra.mxu0 %v1456
        %1474 = vmatprep.subr.mxu0 0.0
        %1475 = vmatpush1.msra.mxu0 %v1457
        %1476 = vmatprep.subr.mxu0 0.0
        %1477 = vmatpush1.msra.mxu0 %v1458
        %1478 = vmatprep.subr.mxu0 0.0
        %1479 = vmatpush1.msra.mxu0 %v1459
        %1480 = vmatprep.subr.mxu0 0.0
        %1481 = vmatpush1.msra.mxu0 0.0
        %1482 = vmatprep.subr.mxu0 0.0
        %1483 = vmatpush1.msra.mxu0 0.0
        %1484 = vmatprep.subr.mxu0 0.0
        %1485 = vmatpush1.msra.mxu0 0.0
        %1486 = vmatprep.subr.mxu0 0.0
        %1487 = vmatpush1.msra.mxu0 0.0
        %1488 = vmatprep.subr.mxu0 0.0
        %1489 = vmatpush1.msra.mxu0 0.0
        %1490 = vmatprep.subr.mxu0 0.0
        %1491 = vmatpush1.msra.mxu0 0.0
        %1492 = vmatprep.subr.mxu0 0.0
        %1493 = vmatpush1.msra.mxu0 0.0
        %1494 = vmatprep.subr.mxu0 0.0
        %1495 = vmatpush1.msra.mxu0 0.0
        %1496 = vmatprep.subr.mxu0 0.0
        %1497 = vmatpush1.msra.mxu0 0.0
        %1498 = vmatprep.subr.mxu0 0.0
        %1499 = vmatpush1.msra.mxu0 0.0
        %1500 = vmatprep.subr.mxu0 0.0
        %1501 = vmatpush1.msra.mxu0 0.0
        %1502 = vmatprep.subr.mxu0 0.0
        %1503 = vmatpush1.msra.mxu0 0.0
        %1504 = vmatprep.subr.mxu0 0.0
        %1505 = vmatpush1.msra.mxu0 0.0
        %1506 = vmatprep.subr.mxu0 0.0
        %1507 = vmatpush1.msra.mxu0 0.0
        %1508 = vmatprep.subr.mxu0 0.0
        %1509 = vmatpush1.msra.mxu0 0.0
        %1510 = vmatprep.subr.mxu0 0.0
        %1511 = vmatpush1.msra.mxu0 0.0
        %1512 = vmatprep.subr.mxu0 0.0
        %1513 = vmatpush1.msra.mxu0 0.0
        %1514 = vmatprep.subr.mxu0 0.0
        %1515 = vmatpush1.msra.mxu0 0.0
        %1516 = vmatprep.subr.mxu0 0.0
        %1517 = vmatpush1.msra.mxu0 0.0
        %1518 = vmatprep.subr.mxu0 0.0
        %1519 = vmatpush1.msra.mxu0 0.0
        %1520 = vmatprep.subr.mxu0 0.0
        %1521 = vmatpush1.msra.mxu0 0.0
        %1522 = vmatprep.subr.mxu0 0.0
        %1523 = vmatpush1.msra.mxu0 0.0
        %1524 = vmatprep.subr.mxu0 0.0
        %1525 = vmatpush1.msra.mxu0 0.0
        %1526 = vmatprep.subr.mxu0 0.0
        %1527 = vmatpush1.msra.mxu0 0.0
        %1528 = vmatprep.mubr.f32.mxu0 0.0
        %1529 = vmatmul.mubr.f32.gmra.mrb[0].mxu0 %v1462
        %v1530 = vpop.f32.mrb[0].mxu0
        %v1531 = vadd.f32 0.0, %v1530
        %v1532 = vpop.f32.mrb[0].mxu0
        %1533 = vdwg.mxu0
        %v1534 = vadd.f32 %v1335, %v1531
        %v1535 = vlaneseq
        %v1536 = vshrl.u32 %v1535, 7
        %v1537 = vsub.s32 0, %v1536
        %v1538 = vrot.slane %v309, %v1537
        %v1539 = vadd.f32 %v1534, %v1538
        %v1540 = vld [vmem:[%s7 + $0x8] sm:$0x1]
        %v1541 = vld [vmem:[%s7 + $0x9] sm:$0x1]
        %v1542 = vld [vmem:[%s7 + $0xa] sm:$0x1]
        %v1543 = vld [vmem:[%s7 + $0xb] sm:$0x1]
        %v1544 = vld [vmem:[%s7 + $0xc] sm:$0x1]
        %v1545 = vld [vmem:[%s7 + $0xd] sm:$0x1]
        %v1546 = vld [vmem:[%s7 + $0xe] sm:$0x1]
        %v1547 = vld [vmem:[%s7 + $0xf] sm:$0x1]
        %v1548 = vsel %vm310, %v1539, 0.0
        %1549 = vadd.xlane.f32.xlu0 %v1548
        %v1550 = vpop.xlane.xlu0 %1549
        %v1551 = vmul.f32 %v1550, %v314
        %v1552 = vsub.f32 %v1539, %v1551
        %v1553 = vmul.f32 %v1552, %v1552
        %v1554 = vsel %vm310, %v1553, 0.0
        %1555 = vadd.xlane.f32.xlu0 %v1554
        %v1556 = vpop.xlane.xlu0 %1555
        %v1557 = vmul.f32 %v1556, %v314
        %v1558 = vadd.f32 %v1557, 1e-05
        %v1559 = vrsqrt.pop %v1558
        %v1560 = vmul.f32 %v1552, %v1559
        %v1561 = vlaneseq
        %v1562 = vshrl.u32 %v1561, 7
        %v1563 = vsub.s32 0, %v1562
        %v1564 = vrot.slane %v1540, %v1563
        %v1565 = vmul.f32 %v1560, %v1564
        %v1566 = vlaneseq
        %v1567 = vshrl.u32 %v1566, 7
        %v1568 = vsub.s32 0, %v1567
        %v1569 = vrot.slane %v1541, %v1568
        %v1570 = vadd.f32 %v1565, %v1569
        %s1571 = scalar_lea.vmem %s1, 192
        %v1572 = vld [vmem:[%s1571] sm:$0xff]
        %v1573 = vld [vmem:[%s1571 + $0x8] sm:$0xff]
        %v1574 = vld [vmem:[%s1571 + $0x10] sm:$0xff]
        %v1575 = vld [vmem:[%s1571 + $0x18] sm:$0xff]
        %s1576 = scalar_lea.vmem %s2, 6
        %v1577 = vld [vmem:[%s1576] sm:$0x1]
        %v1579 = vlaneseq
        %v1580 = vshrl.u32 %v1579, 7
        %v1581 = vsub.s32 0, %v1580
        %v1582 = vrot.slane %v1577, %v1581
        %v1585 = vsel %vm310, %v1570, 0
        %1587 = vmatprep.subr.mxu0 0.0
        %1588 = vmatpush1.msra.mxu0 %v1572
        %1589 = vmatprep.subr.mxu0 0.0
        %1590 = vmatpush1.msra.mxu0 %v1573
        %1591 = vmatprep.subr.mxu0 0.0
        %1592 = vmatpush1.msra.mxu0 %v1574
        %1593 = vmatprep.subr.mxu0 0.0
        %1594 = vmatpush1.msra.mxu0 %v1575
        %1595 = vmatprep.subr.mxu0 0.0
        %1596 = vmatpush1.msra.mxu0 0.0
        %1597 = vmatprep.subr.mxu0 0.0
        %1598 = vmatpush1.msra.mxu0 0.0
        %1599 = vmatprep.subr.mxu0 0.0
        %1600 = vmatpush1.msra.mxu0 0.0
        %1601 = vmatprep.subr.mxu0 0.0
        %1602 = vmatpush1.msra.mxu0 0.0
        %1603 = vmatprep.subr.mxu0 0.0
        %1604 = vmatpush1.msra.mxu0 0.0
        %1605 = vmatprep.subr.mxu0 0.0
        %1606 = vmatpush1.msra.mxu0 0.0
        %1607 = vmatprep.subr.mxu0 0.0
        %1608 = vmatpush1.msra.mxu0 0.0
        %1609 = vmatprep.subr.mxu0 0.0
        %1610 = vmatpush1.msra.mxu0 0.0
        %1611 = vmatprep.subr.mxu0 0.0
        %1612 = vmatpush1.msra.mxu0 0.0
        %1613 = vmatprep.subr.mxu0 0.0
        %1614 = vmatpush1.msra.mxu0 0.0
        %1615 = vmatprep.subr.mxu0 0.0
        %1616 = vmatpush1.msra.mxu0 0.0
        %1617 = vmatprep.subr.mxu0 0.0
        %1618 = vmatpush1.msra.mxu0 0.0
        %1619 = vmatprep.subr.mxu0 0.0
        %1620 = vmatpush1.msra.mxu0 0.0
        %1621 = vmatprep.subr.mxu0 0.0
        %1622 = vmatpush1.msra.mxu0 0.0
        %1623 = vmatprep.subr.mxu0 0.0
        %1624 = vmatpush1.msra.mxu0 0.0
        %1625 = vmatprep.subr.mxu0 0.0
        %1626 = vmatpush1.msra.mxu0 0.0
        %1627 = vmatprep.subr.mxu0 0.0
        %1628 = vmatpush1.msra.mxu0 0.0
        %1629 = vmatprep.subr.mxu0 0.0
        %1630 = vmatpush1.msra.mxu0 0.0
        %1631 = vmatprep.subr.mxu0 0.0
        %1632 = vmatpush1.msra.mxu0 0.0
        %1633 = vmatprep.subr.mxu0 0.0
        %1634 = vmatpush1.msra.mxu0 0.0
        %1635 = vmatprep.subr.mxu0 0.0
        %1636 = vmatpush1.msra.mxu0 0.0
        %1637 = vmatprep.subr.mxu0 0.0
        %1638 = vmatpush1.msra.mxu0 0.0
        %1639 = vmatprep.subr.mxu0 0.0
        %1640 = vmatpush1.msra.mxu0 0.0
        %1641 = vmatprep.subr.mxu0 0.0
        %1642 = vmatpush1.msra.mxu0 0.0
        %1643 = vmatprep.subr.mxu0 0.0
        %1644 = vmatpush1.msra.mxu0 0.0
        %1645 = vmatprep.subr.mxu0 0.0
        %1646 = vmatpush1.msra.mxu0 0.0
        %1647 = vmatprep.subr.mxu0 0.0
        %1648 = vmatpush1.msra.mxu0 0.0
        %1649 = vmatprep.subr.mxu0 0.0
        %1650 = vmatpush1.msra.mxu0 0.0
        %1651 = vmatprep.mubr.f32.mxu0 0.0
        %1652 = vmatmul.mubr.f32.gmra.mrb[0].mxu0 %v1585
        %v1653 = vpop.f32.mrb[0].mxu0
        %v1654 = vadd.f32 %v1582, %v1653
        %v1655 = vpop.f32.mrb[0].mxu0
        %1656 = vdwg.mxu0
        %s1657 = scalar_lea.vmem %s1, 224
        %v1658 = vld [vmem:[%s1657] sm:$0xff]
        %v1659 = vld [vmem:[%s1657 + $0x8] sm:$0xff]
        %v1660 = vld [vmem:[%s1657 + $0x10] sm:$0xff]
        %v1661 = vld [vmem:[%s1657 + $0x18] sm:$0xff]
        %s1662 = scalar_lea.vmem %s2, 7
        %v1663 = vld [vmem:[%s1662] sm:$0x1]
        %v1665 = vlaneseq
        %v1666 = vshrl.u32 %v1665, 7
        %v1667 = vsub.s32 0, %v1666
        %v1668 = vrot.slane %v1663, %v1667
        %1670 = vmatprep.subr.mxu0 0.0
        %1671 = vmatpush1.msra.mxu0 %v1658
        %1672 = vmatprep.subr.mxu0 0.0
        %1673 = vmatpush1.msra.mxu0 %v1659
        %1674 = vmatprep.subr.mxu0 0.0
        %1675 = vmatpush1.msra.mxu0 %v1660
        %1676 = vmatprep.subr.mxu0 0.0
        %1677 = vmatpush1.msra.mxu0 %v1661
        %1678 = vmatprep.subr.mxu0 0.0
        %1679 = vmatpush1.msra.mxu0 0.0
        %1680 = vmatprep.subr.mxu0 0.0
        %1681 = vmatpush1.msra.mxu0 0.0
        %1682 = vmatprep.subr.mxu0 0.0
        %1683 = vmatpush1.msra.mxu0 0.0
        %1684 = vmatprep.subr.mxu0 0.0
        %1685 = vmatpush1.msra.mxu0 0.0
        %1686 = vmatprep.subr.mxu0 0.0
        %1687 = vmatpush1.msra.mxu0 0.0
        %1688 = vmatprep.subr.mxu0 0.0
        %1689 = vmatpush1.msra.mxu0 0.0
        %1690 = vmatprep.subr.mxu0 0.0
        %1691 = vmatpush1.msra.mxu0 0.0
        %1692 = vmatprep.subr.mxu0 0.0
        %1693 = vmatpush1.msra.mxu0 0.0
        %1694 = vmatprep.subr.mxu0 0.0
        %1695 = vmatpush1.msra.mxu0 0.0
        %1696 = vmatprep.subr.mxu0 0.0
        %1697 = vmatpush1.msra.mxu0 0.0
        %1698 = vmatprep.subr.mxu0 0.0
        %1699 = vmatpush1.msra.mxu0 0.0
        %1700 = vmatprep.subr.mxu0 0.0
        %1701 = vmatpush1.msra.mxu0 0.0
        %1702 = vmatprep.subr.mxu0 0.0
        %1703 = vmatpush1.msra.mxu0 0.0
        %1704 = vmatprep.subr.mxu0 0.0
        %1705 = vmatpush1.msra.mxu0 0.0
        %1706 = vmatprep.subr.mxu0 0.0
        %1707 = vmatpush1.msra.mxu0 0.0
        %1708 = vmatprep.subr.mxu0 0.0
        %1709 = vmatpush1.msra.mxu0 0.0
        %1710 = vmatprep.subr.mxu0 0.0
        %1711 = vmatpush1.msra.mxu0 0.0
        %1712 = vmatprep.subr.mxu0 0.0
        %1713 = vmatpush1.msra.mxu0 0.0
        %1714 = vmatprep.subr.mxu0 0.0
        %1715 = vmatpush1.msra.mxu0 0.0
        %1716 = vmatprep.subr.mxu0 0.0
        %1717 = vmatpush1.msra.mxu0 0.0
        %1718 = vmatprep.subr.mxu0 0.0
        %1719 = vmatpush1.msra.mxu0 0.0
        %1720 = vmatprep.subr.mxu0 0.0
        %1721 = vmatpush1.msra.mxu0 0.0
        %1722 = vmatprep.subr.mxu0 0.0
        %1723 = vmatpush1.msra.mxu0 0.0
        %1724 = vmatprep.subr.mxu0 0.0
        %1725 = vmatpush1.msra.mxu0 0.0
        %1726 = vmatprep.subr.mxu0 0.0
        %1727 = vmatpush1.msra.mxu0 0.0
        %1728 = vmatprep.subr.mxu0 0.0
        %1729 = vmatpush1.msra.mxu0 0.0
        %1730 = vmatprep.subr.mxu0 0.0
        %1731 = vmatpush1.msra.mxu0 0.0
        %1732 = vmatprep.subr.mxu0 0.0
        %1733 = vmatpush1.msra.mxu0 0.0
        %1734 = vmatprep.mubr.f32.mxu0 0.0
        %1735 = vmatmul.mubr.f32.gmra.mrb[0].mxu0 %v1585
        %v1736 = vpop.f32.mrb[0].mxu0
        %v1737 = vadd.f32 %v1668, %v1736
        %v1738 = vpop.f32.mrb[0].mxu0
        %1739 = vdwg.mxu0
        %s1740 = scalar_lea.vmem %s1, 256
        %v1741 = vld [vmem:[%s1740] sm:$0xff]
        %v1742 = vld [vmem:[%s1740 + $0x8] sm:$0xff]
        %v1743 = vld [vmem:[%s1740 + $0x10] sm:$0xff]
        %v1744 = vld [vmem:[%s1740 + $0x18] sm:$0xff]
        %s1745 = scalar_lea.vmem %s2, 8
        %v1746 = vld [vmem:[%s1745] sm:$0x1]
        %v1748 = vlaneseq
        %v1749 = vshrl.u32 %v1748, 7
        %v1750 = vsub.s32 0, %v1749
        %v1751 = vrot.slane %v1746, %v1750
        %1753 = vmatprep.subr.mxu0 0.0
        %1754 = vmatpush1.msra.mxu0 %v1741
        %1755 = vmatprep.subr.mxu0 0.0
        %1756 = vmatpush1.msra.mxu0 %v1742
        %1757 = vmatprep.subr.mxu0 0.0
        %1758 = vmatpush1.msra.mxu0 %v1743
        %1759 = vmatprep.subr.mxu0 0.0
        %1760 = vmatpush1.msra.mxu0 %v1744
        %1761 = vmatprep.subr.mxu0 0.0
        %1762 = vmatpush1.msra.mxu0 0.0
        %1763 = vmatprep.subr.mxu0 0.0
        %1764 = vmatpush1.msra.mxu0 0.0
        %1765 = vmatprep.subr.mxu0 0.0
        %1766 = vmatpush1.msra.mxu0 0.0
        %1767 = vmatprep.subr.mxu0 0.0
        %1768 = vmatpush1.msra.mxu0 0.0
        %1769 = vmatprep.subr.mxu0 0.0
        %1770 = vmatpush1.msra.mxu0 0.0
        %1771 = vmatprep.subr.mxu0 0.0
        %1772 = vmatpush1.msra.mxu0 0.0
        %1773 = vmatprep.subr.mxu0 0.0
        %1774 = vmatpush1.msra.mxu0 0.0
        %1775 = vmatprep.subr.mxu0 0.0
        %1776 = vmatpush1.msra.mxu0 0.0
        %1777 = vmatprep.subr.mxu0 0.0
        %1778 = vmatpush1.msra.mxu0 0.0
        %1779 = vmatprep.subr.mxu0 0.0
        %1780 = vmatpush1.msra.mxu0 0.0
        %1781 = vmatprep.subr.mxu0 0.0
        %1782 = vmatpush1.msra.mxu0 0.0
        %1783 = vmatprep.subr.mxu0 0.0
        %1784 = vmatpush1.msra.mxu0 0.0
        %1785 = vmatprep.subr.mxu0 0.0
        %1786 = vmatpush1.msra.mxu0 0.0
        %1787 = vmatprep.subr.mxu0 0.0
        %1788 = vmatpush1.msra.mxu0 0.0
        %1789 = vmatprep.subr.mxu0 0.0
        %1790 = vmatpush1.msra.mxu0 0.0
        %1791 = vmatprep.subr.mxu0 0.0
        %1792 = vmatpush1.msra.mxu0 0.0
        %1793 = vmatprep.subr.mxu0 0.0
        %1794 = vmatpush1.msra.mxu0 0.0
        %1795 = vmatprep.subr.mxu0 0.0
        %1796 = vmatpush1.msra.mxu0 0.0
        %1797 = vmatprep.subr.mxu0 0.0
        %1798 = vmatpush1.msra.mxu0 0.0
        %1799 = vmatprep.subr.mxu0 0.0
        %1800 = vmatpush1.msra.mxu0 0.0
        %1801 = vmatprep.subr.mxu0 0.0
        %1802 = vmatpush1.msra.mxu0 0.0
        %1803 = vmatprep.subr.mxu0 0.0
        %1804 = vmatpush1.msra.mxu0 0.0
        %1805 = vmatprep.subr.mxu0 0.0
        %1806 = vmatpush1.msra.mxu0 0.0
        %1807 = vmatprep.subr.mxu0 0.0
        %1808 = vmatpush1.msra.mxu0 0.0
        %1809 = vmatprep.subr.mxu0 0.0
        %1810 = vmatpush1.msra.mxu0 0.0
        %1811 = vmatprep.subr.mxu0 0.0
        %1812 = vmatpush1.msra.mxu0 0.0
        %1813 = vmatprep.subr.mxu0 0.0
        %1814 = vmatpush1.msra.mxu0 0.0
        %1815 = vmatprep.subr.mxu0 0.0
        %1816 = vmatpush1.msra.mxu0 0.0
        %1817 = vmatprep.mubr.f32.mxu0 0.0
        %1818 = vmatmul.mubr.f32.gmra.mrb[0].mxu0 %v1585
        %v1819 = vpop.f32.mrb[0].mxu0
        %v1820 = vadd.f32 %v1751, %v1819
        %v1821 = vpop.f32.mrb[0].mxu0
        %1822 = vdwg.mxu0
        %v1824 = vsel %vm585, %v1654, 0
        %v1827 = vsel %vm585, %v1737, 0
        %1829 = vmatprep.subr.mxu0 0.0
        %1830 = vmatpush1.xpose.msra.mxu0 %v1827
        %1831 = vmatprep.subr.mxu0 0.0
        %1832 = vmatpush1.xpose.msra.mxu0 0.0
        %1833 = vmatprep.subr.mxu0 0.0
        %1834 = vmatpush1.xpose.msra.mxu0 0.0
        %1835 = vmatprep.subr.mxu0 0.0
        %1836 = vmatpush1.xpose.msra.mxu0 0.0
        %1837 = vmatprep.subr.mxu0 0.0
        %1838 = vmatpush1.xpose.msra.mxu0 0.0
        %1839 = vmatprep.subr.mxu0 0.0
        %1840 = vmatpush1.xpose.msra.mxu0 0.0
        %1841 = vmatprep.subr.mxu0 0.0
        %1842 = vmatpush1.xpose.msra.mxu0 0.0
        %1843 = vmatprep.subr.mxu0 0.0
        %1844 = vmatpush1.xpose.msra.mxu0 0.0
        %1845 = vmatprep.subr.mxu0 0.0
        %1846 = vmatpush1.xpose.msra.mxu0 0.0
        %1847 = vmatprep.subr.mxu0 0.0
        %1848 = vmatpush1.xpose.msra.mxu0 0.0
        %1849 = vmatprep.subr.mxu0 0.0
        %1850 = vmatpush1.xpose.msra.mxu0 0.0
        %1851 = vmatprep.subr.mxu0 0.0
        %1852 = vmatpush1.xpose.msra.mxu0 0.0
        %1853 = vmatprep.subr.mxu0 0.0
        %1854 = vmatpush1.xpose.msra.mxu0 0.0
        %1855 = vmatprep.subr.mxu0 0.0
        %1856 = vmatpush1.xpose.msra.mxu0 0.0
        %1857 = vmatprep.subr.mxu0 0.0
        %1858 = vmatpush1.xpose.msra.mxu0 0.0
        %1859 = vmatprep.subr.mxu0 0.0
        %1860 = vmatpush1.xpose.msra.mxu0 0.0
        %1861 = vmatprep.subr.mxu0 0.0
        %1862 = vmatpush1.xpose.msra.mxu0 0.0
        %1863 = vmatprep.subr.mxu0 0.0
        %1864 = vmatpush1.xpose.msra.mxu0 0.0
        %1865 = vmatprep.subr.mxu0 0.0
        %1866 = vmatpush1.xpose.msra.mxu0 0.0
        %1867 = vmatprep.subr.mxu0 0.0
        %1868 = vmatpush1.xpose.msra.mxu0 0.0
        %1869 = vmatprep.subr.mxu0 0.0
        %1870 = vmatpush1.xpose.msra.mxu0 0.0
        %1871 = vmatprep.subr.mxu0 0.0
        %1872 = vmatpush1.xpose.msra.mxu0 0.0
        %1873 = vmatprep.subr.mxu0 0.0
        %1874 = vmatpush1.xpose.msra.mxu0 0.0
        %1875 = vmatprep.subr.mxu0 0.0
        %1876 = vmatpush1.xpose.msra.mxu0 0.0
        %1877 = vmatprep.subr.mxu0 0.0
        %1878 = vmatpush1.xpose.msra.mxu0 0.0
        %1879 = vmatprep.subr.mxu0 0.0
        %1880 = vmatpush1.xpose.msra.mxu0 0.0
        %1881 = vmatprep.subr.mxu0 0.0
        %1882 = vmatpush1.xpose.msra.mxu0 0.0
        %1883 = vmatprep.subr.mxu0 0.0
        %1884 = vmatpush1.xpose.msra.mxu0 0.0
        %1885 = vmatprep.subr.mxu0 0.0
        %1886 = vmatpush1.xpose.msra.mxu0 0.0
        %1887 = vmatprep.subr.mxu0 0.0
        %1888 = vmatpush1.xpose.msra.mxu0 0.0
        %1889 = vmatprep.subr.mxu0 0.0
        %1890 = vmatpush1.xpose.msra.mxu0 0.0
        %1891 = vmatprep.subr.mxu0 0.0
        %1892 = vmatpush1.xpose.msra.mxu0 0.0
        %1893 = vmatprep.mubr.f32.mxu0 0.0
        %1894 = vmatmul.mubr.f32.gmra.mrb[0].mxu0 %v1824
        %v1895 = vpop.f32.mrb[0].mxu0
        %v1896 = vadd.f32 0.0, %v1895
        %v1897 = vpop.f32.mrb[0].mxu0
        %1898 = vdwg.mxu0
        %v1899 = vsel %vm662, %v1896, -inf
        %1900 = vmax.xlane.f32.xlu0 %v1899
        %v1901 = vpop.xlane.xlu0 %1900
        %v1902 = vsub.f32 %v1896, %v1901
        %v1903 = vmul.f32 %v1902, 1.442695
        %v1904 = vpow.pop %v1903
        %v1905 = vsel %vm662, %v1904, 0.0
        %1906 = vadd.xlane.f32.xlu0 %v1905
        %v1907 = vpop.xlane.xlu0 %1906
        %v1908 = vrcp.pop %v1907
        %v1909 = vmul.f32 %v1904, %v1908
        %v1911 = vsel %vm662, %v1909, 0
        %1913 = vmatprep.subr.mxu0 0.0
        %1914 = vmatpush1.msra.mxu0 %v1820
        %1915 = vmatprep.subr.mxu0 0.0
        %1916 = vmatpush1.msra.mxu0 0.0
        %1917 = vmatprep.subr.mxu0 0.0
        %1918 = vmatpush1.msra.mxu0 0.0
        %1919 = vmatprep.subr.mxu0 0.0
        %1920 = vmatpush1.msra.mxu0 0.0
        %1921 = vmatprep.subr.mxu0 0.0
        %1922 = vmatpush1.msra.mxu0 0.0
        %1923 = vmatprep.subr.mxu0 0.0
        %1924 = vmatpush1.msra.mxu0 0.0
        %1925 = vmatprep.subr.mxu0 0.0
        %1926 = vmatpush1.msra.mxu0 0.0
        %1927 = vmatprep.subr.mxu0 0.0
        %1928 = vmatpush1.msra.mxu0 0.0
        %1929 = vmatprep.subr.mxu0 0.0
        %1930 = vmatpush1.msra.mxu0 0.0
        %1931 = vmatprep.subr.mxu0 0.0
        %1932 = vmatpush1.msra.mxu0 0.0
        %1933 = vmatprep.subr.mxu0 0.0
        %1934 = vmatpush1.msra.mxu0 0.0
        %1935 = vmatprep.subr.mxu0 0.0
        %1936 = vmatpush1.msra.mxu0 0.0
        %1937 = vmatprep.subr.mxu0 0.0
        %1938 = vmatpush1.msra.mxu0 0.0
        %1939 = vmatprep.subr.mxu0 0.0
        %1940 = vmatpush1.msra.mxu0 0.0
        %1941 = vmatprep.subr.mxu0 0.0
        %1942 = vmatpush1.msra.mxu0 0.0
        %1943 = vmatprep.subr.mxu0 0.0
        %1944 = vmatpush1.msra.mxu0 0.0
        %1945 = vmatprep.subr.mxu0 0.0
        %1946 = vmatpush1.msra.mxu0 0.0
        %1947 = vmatprep.subr.mxu0 0.0
        %1948 = vmatpush1.msra.mxu0 0.0
        %1949 = vmatprep.subr.mxu0 0.0
        %1950 = vmatpush1.msra.mxu0 0.0
        %1951 = vmatprep.subr.mxu0 0.0
        %1952 = vmatpush1.msra.mxu0 0.0
        %1953 = vmatprep.subr.mxu0 0.0
        %1954 = vmatpush1.msra.mxu0 0.0
        %1955 = vmatprep.subr.mxu0 0.0
        %1956 = vmatpush1.msra.mxu0 0.0
        %1957 = vmatprep.subr.mxu0 0.0
        %1958 = vmatpush1.msra.mxu0 0.0
        %1959 = vmatprep.subr.mxu0 0.0
        %1960 = vmatpush1.msra.mxu0 0.0
        %1961 = vmatprep.subr.mxu0 0.0
        %1962 = vmatpush1.msra.mxu0 0.0
        %1963 = vmatprep.subr.mxu0 0.0
        %1964 = vmatpush1.msra.mxu0 0.0
        %1965 = vmatprep.subr.mxu0 0.0
        %1966 = vmatpush1.msra.mxu0 0.0
        %1967 = vmatprep.subr.mxu0 0.0
        %1968 = vmatpush1.msra.mxu0 0.0
        %1969 = vmatprep.subr.mxu0 0.0
        %1970 = vmatpush1.msra.mxu0 0.0
        %1971 = vmatprep.subr.mxu0 0.0
        %1972 = vmatpush1.msra.mxu0 0.0
        %1973 = vmatprep.subr.mxu0 0.0
        %1974 = vmatpush1.msra.mxu0 0.0
        %1975 = vmatprep.subr.mxu0 0.0
        %1976 = vmatpush1.msra.mxu0 0.0
        %1977 = vmatprep.mubr.f32.mxu0 0.0
        %1978 = vmatmul.mubr.f32.gmra.mrb[0].mxu0 %v1911
        %v1979 = vpop.f32.mrb[0].mxu0
        %v1980 = vadd.f32 0.0, %v1979
        %v1981 = vpop.f32.mrb[0].mxu0
        %1982 = vdwg.mxu0
        %s1983 = scalar_lea.vmem %s3, 32
        %v1984 = vld [vmem:[%s1983] sm:$0xff]
        %v1985 = vld [vmem:[%s1983 + $0x8] sm:$0xff]
        %s1986 = scalar_lea.vmem %s1, 288
        %v1987 = vld [vmem:[%s1986] sm:$0xff]
        %v1988 = vld [vmem:[%s1986 + $0x8] sm:$0xff]
        %v1989 = vld [vmem:[%s1986 + $0x10] sm:$0xff]
        %v1990 = vld [vmem:[%s1986 + $0x18] sm:$0xff]
        %s1991 = scalar_lea.vmem %s2, 9
        %v1992 = vld [vmem:[%s1991] sm:$0x1]
        %v1994 = vlaneseq
        %v1995 = vshrl.u32 %v1994, 7
        %v1996 = vsub.s32 0, %v1995
        %v1997 = vrot.slane %v1992, %v1996
        %1999 = vmatprep.subr.mxu0 0.0
        %2000 = vmatpush1.msra.mxu0 %v1987
        %2001 = vmatprep.subr.mxu0 0.0
        %2002 = vmatpush1.msra.mxu0 %v1988
        %2003 = vmatprep.subr.mxu0 0.0
        %2004 = vmatpush1.msra.mxu0 %v1989
        %2005 = vmatprep.subr.mxu0 0.0
        %2006 = vmatpush1.msra.mxu0 %v1990
        %2007 = vmatprep.subr.mxu0 0.0
        %2008 = vmatpush1.msra.mxu0 0.0
        %2009 = vmatprep.subr.mxu0 0.0
        %2010 = vmatpush1.msra.mxu0 0.0
        %2011 = vmatprep.subr.mxu0 0.0
        %2012 = vmatpush1.msra.mxu0 0.0
        %2013 = vmatprep.subr.mxu0 0.0
        %2014 = vmatpush1.msra.mxu0 0.0
        %2015 = vmatprep.subr.mxu0 0.0
        %2016 = vmatpush1.msra.mxu0 0.0
        %2017 = vmatprep.subr.mxu0 0.0
        %2018 = vmatpush1.msra.mxu0 0.0
        %2019 = vmatprep.subr.mxu0 0.0
        %2020 = vmatpush1.msra.mxu0 0.0
        %2021 = vmatprep.subr.mxu0 0.0
        %2022 = vmatpush1.msra.mxu0 0.0
        %2023 = vmatprep.subr.mxu0 0.0
        %2024 = vmatpush1.msra.mxu0 0.0
        %2025 = vmatprep.subr.mxu0 0.0
        %2026 = vmatpush1.msra.mxu0 0.0
        %2027 = vmatprep.subr.mxu0 0.0
        %2028 = vmatpush1.msra.mxu0 0.0
        %2029 = vmatprep.subr.mxu0 0.0
        %2030 = vmatpush1.msra.mxu0 0.0
        %2031 = vmatprep.subr.mxu0 0.0
        %2032 = vmatpush1.msra.mxu0 0.0
        %2033 = vmatprep.subr.mxu0 0.0
        %2034 = vmatpush1.msra.mxu0 0.0
        %2035 = vmatprep.subr.mxu0 0.0
        %2036 = vmatpush1.msra.mxu0 0.0
        %2037 = vmatprep.subr.mxu0 0.0
        %2038 = vmatpush1.msra.mxu0 0.0
        %2039 = vmatprep.subr.mxu0 0.0
        %2040 = vmatpush1.msra.mxu0 0.0
        %2041 = vmatprep.subr.mxu0 0.0
        %2042 = vmatpush1.msra.mxu0 0.0
        %2043 = vmatprep.subr.mxu0 0.0
        %2044 = vmatpush1.msra.mxu0 0.0
        %2045 = vmatprep.subr.mxu0 0.0
        %2046 = vmatpush1.msra.mxu0 0.0
        %2047 = vmatprep.subr.mxu0 0.0
        %2048 = vmatpush1.msra.mxu0 0.0
        %2049 = vmatprep.subr.mxu0 0.0
        %2050 = vmatpush1.msra.mxu0 0.0
        %2051 = vmatprep.subr.mxu0 0.0
        %2052 = vmatpush1.msra.mxu0 0.0
        %2053 = vmatprep.subr.mxu0 0.0
        %2054 = vmatpush1.msra.mxu0 0.0
        %2055 = vmatprep.subr.mxu0 0.0
        %2056 = vmatpush1.msra.mxu0 0.0
        %2057 = vmatprep.subr.mxu0 0.0
        %2058 = vmatpush1.msra.mxu0 0.0
        %2059 = vmatprep.subr.mxu0 0.0
        %2060 = vmatpush1.msra.mxu0 0.0
        %2061 = vmatprep.subr.mxu0 0.0
        %2062 = vmatpush1.msra.mxu0 0.0
        %2063 = vmatprep.mubr.f32.mxu0 0.0
        %2064 = vmatmul.mubr.f32.gmra.mrb[0].mxu0 %v1585
        %v2065 = vpop.f32.mrb[0].mxu0
        %v2066 = vadd.f32 %v1997, %v2065
        %v2067 = vpop.f32.mrb[0].mxu0
        %2068 = vdwg.mxu0
        %s2069 = scalar_lea.vmem %s1, 320
        %v2070 = vld [vmem:[%s2069] sm:$0xff]
        %v2071 = vld [vmem:[%s2069 + $0x8] sm:$0xff]
        %v2072 = vld [vmem:[%s2069 + $0x10] sm:$0xff]
        %v2073 = vld [vmem:[%s2069 + $0x18] sm:$0xff]
        %s2074 = scalar_lea.vmem %s2, 10
        %v2075 = vld [vmem:[%s2074] sm:$0x1]
        %v2077 = vlaneseq
        %v2078 = vshrl.u32 %v2077, 7
        %v2079 = vsub.s32 0, %v2078
        %v2080 = vrot.slane %v2075, %v2079
        %2082 = vmatprep.subr.mxu0 0.0
        %2083 = vmatpush1.msra.mxu0 %v2070
        %2084 = vmatprep.subr.mxu0 0.0
        %2085 = vmatpush1.msra.mxu0 %v2071
        %2086 = vmatprep.subr.mxu0 0.0
        %2087 = vmatpush1.msra.mxu0 %v2072
        %2088 = vmatprep.subr.mxu0 0.0
        %2089 = vmatpush1.msra.mxu0 %v2073
        %2090 = vmatprep.subr.mxu0 0.0
        %2091 = vmatpush1.msra.mxu0 0.0
        %2092 = vmatprep.subr.mxu0 0.0
        %2093 = vmatpush1.msra.mxu0 0.0
        %2094 = vmatprep.subr.mxu0 0.0
        %2095 = vmatpush1.msra.mxu0 0.0
        %2096 = vmatprep.subr.mxu0 0.0
        %2097 = vmatpush1.msra.mxu0 0.0
        %2098 = vmatprep.subr.mxu0 0.0
        %2099 = vmatpush1.msra.mxu0 0.0
        %2100 = vmatprep.subr.mxu0 0.0
        %2101 = vmatpush1.msra.mxu0 0.0
        %2102 = vmatprep.subr.mxu0 0.0
        %2103 = vmatpush1.msra.mxu0 0.0
        %2104 = vmatprep.subr.mxu0 0.0
        %2105 = vmatpush1.msra.mxu0 0.0
        %2106 = vmatprep.subr.mxu0 0.0
        %2107 = vmatpush1.msra.mxu0 0.0
        %2108 = vmatprep.subr.mxu0 0.0
        %2109 = vmatpush1.msra.mxu0 0.0
        %2110 = vmatprep.subr.mxu0 0.0
        %2111 = vmatpush1.msra.mxu0 0.0
        %2112 = vmatprep.subr.mxu0 0.0
        %2113 = vmatpush1.msra.mxu0 0.0
        %2114 = vmatprep.subr.mxu0 0.0
        %2115 = vmatpush1.msra.mxu0 0.0
        %2116 = vmatprep.subr.mxu0 0.0
        %2117 = vmatpush1.msra.mxu0 0.0
        %2118 = vmatprep.subr.mxu0 0.0
        %2119 = vmatpush1.msra.mxu0 0.0
        %2120 = vmatprep.subr.mxu0 0.0
        %2121 = vmatpush1.msra.mxu0 0.0
        %2122 = vmatprep.subr.mxu0 0.0
        %2123 = vmatpush1.msra.mxu0 0.0
        %2124 = vmatprep.subr.mxu0 0.0
        %2125 = vmatpush1.msra.mxu0 0.0
        %2126 = vmatprep.subr.mxu0 0.0
        %2127 = vmatpush1.msra.mxu0 0.0
        %2128 = vmatprep.subr.mxu0 0.0
        %2129 = vmatpush1.msra.mxu0 0.0
        %2130 = vmatprep.subr.mxu0 0.0
        %2131 = vmatpush1.msra.mxu0 0.0
        %2132 = vmatprep.subr.mxu0 0.0
        %2133 = vmatpush1.msra.mxu0 0.0
        %2134 = vmatprep.subr.mxu0 0.0
        %2135 = vmatpush1.msra.mxu0 0.0
        %2136 = vmatprep.subr.mxu0 0.0
        %2137 = vmatpush1.msra.mxu0 0.0
        %2138 = vmatprep.subr.mxu0 0.0
        %2139 = vmatpush1.msra.mxu0 0.0
        %2140 = vmatprep.subr.mxu0 0.0
        %2141 = vmatpush1.msra.mxu0 0.0
        %2142 = vmatprep.subr.mxu0 0.0
        %2143 = vmatpush1.msra.mxu0 0.0
        %2144 = vmatprep.subr.mxu0 0.0
        %2145 = vmatpush1.msra.mxu0 0.0
        %2146 = vmatprep.mubr.f32.mxu0 0.0
        %2147 = vmatmul.mubr.f32.gmra.mrb[0].mxu0 %v1585
        %v2148 = vpop.f32.mrb[0].mxu0
        %v2149 = vadd.f32 %v2080, %v2148
        %v2150 = vpop.f32.mrb[0].mxu0
        %2151 = vdwg.mxu0
        %s2152 = scalar_lea.vmem %s1, 352
        %v2153 = vld [vmem:[%s2152] sm:$0xff]
        %v2154 = vld [vmem:[%s2152 + $0x8] sm:$0xff]
        %v2155 = vld [vmem:[%s2152 + $0x10] sm:$0xff]
        %v2156 = vld [vmem:[%s2152 + $0x18] sm:$0xff]
        %s2157 = scalar_lea.vmem %s2, 11
        %v2158 = vld [vmem:[%s2157] sm:$0x1]
        %v2160 = vlaneseq
        %v2161 = vshrl.u32 %v2160, 7
        %v2162 = vsub.s32 0, %v2161
        %v2163 = vrot.slane %v2158, %v2162
        %2165 = vmatprep.subr.mxu0 0.0
        %2166 = vmatpush1.msra.mxu0 %v2153
        %2167 = vmatprep.subr.mxu0 0.0
        %2168 = vmatpush1.msra.mxu0 %v2154
        %2169 = vmatprep.subr.mxu0 0.0
        %2170 = vmatpush1.msra.mxu0 %v2155
        %2171 = vmatprep.subr.mxu0 0.0
        %2172 = vmatpush1.msra.mxu0 %v2156
        %2173 = vmatprep.subr.mxu0 0.0
        %2174 = vmatpush1.msra.mxu0 0.0
        %2175 = vmatprep.subr.mxu0 0.0
        %2176 = vmatpush1.msra.mxu0 0.0
        %2177 = vmatprep.subr.mxu0 0.0
        %2178 = vmatpush1.msra.mxu0 0.0
        %2179 = vmatprep.subr.mxu0 0.0
        %2180 = vmatpush1.msra.mxu0 0.0
        %2181 = vmatprep.subr.mxu0 0.0
        %2182 = vmatpush1.msra.mxu0 0.0
        %2183 = vmatprep.subr.mxu0 0.0
        %2184 = vmatpush1.msra.mxu0 0.0
        %2185 = vmatprep.subr.mxu0 0.0
        %2186 = vmatpush1.msra.mxu0 0.0
        %2187 = vmatprep.subr.mxu0 0.0
        %2188 = vmatpush1.msra.mxu0 0.0
        %2189 = vmatprep.subr.mxu0 0.0
        %2190 = vmatpush1.msra.mxu0 0.0
        %2191 = vmatprep.subr.mxu0 0.0
        %2192 = vmatpush1.msra.mxu0 0.0
        %2193 = vmatprep.subr.mxu0 0.0
        %2194 = vmatpush1.msra.mxu0 0.0
        %2195 = vmatprep.subr.mxu0 0.0
        %2196 = vmatpush1.msra.mxu0 0.0
        %2197 = vmatprep.subr.mxu0 0.0
        %2198 = vmatpush1.msra.mxu0 0.0
        %2199 = vmatprep.subr.mxu0 0.0
        %2200 = vmatpush1.msra.mxu0 0.0
        %2201 = vmatprep.subr.mxu0 0.0
        %2202 = vmatpush1.msra.mxu0 0.0
        %2203 = vmatprep.subr.mxu0 0.0
        %2204 = vmatpush1.msra.mxu0 0.0
        %2205 = vmatprep.subr.mxu0 0.0
        %2206 = vmatpush1.msra.mxu0 0.0
        %2207 = vmatprep.subr.mxu0 0.0
        %2208 = vmatpush1.msra.mxu0 0.0
        %2209 = vmatprep.subr.mxu0 0.0
        %2210 = vmatpush1.msra.mxu0 0.0
        %2211 = vmatprep.subr.mxu0 0.0
        %2212 = vmatpush1.msra.mxu0 0.0
        %2213 = vmatprep.subr.mxu0 0.0
        %2214 = vmatpush1.msra.mxu0 0.0
        %2215 = vmatprep.subr.mxu0 0.0
        %2216 = vmatpush1.msra.mxu0 0.0
        %2217 = vmatprep.subr.mxu0 0.0
        %2218 = vmatpush1.msra.mxu0 0.0
        %2219 = vmatprep.subr.mxu0 0.0
        %2220 = vmatpush1.msra.mxu0 0.0
        %2221 = vmatprep.subr.mxu0 0.0
        %2222 = vmatpush1.msra.mxu0 0.0
        %2223 = vmatprep.subr.mxu0 0.0
        %2224 = vmatpush1.msra.mxu0 0.0
        %2225 = vmatprep.subr.mxu0 0.0
        %2226 = vmatpush1.msra.mxu0 0.0
        %2227 = vmatprep.subr.mxu0 0.0
        %2228 = vmatpush1.msra.mxu0 0.0
        %2229 = vmatprep.mubr.f32.mxu0 0.0
        %2230 = vmatmul.mubr.f32.gmra.mrb[0].mxu0 %v1585
        %v2231 = vpop.f32.mrb[0].mxu0
        %v2232 = vadd.f32 %v2163, %v2231
        %v2233 = vpop.f32.mrb[0].mxu0
        %2234 = vdwg.mxu0
        %v2236 = vsel %vm585, %v2066, 0
        %v2239 = vsel %vm585, %v2149, 0
        %2241 = vmatprep.subr.mxu0 0.0
        %2242 = vmatpush1.xpose.msra.mxu0 %v2239
        %2243 = vmatprep.subr.mxu0 0.0
        %2244 = vmatpush1.xpose.msra.mxu0 0.0
        %2245 = vmatprep.subr.mxu0 0.0
        %2246 = vmatpush1.xpose.msra.mxu0 0.0
        %2247 = vmatprep.subr.mxu0 0.0
        %2248 = vmatpush1.xpose.msra.mxu0 0.0
        %2249 = vmatprep.subr.mxu0 0.0
        %2250 = vmatpush1.xpose.msra.mxu0 0.0
        %2251 = vmatprep.subr.mxu0 0.0
        %2252 = vmatpush1.xpose.msra.mxu0 0.0
        %2253 = vmatprep.subr.mxu0 0.0
        %2254 = vmatpush1.xpose.msra.mxu0 0.0
        %2255 = vmatprep.subr.mxu0 0.0
        %2256 = vmatpush1.xpose.msra.mxu0 0.0
        %2257 = vmatprep.subr.mxu0 0.0
        %2258 = vmatpush1.xpose.msra.mxu0 0.0
        %2259 = vmatprep.subr.mxu0 0.0
        %2260 = vmatpush1.xpose.msra.mxu0 0.0
        %2261 = vmatprep.subr.mxu0 0.0
        %2262 = vmatpush1.xpose.msra.mxu0 0.0
        %2263 = vmatprep.subr.mxu0 0.0
        %2264 = vmatpush1.xpose.msra.mxu0 0.0
        %2265 = vmatprep.subr.mxu0 0.0
        %2266 = vmatpush1.xpose.msra.mxu0 0.0
        %2267 = vmatprep.subr.mxu0 0.0
        %2268 = vmatpush1.xpose.msra.mxu0 0.0
        %2269 = vmatprep.subr.mxu0 0.0
        %2270 = vmatpush1.xpose.msra.mxu0 0.0
        %2271 = vmatprep.subr.mxu0 0.0
        %2272 = vmatpush1.xpose.msra.mxu0 0.0
        %2273 = vmatprep.subr.mxu0 0.0
        %2274 = vmatpush1.xpose.msra.mxu0 0.0
        %2275 = vmatprep.subr.mxu0 0.0
        %2276 = vmatpush1.xpose.msra.mxu0 0.0
        %2277 = vmatprep.subr.mxu0 0.0
        %2278 = vmatpush1.xpose.msra.mxu0 0.0
        %2279 = vmatprep.subr.mxu0 0.0
        %2280 = vmatpush1.xpose.msra.mxu0 0.0
        %2281 = vmatprep.subr.mxu0 0.0
        %2282 = vmatpush1.xpose.msra.mxu0 0.0
        %2283 = vmatprep.subr.mxu0 0.0
        %2284 = vmatpush1.xpose.msra.mxu0 0.0
        %2285 = vmatprep.subr.mxu0 0.0
        %2286 = vmatpush1.xpose.msra.mxu0 0.0
        %2287 = vmatprep.subr.mxu0 0.0
        %2288 = vmatpush1.xpose.msra.mxu0 0.0
        %2289 = vmatprep.subr.mxu0 0.0
        %2290 = vmatpush1.xpose.msra.mxu0 0.0
        %2291 = vmatprep.subr.mxu0 0.0
        %2292 = vmatpush1.xpose.msra.mxu0 0.0
        %2293 = vmatprep.subr.mxu0 0.0
        %2294 = vmatpush1.xpose.msra.mxu0 0.0
        %2295 = vmatprep.subr.mxu0 0.0
        %2296 = vmatpush1.xpose.msra.mxu0 0.0
        %2297 = vmatprep.subr.mxu0 0.0
        %2298 = vmatpush1.xpose.msra.mxu0 0.0
        %2299 = vmatprep.subr.mxu0 0.0
        %2300 = vmatpush1.xpose.msra.mxu0 0.0
        %2301 = vmatprep.subr.mxu0 0.0
        %2302 = vmatpush1.xpose.msra.mxu0 0.0
        %2303 = vmatprep.subr.mxu0 0.0
        %2304 = vmatpush1.xpose.msra.mxu0 0.0
        %2305 = vmatprep.mubr.f32.mxu0 0.0
        %2306 = vmatmul.mubr.f32.gmra.mrb[0].mxu0 %v2236
        %v2307 = vpop.f32.mrb[0].mxu0
        %v2308 = vadd.f32 0.0, %v2307
        %v2309 = vpop.f32.mrb[0].mxu0
        %2310 = vdwg.mxu0
        %v2311 = vsel %vm662, %v2308, -inf
        %2312 = vmax.xlane.f32.xlu0 %v2311
        %v2313 = vpop.xlane.xlu0 %2312
        %v2314 = vsub.f32 %v2308, %v2313
        %v2315 = vmul.f32 %v2314, 1.442695
        %v2316 = vpow.pop %v2315
        %v2317 = vsel %vm662, %v2316, 0.0
        %2318 = vadd.xlane.f32.xlu0 %v2317
        %v2319 = vpop.xlane.xlu0 %2318
        %v2320 = vrcp.pop %v2319
        %v2321 = vmul.f32 %v2316, %v2320
        %v2323 = vsel %vm662, %v2321, 0
        %2325 = vmatprep.subr.mxu0 0.0
        %2326 = vmatpush1.msra.mxu0 %v2232
        %2327 = vmatprep.subr.mxu0 0.0
        %2328 = vmatpush1.msra.mxu0 0.0
        %2329 = vmatprep.subr.mxu0 0.0
        %2330 = vmatpush1.msra.mxu0 0.0
        %2331 = vmatprep.subr.mxu0 0.0
        %2332 = vmatpush1.msra.mxu0 0.0
        %2333 = vmatprep.subr.mxu0 0.0
        %2334 = vmatpush1.msra.mxu0 0.0
        %2335 = vmatprep.subr.mxu0 0.0
        %2336 = vmatpush1.msra.mxu0 0.0
        %2337 = vmatprep.subr.mxu0 0.0
        %2338 = vmatpush1.msra.mxu0 0.0
        %2339 = vmatprep.subr.mxu0 0.0
        %2340 = vmatpush1.msra.mxu0 0.0
        %2341 = vmatprep.subr.mxu0 0.0
        %2342 = vmatpush1.msra.mxu0 0.0
        %2343 = vmatprep.subr.mxu0 0.0
        %2344 = vmatpush1.msra.mxu0 0.0
        %2345 = vmatprep.subr.mxu0 0.0
        %2346 = vmatpush1.msra.mxu0 0.0
        %2347 = vmatprep.subr.mxu0 0.0
        %2348 = vmatpush1.msra.mxu0 0.0
        %2349 = vmatprep.subr.mxu0 0.0
        %2350 = vmatpush1.msra.mxu0 0.0
        %2351 = vmatprep.subr.mxu0 0.0
        %2352 = vmatpush1.msra.mxu0 0.0
        %2353 = vmatprep.subr.mxu0 0.0
        %2354 = vmatpush1.msra.mxu0 0.0
        %2355 = vmatprep.subr.mxu0 0.0
        %2356 = vmatpush1.msra.mxu0 0.0
        %2357 = vmatprep.subr.mxu0 0.0
        %2358 = vmatpush1.msra.mxu0 0.0
        %2359 = vmatprep.subr.mxu0 0.0
        %2360 = vmatpush1.msra.mxu0 0.0
        %2361 = vmatprep.subr.mxu0 0.0
        %2362 = vmatpush1.msra.mxu0 0.0
        %2363 = vmatprep.subr.mxu0 0.0
        %2364 = vmatpush1.msra.mxu0 0.0
        %2365 = vmatprep.subr.mxu0 0.0
        %2366 = vmatpush1.msra.mxu0 0.0
        %2367 = vmatprep.subr.mxu0 0.0
        %2368 = vmatpush1.msra.mxu0 0.0
        %2369 = vmatprep.subr.mxu0 0.0
        %2370 = vmatpush1.msra.mxu0 0.0
        %2371 = vmatprep.subr.mxu0 0.0
        %2372 = vmatpush1.msra.mxu0 0.0
        %2373 = vmatprep.subr.mxu0 0.0
        %2374 = vmatpush1.msra.mxu0 0.0
        %2375 = vmatprep.subr.mxu0 0.0
        %2376 = vmatpush1.msra.mxu0 0.0
        %2377 = vmatprep.subr.mxu0 0.0
        %2378 = vmatpush1.msra.mxu0 0.0
        %2379 = vmatprep.subr.mxu0 0.0
        %2380 = vmatpush1.msra.mxu0 0.0
        %2381 = vmatprep.subr.mxu0 0.0
        %2382 = vmatpush1.msra.mxu0 0.0
        %2383 = vmatprep.subr.mxu0 0.0
        %2384 = vmatpush1.msra.mxu0 0.0
        %2385 = vmatprep.subr.mxu0 0.0
        %2386 = vmatpush1.msra.mxu0 0.0
        %2387 = vmatprep.subr.mxu0 0.0
        %2388 = vmatpush1.msra.mxu0 0.0
        %2389 = vmatprep.mubr.f32.mxu0 0.0
        %2390 = vmatmul.mubr.f32.gmra.mrb[0].mxu0 %v2323
        %v2391 = vpop.f32.mrb[0].mxu0
        %v2392 = vadd.f32 0.0, %v2391
        %v2393 = vpop.f32.mrb[0].mxu0
        %2394 = vdwg.mxu0
        %s2395 = scalar_lea.vmem %s3, 48
        %v2396 = vld [vmem:[%s2395] sm:$0xff]
        %v2397 = vld [vmem:[%s2395 + $0x8] sm:$0xff]
        %v2399 = vsel %vm585, %v2392, 0
        %2401 = vmatprep.subr.mxu0 0.0
        %2402 = vmatpush1.msra.mxu0 %v2396
        %2403 = vmatprep.subr.mxu0 0.0
        %2404 = vmatpush1.msra.mxu0 %v2397
        %2405 = vmatprep.subr.mxu0 0.0
        %2406 = vmatpush1.msra.mxu0 0.0
        %2407 = vmatprep.subr.mxu0 0.0
        %2408 = vmatpush1.msra.mxu0 0.0
        %2409 = vmatprep.subr.mxu0 0.0
        %2410 = vmatpush1.msra.mxu0 0.0
        %2411 = vmatprep.subr.mxu0 0.0
        %2412 = vmatpush1.msra.mxu0 0.0
        %2413 = vmatprep.subr.mxu0 0.0
        %2414 = vmatpush1.msra.mxu0 0.0
        %2415 = vmatprep.subr.mxu0 0.0
        %2416 = vmatpush1.msra.mxu0 0.0
        %2417 = vmatprep.subr.mxu0 0.0
        %2418 = vmatpush1.msra.mxu0 0.0
        %2419 = vmatprep.subr.mxu0 0.0
        %2420 = vmatpush1.msra.mxu0 0.0
        %2421 = vmatprep.subr.mxu0 0.0
        %2422 = vmatpush1.msra.mxu0 0.0
        %2423 = vmatprep.subr.mxu0 0.0
        %2424 = vmatpush1.msra.mxu0 0.0
        %2425 = vmatprep.subr.mxu0 0.0
        %2426 = vmatpush1.msra.mxu0 0.0
        %2427 = vmatprep.subr.mxu0 0.0
        %2428 = vmatpush1.msra.mxu0 0.0
        %2429 = vmatprep.subr.mxu0 0.0
        %2430 = vmatpush1.msra.mxu0 0.0
        %2431 = vmatprep.subr.mxu0 0.0
        %2432 = vmatpush1.msra.mxu0 0.0
        %2433 = vmatprep.subr.mxu0 0.0
        %2434 = vmatpush1.msra.mxu0 0.0
        %2435 = vmatprep.subr.mxu0 0.0
        %2436 = vmatpush1.msra.mxu0 0.0
        %2437 = vmatprep.subr.mxu0 0.0
        %2438 = vmatpush1.msra.mxu0 0.0
        %2439 = vmatprep.subr.mxu0 0.0
        %2440 = vmatpush1.msra.mxu0 0.0
        %2441 = vmatprep.subr.mxu0 0.0
        %2442 = vmatpush1.msra.mxu0 0.0
        %2443 = vmatprep.subr.mxu0 0.0
        %2444 = vmatpush1.msra.mxu0 0.0
        %2445 = vmatprep.subr.mxu0 0.0
        %2446 = vmatpush1.msra.mxu0 0.0
        %2447 = vmatprep.subr.mxu0 0.0
        %2448 = vmatpush1.msra.mxu0 0.0
        %2449 = vmatprep.subr.mxu0 0.0
        %2450 = vmatpush1.msra.mxu0 0.0
        %2451 = vmatprep.subr.mxu0 0.0
        %2452 = vmatpush1.msra.mxu0 0.0
        %2453 = vmatprep.subr.mxu0 0.0
        %2454 = vmatpush1.msra.mxu0 0.0
        %2455 = vmatprep.subr.mxu0 0.0
        %2456 = vmatpush1.msra.mxu0 0.0
        %2457 = vmatprep.subr.mxu0 0.0
        %2458 = vmatpush1.msra.mxu0 0.0
        %2459 = vmatprep.subr.mxu0 0.0
        %2460 = vmatpush1.msra.mxu0 0.0
        %2461 = vmatprep.subr.mxu0 0.0
        %2462 = vmatpush1.msra.mxu0 0.0
        %2463 = vmatprep.subr.mxu0 0.0
        %2464 = vmatpush1.msra.mxu0 0.0
        %2465 = vmatprep.mubr.f32.mxu0 0.0
        %2466 = vmatmul.mubr.f32.gmra.mrb[0].mxu0 %v2399
        %v2467 = vpop.f32.mrb[0].mxu0
        %v2468 = vadd.f32 0.0, %v2467
        %v2469 = vpop.f32.mrb[0].mxu0
        %2470 = vdwg.mxu0
        %v2472 = vsel %vm585, %v1980, 0
        %2474 = vmatprep.subr.mxu0 0.0
        %2475 = vmatpush1.msra.mxu0 %v1984
        %2476 = vmatprep.subr.mxu0 0.0
        %2477 = vmatpush1.msra.mxu0 %v1985
        %2478 = vmatprep.subr.mxu0 0.0
        %2479 = vmatpush1.msra.mxu0 0.0
        %2480 = vmatprep.subr.mxu0 0.0
        %2481 = vmatpush1.msra.mxu0 0.0
        %2482 = vmatprep.subr.mxu0 0.0
        %2483 = vmatpush1.msra.mxu0 0.0
        %2484 = vmatprep.subr.mxu0 0.0
        %2485 = vmatpush1.msra.mxu0 0.0
        %2486 = vmatprep.subr.mxu0 0.0
        %2487 = vmatpush1.msra.mxu0 0.0
        %2488 = vmatprep.subr.mxu0 0.0
        %2489 = vmatpush1.msra.mxu0 0.0
        %2490 = vmatprep.subr.mxu0 0.0
        %2491 = vmatpush1.msra.mxu0 0.0
        %2492 = vmatprep.subr.mxu0 0.0
        %2493 = vmatpush1.msra.mxu0 0.0
        %2494 = vmatprep.subr.mxu0 0.0
        %2495 = vmatpush1.msra.mxu0 0.0
        %2496 = vmatprep.subr.mxu0 0.0
        %2497 = vmatpush1.msra.mxu0 0.0
        %2498 = vmatprep.subr.mxu0 0.0
        %2499 = vmatpush1.msra.mxu0 0.0
        %2500 = vmatprep.subr.mxu0 0.0
        %2501 = vmatpush1.msra.mxu0 0.0
        %2502 = vmatprep.subr.mxu0 0.0
        %2503 = vmatpush1.msra.mxu0 0.0
        %2504 = vmatprep.subr.mxu0 0.0
        %2505 = vmatpush1.msra.mxu0 0.0
        %2506 = vmatprep.subr.mxu0 0.0
        %2507 = vmatpush1.msra.mxu0 0.0
        %2508 = vmatprep.subr.mxu0 0.0
        %2509 = vmatpush1.msra.mxu0 0.0
        %2510 = vmatprep.subr.mxu0 0.0
        %2511 = vmatpush1.msra.mxu0 0.0
        %2512 = vmatprep.subr.mxu0 0.0
        %2513 = vmatpush1.msra.mxu0 0.0
        %2514 = vmatprep.subr.mxu0 0.0
        %2515 = vmatpush1.msra.mxu0 0.0
        %2516 = vmatprep.subr.mxu0 0.0
        %2517 = vmatpush1.msra.mxu0 0.0
        %2518 = vmatprep.subr.mxu0 0.0
        %2519 = vmatpush1.msra.mxu0 0.0
        %2520 = vmatprep.subr.mxu0 0.0
        %2521 = vmatpush1.msra.mxu0 0.0
        %2522 = vmatprep.subr.mxu0 0.0
        %2523 = vmatpush1.msra.mxu0 0.0
        %2524 = vmatprep.subr.mxu0 0.0
        %2525 = vmatpush1.msra.mxu0 0.0
        %2526 = vmatprep.subr.mxu0 0.0
        %2527 = vmatpush1.msra.mxu0 0.0
        %2528 = vmatprep.subr.mxu0 0.0
        %2529 = vmatpush1.msra.mxu0 0.0
        %2530 = vmatprep.subr.mxu0 0.0
        %2531 = vmatpush1.msra.mxu0 0.0
        %2532 = vmatprep.subr.mxu0 0.0
        %2533 = vmatpush1.msra.mxu0 0.0
        %2534 = vmatprep.subr.mxu0 0.0
        %2535 = vmatpush1.msra.mxu0 0.0
        %2536 = vmatprep.subr.mxu0 0.0
        %2537 = vmatpush1.msra.mxu0 0.0
        %2538 = vmatprep.mubr.f32.mxu0 0.0
        %2539 = vmatmul.mubr.f32.gmra.mrb[0].mxu0 %v2472
        %v2540 = vpop.f32.mrb[0].mxu0
        %v2541 = vadd.f32 %v2468, %v2540
        %v2542 = vpop.f32.mrb[0].mxu0
        %2543 = vdwg.mxu0
        %v2544 = vlaneseq
        %v2545 = vshrl.u32 %v2544, 7
        %v2546 = vsub.s32 0, %v2545
        %v2547 = vrot.slane %v1546, %v2546
        %v2548 = vadd.f32 %v2541, %v2547
        %v2549 = vsel %vm310, %v2548, 0.0
        %2550 = vadd.xlane.f32.xlu0 %v2549
        %v2551 = vpop.xlane.xlu0 %2550
        %v2552 = vmul.f32 %v2551, %v314
        %v2553 = vsub.f32 %v2548, %v2552
        %v2554 = vmul.f32 %v2553, %v2553
        %v2555 = vsel %vm310, %v2554, 0.0
        %2556 = vadd.xlane.f32.xlu0 %v2555
        %v2557 = vpop.xlane.xlu0 %2556
        %v2558 = vmul.f32 %v2557, %v314
        %v2559 = vadd.f32 %v2558, 1e-05
        %v2560 = vrsqrt.pop %v2559
        %v2561 = vmul.f32 %v2553, %v2560
        %v2562 = vlaneseq
        %v2563 = vshrl.u32 %v2562, 7
        %v2564 = vsub.s32 0, %v2563
        %v2565 = vrot.slane %v1542, %v2564
        %v2566 = vmul.f32 %v2561, %v2565
        %v2567 = vlaneseq
        %v2568 = vshrl.u32 %v2567, 7
        %v2569 = vsub.s32 0, %v2568
        %v2570 = vrot.slane %v1543, %v2569
        %v2571 = vadd.f32 %v2566, %v2570
        %v2572 = vadd.f32 %v1539, %v2571
        %v2573 = vsel %vm310, %v2572, 0.0
        %2574 = vadd.xlane.f32.xlu0 %v2573
        %v2575 = vpop.xlane.xlu0 %2574
        %v2576 = vmul.f32 %v2575, %v314
        %v2577 = vsub.f32 %v2572, %v2576
        %v2578 = vmul.f32 %v2577, %v2577
        %v2579 = vsel %vm310, %v2578, 0.0
        %2580 = vadd.xlane.f32.xlu0 %v2579
        %v2581 = vpop.xlane.xlu0 %2580
        %v2582 = vmul.f32 %v2581, %v314
        %v2583 = vadd.f32 %v2582, 1e-05
        %v2584 = vrsqrt.pop %v2583
        %v2585 = vmul.f32 %v2577, %v2584
        %v2586 = vlaneseq
        %v2587 = vshrl.u32 %v2586, 7
        %v2588 = vsub.s32 0, %v2587
        %v2589 = vrot.slane %v1544, %v2588
        %v2590 = vmul.f32 %v2585, %v2589
        %v2591 = vlaneseq
        %v2592 = vshrl.u32 %v2591, 7
        %v2593 = vsub.s32 0, %v2592
        %v2594 = vrot.slane %v1545, %v2593
        %v2595 = vadd.f32 %v2590, %v2594
        %s2596 = scalar_lea.vmem %s4, 32
        %v2597 = vld [vmem:[%s2596] sm:$0xff]
        %v2598 = vld [vmem:[%s2596 + $0x8] sm:$0xff]
        %v2599 = vld [vmem:[%s2596 + $0x10] sm:$0xff]
        %v2600 = vld [vmem:[%s2596 + $0x18] sm:$0xff]
        %s2601 = scalar_lea.vmem %s5, 1
        %v2602 = vld [vmem:[%s2601] sm:$0x1]
        %v2604 = vlaneseq
        %v2605 = vshrl.u32 %v2604, 7
        %v2606 = vsub.s32 0, %v2605
        %v2607 = vrot.slane %v2602, %v2606
        %v2610 = vsel %vm310, %v2595, 0
        %2612 = vmatprep.subr.mxu0 0.0
        %2613 = vmatpush1.msra.mxu0 %v2597
        %2614 = vmatprep.subr.mxu0 0.0
        %2615 = vmatpush1.msra.mxu0 %v2598
        %2616 = vmatprep.subr.mxu0 0.0
        %2617 = vmatpush1.msra.mxu0 %v2599
        %2618 = vmatprep.subr.mxu0 0.0
        %2619 = vmatpush1.msra.mxu0 %v2600
        %2620 = vmatprep.subr.mxu0 0.0
        %2621 = vmatpush1.msra.mxu0 0.0
        %2622 = vmatprep.subr.mxu0 0.0
        %2623 = vmatpush1.msra.mxu0 0.0
        %2624 = vmatprep.subr.mxu0 0.0
        %2625 = vmatpush1.msra.mxu0 0.0
        %2626 = vmatprep.subr.mxu0 0.0
        %2627 = vmatpush1.msra.mxu0 0.0
        %2628 = vmatprep.subr.mxu0 0.0
        %2629 = vmatpush1.msra.mxu0 0.0
        %2630 = vmatprep.subr.mxu0 0.0
        %2631 = vmatpush1.msra.mxu0 0.0
        %2632 = vmatprep.subr.mxu0 0.0
        %2633 = vmatpush1.msra.mxu0 0.0
        %2634 = vmatprep.subr.mxu0 0.0
        %2635 = vmatpush1.msra.mxu0 0.0
        %2636 = vmatprep.subr.mxu0 0.0
        %2637 = vmatpush1.msra.mxu0 0.0
        %2638 = vmatprep.subr.mxu0 0.0
        %2639 = vmatpush1.msra.mxu0 0.0
        %2640 = vmatprep.subr.mxu0 0.0
        %2641 = vmatpush1.msra.mxu0 0.0
        %2642 = vmatprep.subr.mxu0 0.0
        %2643 = vmatpush1.msra.mxu0 0.0
        %2644 = vmatprep.subr.mxu0 0.0
        %2645 = vmatpush1.msra.mxu0 0.0
        %2646 = vmatprep.subr.mxu0 0.0
        %2647 = vmatpush1.msra.mxu0 0.0
        %2648 = vmatprep.subr.mxu0 0.0
        %2649 = vmatpush1.msra.mxu0 0.0
        %2650 = vmatprep.subr.mxu0 0.0
        %2651 = vmatpush1.msra.mxu0 0.0
        %2652 = vmatprep.subr.mxu0 0.0
        %2653 = vmatpush1.msra.mxu0 0.0
        %2654 = vmatprep.subr.mxu0 0.0
        %2655 = vmatpush1.msra.mxu0 0.0
        %2656 = vmatprep.subr.mxu0 0.0
        %2657 = vmatpush1.msra.mxu0 0.0
        %2658 = vmatprep.subr.mxu0 0.0
        %2659 = vmatpush1.msra.mxu0 0.0
        %2660 = vmatprep.subr.mxu0 0.0
        %2661 = vmatpush1.msra.mxu0 0.0
        %2662 = vmatprep.subr.mxu0 0.0
        %2663 = vmatpush1.msra.mxu0 0.0
        %2664 = vmatprep.subr.mxu0 0.0
        %2665 = vmatpush1.msra.mxu0 0.0
        %2666 = vmatprep.subr.mxu0 0.0
        %2667 = vmatpush1.msra.mxu0 0.0
        %2668 = vmatprep.subr.mxu0 0.0
        %2669 = vmatpush1.msra.mxu0 0.0
        %2670 = vmatprep.subr.mxu0 0.0
        %2671 = vmatpush1.msra.mxu0 0.0
        %2672 = vmatprep.subr.mxu0 0.0
        %2673 = vmatpush1.msra.mxu0 0.0
        %2674 = vmatprep.subr.mxu0 0.0
        %2675 = vmatpush1.msra.mxu0 0.0
        %2676 = vmatprep.mubr.f32.mxu0 0.0
        %2677 = vmatmul.mubr.f32.gmra.mrb[0].mxu0 %v2610
        %v2678 = vpop.f32.mrb[0].mxu0
        %v2679 = vadd.f32 %v2607, %v2678
        %v2680 = vpop.f32.mrb[0].mxu0
        %2681 = vdwg.mxu0
        %v2682 = vmul.f32 %v2679, %v2679
        %v2683 = vmul.f32 %v2679, %v2682
        %v2684 = vmul.f32 %v2683, 0.044715
        %v2685 = vadd.f32 %v2679, %v2684
        %v2686 = vmul.f32 %v2685, 0.7978846
        %v2687 = vtanh.pop %v2686
        %v2688 = vadd.f32 %v2687, 1.0
        %v2689 = vmul.f32 %v2688, 0.5
        %v2690 = vmul.f32 %v2679, %v2689
        %s2691 = scalar_lea.vmem %s6, 64
        %v2692 = vld [vmem:[%s2691] sm:$0xff]
        %v2693 = vld [vmem:[%s2691 + $0x8] sm:$0xff]
        %v2694 = vld [vmem:[%s2691 + $0x10] sm:$0xff]
        %v2695 = vld [vmem:[%s2691 + $0x18] sm:$0xff]
        %v2696 = vld [vmem:[%s2691 + $0x20] sm:$0xff]
        %v2697 = vld [vmem:[%s2691 + $0x28] sm:$0xff]
        %v2698 = vld [vmem:[%s2691 + $0x30] sm:$0xff]
        %v2699 = vld [vmem:[%s2691 + $0x38] sm:$0xff]
        %v2701 = vsel %vm1460, %v2690, 0
        %2703 = vmatprep.subr.mxu0 0.0
        %2704 = vmatpush1.msra.mxu0 %v2692
        %2705 = vmatprep.subr.mxu0 0.0
        %2706 = vmatpush1.msra.mxu0 %v2693
        %2707 = vmatprep.subr.mxu0 0.0
        %2708 = vmatpush1.msra.mxu0 %v2694
        %2709 = vmatprep.subr.mxu0 0.0
        %2710 = vmatpush1.msra.mxu0 %v2695
        %2711 = vmatprep.subr.mxu0 0.0
        %2712 = vmatpush1.msra.mxu0 %v2696
        %2713 = vmatprep.subr.mxu0 0.0
        %2714 = vmatpush1.msra.mxu0 %v2697
        %2715 = vmatprep.subr.mxu0 0.0
        %2716 = vmatpush1.msra.mxu0 %v2698
        %2717 = vmatprep.subr.mxu0 0.0
        %2718 = vmatpush1.msra.mxu0 %v2699
        %2719 = vmatprep.subr.mxu0 0.0
        %2720 = vmatpush1.msra.mxu0 0.0
        %2721 = vmatprep.subr.mxu0 0.0
        %2722 = vmatpush1.msra.mxu0 0.0
        %2723 = vmatprep.subr.mxu0 0.0
        %2724 = vmatpush1.msra.mxu0 0.0
        %2725 = vmatprep.subr.mxu0 0.0
        %2726 = vmatpush1.msra.mxu0 0.0
        %2727 = vmatprep.subr.mxu0 0.0
        %2728 = vmatpush1.msra.mxu0 0.0
        %2729 = vmatprep.subr.mxu0 0.0
        %2730 = vmatpush1.msra.mxu0 0.0
        %2731 = vmatprep.subr.mxu0 0.0
        %2732 = vmatpush1.msra.mxu0 0.0
        %2733 = vmatprep.subr.mxu0 0.0
        %2734 = vmatpush1.msra.mxu0 0.0
        %2735 = vmatprep.subr.mxu0 0.0
        %2736 = vmatpush1.msra.mxu0 0.0
        %2737 = vmatprep.subr.mxu0 0.0
        %2738 = vmatpush1.msra.mxu0 0.0
        %2739 = vmatprep.subr.mxu0 0.0
        %2740 = vmatpush1.msra.mxu0 0.0
        %2741 = vmatprep.subr.mxu0 0.0
        %2742 = vmatpush1.msra.mxu0 0.0
        %2743 = vmatprep.subr.mxu0 0.0
        %2744 = vmatpush1.msra.mxu0 0.0
        %2745 = vmatprep.subr.mxu0 0.0
        %2746 = vmatpush1.msra.mxu0 0.0
        %2747 = vmatprep.subr.mxu0 0.0
        %2748 = vmatpush1.msra.mxu0 0.0
        %2749 = vmatprep.subr.mxu0 0.0
        %2750 = vmatpush1.msra.mxu0 0.0
        %2751 = vmatprep.subr.mxu0 0.0
        %2752 = vmatpush1.msra.mxu0 0.0
        %2753 = vmatprep.subr.mxu0 0.0
        %2754 = vmatpush1.msra.mxu0 0.0
        %2755 = vmatprep.subr.mxu0 0.0
        %2756 = vmatpush1.msra.mxu0 0.0
        %2757 = vmatprep.subr.mxu0 0.0
        %2758 = vmatpush1.msra.mxu0 0.0
        %2759 = vmatprep.subr.mxu0 0.0
        %2760 = vmatpush1.msra.mxu0 0.0
        %2761 = vmatprep.subr.mxu0 0.0
        %2762 = vmatpush1.msra.mxu0 0.0
        %2763 = vmatprep.subr.mxu0 0.0
        %2764 = vmatpush1.msra.mxu0 0.0
        %2765 = vmatprep.subr.mxu0 0.0
        %2766 = vmatpush1.msra.mxu0 0.0
        %2767 = vmatprep.mubr.f32.mxu0 0.0
        %2768 = vmatmul.mubr.f32.gmra.mrb[0].mxu0 %v2701
        %v2769 = vpop.f32.mrb[0].mxu0
        %v2770 = vadd.f32 0.0, %v2769
        %v2771 = vpop.f32.mrb[0].mxu0
        %2772 = vdwg.mxu0
        %v2773 = vadd.f32 %v2572, %v2770
        %v2774 = vlaneseq
        %v2775 = vshrl.u32 %v2774, 7
        %v2776 = vsub.s32 0, %v2775
        %v2777 = vrot.slane %v1547, %v2776
        %v2778 = vadd.f32 %v2773, %v2777
        %v2779 = vld [vmem:[%s7 + $0x10] sm:$0x1]
        %v2780 = vld [vmem:[%s7 + $0x11] sm:$0x1]
        %v2781 = vld [vmem:[%s7 + $0x12] sm:$0x1]
        %v2782 = vld [vmem:[%s7 + $0x13] sm:$0x1]
        %v2783 = vld [vmem:[%s7 + $0x14] sm:$0x1]
        %v2784 = vld [vmem:[%s7 + $0x15] sm:$0x1]
        %v2785 = vld [vmem:[%s7 + $0x16] sm:$0x1]
        %v2786 = vld [vmem:[%s7 + $0x17] sm:$0x1]
        %v2787 = vsel %vm310, %v2778, 0.0
        %2788 = vadd.xlane.f32.xlu0 %v2787
        %v2789 = vpop.xlane.xlu0 %2788
        %v2790 = vmul.f32 %v2789, %v314
        %v2791 = vsub.f32 %v2778, %v2790
        %v2792 = vmul.f32 %v2791, %v2791
        %v2793 = vsel %vm310, %v2792, 0.0
        %2794 = vadd.xlane.f32.xlu0 %v2793
        %v2795 = vpop.xlane.xlu0 %2794
        %v2796 = vmul.f32 %v2795, %v314
        %v2797 = vadd.f32 %v2796, 1e-05
        %v2798 = vrsqrt.pop %v2797
        %v2799 = vmul.f32 %v2791, %v2798
        %v2800 = vlaneseq
        %v2801 = vshrl.u32 %v2800, 7
        %v2802 = vsub.s32 0, %v2801
        %v2803 = vrot.slane %v2779, %v2802
        %v2804 = vmul.f32 %v2799, %v2803
        %v2805 = vlaneseq
        %v2806 = vshrl.u32 %v2805, 7
        %v2807 = vsub.s32 0, %v2806
        %v2808 = vrot.slane %v2780, %v2807
        %v2809 = vadd.f32 %v2804, %v2808
        %s2810 = scalar_lea.vmem %s1, 384
        %v2811 = vld [vmem:[%s2810] sm:$0xff]
        %v2812 = vld [vmem:[%s2810 + $0x8] sm:$0xff]
        %v2813 = vld [vmem:[%s2810 + $0x10] sm:$0xff]
        %v2814 = vld [vmem:[%s2810 + $0x18] sm:$0xff]
        %s2815 = scalar_lea.vmem %s2, 12
        %v2816 = vld [vmem:[%s2815] sm:$0x1]
        %v2818 = vlaneseq
        %v2819 = vshrl.u32 %v2818, 7
        %v2820 = vsub.s32 0, %v2819
        %v2821 = vrot.slane %v2816, %v2820
        %v2824 = vsel %vm310, %v2809, 0
        %2826 = vmatprep.subr.mxu0 0.0
        %2827 = vmatpush1.msra.mxu0 %v2811
        %2828 = vmatprep.subr.mxu0 0.0
        %2829 = vmatpush1.msra.mxu0 %v2812
        %2830 = vmatprep.subr.mxu0 0.0
        %2831 = vmatpush1.msra.mxu0 %v2813
        %2832 = vmatprep.subr.mxu0 0.0
        %2833 = vmatpush1.msra.mxu0 %v2814
        %2834 = vmatprep.subr.mxu0 0.0
        %2835 = vmatpush1.msra.mxu0 0.0
        %2836 = vmatprep.subr.mxu0 0.0
        %2837 = vmatpush1.msra.mxu0 0.0
        %2838 = vmatprep.subr.mxu0 0.0
        %2839 = vmatpush1.msra.mxu0 0.0
        %2840 = vmatprep.subr.mxu0 0.0
        %2841 = vmatpush1.msra.mxu0 0.0
        %2842 = vmatprep.subr.mxu0 0.0
        %2843 = vmatpush1.msra.mxu0 0.0
        %2844 = vmatprep.subr.mxu0 0.0
        %2845 = vmatpush1.msra.mxu0 0.0
        %2846 = vmatprep.subr.mxu0 0.0
        %2847 = vmatpush1.msra.mxu0 0.0
        %2848 = vmatprep.subr.mxu0 0.0
        %2849 = vmatpush1.msra.mxu0 0.0
        %2850 = vmatprep.subr.mxu0 0.0
        %2851 = vmatpush1.msra.mxu0 0.0
        %2852 = vmatprep.subr.mxu0 0.0
        %2853 = vmatpush1.msra.mxu0 0.0
        %2854 = vmatprep.subr.mxu0 0.0
        %2855 = vmatpush1.msra.mxu0 0.0
        %2856 = vmatprep.subr.mxu0 0.0
        %2857 = vmatpush1.msra.mxu0 0.0
        %2858 = vmatprep.subr.mxu0 0.0
        %2859 = vmatpush1.msra.mxu0 0.0
        %2860 = vmatprep.subr.mxu0 0.0
        %2861 = vmatpush1.msra.mxu0 0.0
        %2862 = vmatprep.subr.mxu0 0.0
        %2863 = vmatpush1.msra.mxu0 0.0
        %2864 = vmatprep.subr.mxu0 0.0
        %2865 = vmatpush1.msra.mxu0 0.0
        %2866 = vmatprep.subr.mxu0 0.0
        %2867 = vmatpush1.msra.mxu0 0.0
        %2868 = vmatprep.subr.mxu0 0.0
        %2869 = vmatpush1.msra.mxu0 0.0
        %2870 = vmatprep.subr.mxu0 0.0
        %2871 = vmatpush1.msra.mxu0 0.0
        %2872 = vmatprep.subr.mxu0 0.0
        %2873 = vmatpush1.msra.mxu0 0.0
        %2874 = vmatprep.subr.mxu0 0.0
        %2875 = vmatpush1.msra.mxu0 0.0
        %2876 = vmatprep.subr.mxu0 0.0
        %2877 = vmatpush1.msra.mxu0 0.0
        %2878 = vmatprep.subr.mxu0 0.0
        %2879 = vmatpush1.msra.mxu0 0.0
        %2880 = vmatprep.subr.mxu0 0.0
        %2881 = vmatpush1.msra.mxu0 0.0
        %2882 = vmatprep.subr.mxu0 0.0
        %2883 = vmatpush1.msra.mxu0 0.0
        %2884 = vmatprep.subr.mxu0 0.0
        %2885 = vmatpush1.msra.mxu0 0.0
        %2886 = vmatprep.subr.mxu0 0.0
        %2887 = vmatpush1.msra.mxu0 0.0
        %2888 = vmatprep.subr.mxu0 0.0
        %2889 = vmatpush1.msra.mxu0 0.0
        %2890 = vmatprep.mubr.f32.mxu0 0.0
        %2891 = vmatmul.mubr.f32.gmra.mrb[0].mxu0 %v2824
        %v2892 = vpop.f32.mrb[0].mxu0
        %v2893 = vadd.f32 %v2821, %v2892
        %v2894 = vpop.f32.mrb[0].mxu0
        %2895 = vdwg.mxu0
        %s2896 = scalar_lea.vmem %s1, 416
        %v2897 = vld [vmem:[%s2896] sm:$0xff]
        %v2898 = vld [vmem:[%s2896 + $0x8] sm:$0xff]
        %v2899 = vld [vmem:[%s2896 + $0x10] sm:$0xff]
        %v2900 = vld [vmem:[%s2896 + $0x18] sm:$0xff]
        %s2901 = scalar_lea.vmem %s2, 13
        %v2902 = vld [vmem:[%s2901] sm:$0x1]
        %v2904 = vlaneseq
        %v2905 = vshrl.u32 %v2904, 7
        %v2906 = vsub.s32 0, %v2905
        %v2907 = vrot.slane %v2902, %v2906
        %2909 = vmatprep.subr.mxu0 0.0
        %2910 = vmatpush1.msra.mxu0 %v2897
        %2911 = vmatprep.subr.mxu0 0.0
        %2912 = vmatpush1.msra.mxu0 %v2898
        %2913 = vmatprep.subr.mxu0 0.0
        %2914 = vmatpush1.msra.mxu0 %v2899
        %2915 = vmatprep.subr.mxu0 0.0
        %2916 = vmatpush1.msra.mxu0 %v2900
        %2917 = vmatprep.subr.mxu0 0.0
        %2918 = vmatpush1.msra.mxu0 0.0
        %2919 = vmatprep.subr.mxu0 0.0
        %2920 = vmatpush1.msra.mxu0 0.0
        %2921 = vmatprep.subr.mxu0 0.0
        %2922 = vmatpush1.msra.mxu0 0.0
        %2923 = vmatprep.subr.mxu0 0.0
        %2924 = vmatpush1.msra.mxu0 0.0
        %2925 = vmatprep.subr.mxu0 0.0
        %2926 = vmatpush1.msra.mxu0 0.0
        %2927 = vmatprep.subr.mxu0 0.0
        %2928 = vmatpush1.msra.mxu0 0.0
        %2929 = vmatprep.subr.mxu0 0.0
        %2930 = vmatpush1.msra.mxu0 0.0
        %2931 = vmatprep.subr.mxu0 0.0
        %2932 = vmatpush1.msra.mxu0 0.0
        %2933 = vmatprep.subr.mxu0 0.0
        %2934 = vmatpush1.msra.mxu0 0.0
        %2935 = vmatprep.subr.mxu0 0.0
        %2936 = vmatpush1.msra.mxu0 0.0
        %2937 = vmatprep.subr.mxu0 0.0
        %2938 = vmatpush1.msra.mxu0 0.0
        %2939 = vmatprep.subr.mxu0 0.0
        %2940 = vmatpush1.msra.mxu0 0.0
        %2941 = vmatprep.subr.mxu0 0.0
        %2942 = vmatpush1.msra.mxu0 0.0
        %2943 = vmatprep.subr.mxu0 0.0
        %2944 = vmatpush1.msra.mxu0 0.0
        %2945 = vmatprep.subr.mxu0 0.0
        %2946 = vmatpush1.msra.mxu0 0.0
        %2947 = vmatprep.subr.mxu0 0.0
        %2948 = vmatpush1.msra.mxu0 0.0
        %2949 = vmatprep.subr.mxu0 0.0
        %2950 = vmatpush1.msra.mxu0 0.0
        %2951 = vmatprep.subr.mxu0 0.0
        %2952 = vmatpush1.msra.mxu0 0.0
        %2953 = vmatprep.subr.mxu0 0.0
        %2954 = vmatpush1.msra.mxu0 0.0
        %2955 = vmatprep.subr.mxu0 0.0
        %2956 = vmatpush1.msra.mxu0 0.0
        %2957 = vmatprep.subr.mxu0 0.0
        %2958 = vmatpush1.msra.mxu0 0.0
        %2959 = vmatprep.subr.mxu0 0.0
        %2960 = vmatpush1.msra.mxu0 0.0
        %2961 = vmatprep.subr.mxu0 0.0
        %2962 = vmatpush1.msra.mxu0 0.0
        %2963 = vmatprep.subr.mxu0 0.0
        %2964 = vmatpush1.msra.mxu0 0.0
        %2965 = vmatprep.subr.mxu0 0.0
        %2966 = vmatpush1.msra.mxu0 0.0
        %2967 = vmatprep.subr.mxu0 0.0
        %2968 = vmatpush1.msra.mxu0 0.0
        %2969 = vmatprep.subr.mxu0 0.0
        %2970 = vmatpush1.msra.mxu0 0.0
        %2971 = vmatprep.subr.mxu0 0.0
        %2972 = vmatpush1.msra.mxu0 0.0
        %2973 = vmatprep.mubr.f32.mxu0 0.0
        %2974 = vmatmul.mubr.f32.gmra.mrb[0].mxu0 %v2824
        %v2975 = vpop.f32.mrb[0].mxu0
        %v2976 = vadd.f32 %v2907, %v2975
        %v2977 = vpop.f32.mrb[0].mxu0
        %2978 = vdwg.mxu0
        %s2979 = scalar_lea.vmem %s1, 448
        %v2980 = vld [vmem:[%s2979] sm:$0xff]
        %v2981 = vld [vmem:[%s2979 + $0x8] sm:$0xff]
        %v2982 = vld [vmem:[%s2979 + $0x10] sm:$0xff]
        %v2983 = vld [vmem:[%s2979 + $0x18] sm:$0xff]
        %s2984 = scalar_lea.vmem %s2, 14
        %v2985 = vld [vmem:[%s2984] sm:$0x1]
        %v2987 = vlaneseq
        %v2988 = vshrl.u32 %v2987, 7
        %v2989 = vsub.s32 0, %v2988
        %v2990 = vrot.slane %v2985, %v2989
        %2992 = vmatprep.subr.mxu0 0.0
        %2993 = vmatpush1.msra.mxu0 %v2980
        %2994 = vmatprep.subr.mxu0 0.0
        %2995 = vmatpush1.msra.mxu0 %v2981
        %2996 = vmatprep.subr.mxu0 0.0
        %2997 = vmatpush1.msra.mxu0 %v2982
        %2998 = vmatprep.subr.mxu0 0.0
        %2999 = vmatpush1.msra.mxu0 %v2983
        %3000 = vmatprep.subr.mxu0 0.0
        %3001 = vmatpush1.msra.mxu0 0.0
        %3002 = vmatprep.subr.mxu0 0.0
        %3003 = vmatpush1.msra.mxu0 0.0
        %3004 = vmatprep.subr.mxu0 0.0
        %3005 = vmatpush1.msra.mxu0 0.0
        %3006 = vmatprep.subr.mxu0 0.0
        %3007 = vmatpush1.msra.mxu0 0.0
        %3008 = vmatprep.subr.mxu0 0.0
        %3009 = vmatpush1.msra.mxu0 0.0
        %3010 = vmatprep.subr.mxu0 0.0
        %3011 = vmatpush1.msra.mxu0 0.0
        %3012 = vmatprep.subr.mxu0 0.0
        %3013 = vmatpush1.msra.mxu0 0.0
        %3014 = vmatprep.subr.mxu0 0.0
        %3015 = vmatpush1.msra.mxu0 0.0
        %3016 = vmatprep.subr.mxu0 0.0
        %3017 = vmatpush1.msra.mxu0 0.0
        %3018 = vmatprep.subr.mxu0 0.0
        %3019 = vmatpush1.msra.mxu0 0.0
        %3020 = vmatprep.subr.mxu0 0.0
        %3021 = vmatpush1.msra.mxu0 0.0
        %3022 = vmatprep.subr.mxu0 0.0
        %3023 = vmatpush1.msra.mxu0 0.0
        %3024 = vmatprep.subr.mxu0 0.0
        %3025 = vmatpush1.msra.mxu0 0.0
        %3026 = vmatprep.subr.mxu0 0.0
        %3027 = vmatpush1.msra.mxu0 0.0
        %3028 = vmatprep.subr.mxu0 0.0
        %3029 = vmatpush1.msra.mxu0 0.0
        %3030 = vmatprep.subr.mxu0 0.0
        %3031 = vmatpush1.msra.mxu0 0.0
        %3032 = vmatprep.subr.mxu0 0.0
        %3033 = vmatpush1.msra.mxu0 0.0
        %3034 = vmatprep.subr.mxu0 0.0
        %3035 = vmatpush1.msra.mxu0 0.0
        %3036 = vmatprep.subr.mxu0 0.0
        %3037 = vmatpush1.msra.mxu0 0.0
        %3038 = vmatprep.subr.mxu0 0.0
        %3039 = vmatpush1.msra.mxu0 0.0
        %3040 = vmatprep.subr.mxu0 0.0
        %3041 = vmatpush1.msra.mxu0 0.0
        %3042 = vmatprep.subr.mxu0 0.0
        %3043 = vmatpush1.msra.mxu0 0.0
        %3044 = vmatprep.subr.mxu0 0.0
        %3045 = vmatpush1.msra.mxu0 0.0
        %3046 = vmatprep.subr.mxu0 0.0
        %3047 = vmatpush1.msra.mxu0 0.0
        %3048 = vmatprep.subr.mxu0 0.0
        %3049 = vmatpush1.msra.mxu0 0.0
        %3050 = vmatprep.subr.mxu0 0.0
        %3051 = vmatpush1.msra.mxu0 0.0
        %3052 = vmatprep.subr.mxu0 0.0
        %3053 = vmatpush1.msra.mxu0 0.0
        %3054 = vmatprep.subr.mxu0 0.0
        %3055 = vmatpush1.msra.mxu0 0.0
        %3056 = vmatprep.mubr.f32.mxu0 0.0
        %3057 = vmatmul.mubr.f32.gmra.mrb[0].mxu0 %v2824
        %v3058 = vpop.f32.mrb[0].mxu0
        %v3059 = vadd.f32 %v2990, %v3058
        %v3060 = vpop.f32.mrb[0].mxu0
        %3061 = vdwg.mxu0
        %v3063 = vsel %vm585, %v2893, 0
        %v3066 = vsel %vm585, %v2976, 0
        %3068 = vmatprep.subr.mxu0 0.0
        %3069 = vmatpush1.xpose.msra.mxu0 %v3066
        %3070 = vmatprep.subr.mxu0 0.0
        %3071 = vmatpush1.xpose.msra.mxu0 0.0
        %3072 = vmatprep.subr.mxu0 0.0
        %3073 = vmatpush1.xpose.msra.mxu0 0.0
        %3074 = vmatprep.subr.mxu0 0.0
        %3075 = vmatpush1.xpose.msra.mxu0 0.0
        %3076 = vmatprep.subr.mxu0 0.0
        %3077 = vmatpush1.xpose.msra.mxu0 0.0
        %3078 = vmatprep.subr.mxu0 0.0
        %3079 = vmatpush1.xpose.msra.mxu0 0.0
        %3080 = vmatprep.subr.mxu0 0.0
        %3081 = vmatpush1.xpose.msra.mxu0 0.0
        %3082 = vmatprep.subr.mxu0 0.0
        %3083 = vmatpush1.xpose.msra.mxu0 0.0
        %3084 = vmatprep.subr.mxu0 0.0
        %3085 = vmatpush1.xpose.msra.mxu0 0.0
        %3086 = vmatprep.subr.mxu0 0.0
        %3087 = vmatpush1.xpose.msra.mxu0 0.0
        %3088 = vmatprep.subr.mxu0 0.0
        %3089 = vmatpush1.xpose.msra.mxu0 0.0
        %3090 = vmatprep.subr.mxu0 0.0
        %3091 = vmatpush1.xpose.msra.mxu0 0.0
        %3092 = vmatprep.subr.mxu0 0.0
        %3093 = vmatpush1.xpose.msra.mxu0 0.0
        %3094 = vmatprep.subr.mxu0 0.0
        %3095 = vmatpush1.xpose.msra.mxu0 0.0
        %3096 = vmatprep.subr.mxu0 0.0
        %3097 = vmatpush1.xpose.msra.mxu0 0.0
        %3098 = vmatprep.subr.mxu0 0.0
        %3099 = vmatpush1.xpose.msra.mxu0 0.0
        %3100 = vmatprep.subr.mxu0 0.0
        %3101 = vmatpush1.xpose.msra.mxu0 0.0
        %3102 = vmatprep.subr.mxu0 0.0
        %3103 = vmatpush1.xpose.msra.mxu0 0.0
        %3104 = vmatprep.subr.mxu0 0.0
        %3105 = vmatpush1.xpose.msra.mxu0 0.0
        %3106 = vmatprep.subr.mxu0 0.0
        %3107 = vmatpush1.xpose.msra.mxu0 0.0
        %3108 = vmatprep.subr.mxu0 0.0
        %3109 = vmatpush1.xpose.msra.mxu0 0.0
        %3110 = vmatprep.subr.mxu0 0.0
        %3111 = vmatpush1.xpose.msra.mxu0 0.0
        %3112 = vmatprep.subr.mxu0 0.0
        %3113 = vmatpush1.xpose.msra.mxu0 0.0
        %3114 = vmatprep.subr.mxu0 0.0
        %3115 = vmatpush1.xpose.msra.mxu0 0.0
        %3116 = vmatprep.subr.mxu0 0.0
        %3117 = vmatpush1.xpose.msra.mxu0 0.0
        %3118 = vmatprep.subr.mxu0 0.0
        %3119 = vmatpush1.xpose.msra.mxu0 0.0
        %3120 = vmatprep.subr.mxu0 0.0
        %3121 = vmatpush1.xpose.msra.mxu0 0.0
        %3122 = vmatprep.subr.mxu0 0.0
        %3123 = vmatpush1.xpose.msra.mxu0 0.0
        %3124 = vmatprep.subr.mxu0 0.0
        %3125 = vmatpush1.xpose.msra.mxu0 0.0
        %3126 = vmatprep.subr.mxu0 0.0
        %3127 = vmatpush1.xpose.msra.mxu0 0.0
        %3128 = vmatprep.subr.mxu0 0.0
        %3129 = vmatpush1.xpose.msra.mxu0 0.0
        %3130 = vmatprep.subr.mxu0 0.0
        %3131 = vmatpush1.xpose.msra.mxu0 0.0
        %3132 = vmatprep.mubr.f32.mxu0 0.0
        %3133 = vmatmul.mubr.f32.gmra.mrb[0].mxu0 %v3063
        %v3134 = vpop.f32.mrb[0].mxu0
        %v3135 = vadd.f32 0.0, %v3134
        %v3136 = vpop.f32.mrb[0].mxu0
        %3137 = vdwg.mxu0
        %v3138 = vsel %vm662, %v3135, -inf
        %3139 = vmax.xlane.f32.xlu0 %v3138
        %v3140 = vpop.xlane.xlu0 %3139
        %v3141 = vsub.f32 %v3135, %v3140
        %v3142 = vmul.f32 %v3141, 1.442695
        %v3143 = vpow.pop %v3142
        %v3144 = vsel %vm662, %v3143, 0.0
        %3145 = vadd.xlane.f32.xlu0 %v3144
        %v3146 = vpop.xlane.xlu0 %3145
        %v3147 = vrcp.pop %v3146
        %v3148 = vmul.f32 %v3143, %v3147
        %v3150 = vsel %vm662, %v3148, 0
        %3152 = vmatprep.subr.mxu0 0.0
        %3153 = vmatpush1.msra.mxu0 %v3059
        %3154 = vmatprep.subr.mxu0 0.0
        %3155 = vmatpush1.msra.mxu0 0.0
        %3156 = vmatprep.subr.mxu0 0.0
        %3157 = vmatpush1.msra.mxu0 0.0
        %3158 = vmatprep.subr.mxu0 0.0
        %3159 = vmatpush1.msra.mxu0 0.0
        %3160 = vmatprep.subr.mxu0 0.0
        %3161 = vmatpush1.msra.mxu0 0.0
        %3162 = vmatprep.subr.mxu0 0.0
        %3163 = vmatpush1.msra.mxu0 0.0
        %3164 = vmatprep.subr.mxu0 0.0
        %3165 = vmatpush1.msra.mxu0 0.0
        %3166 = vmatprep.subr.mxu0 0.0
        %3167 = vmatpush1.msra.mxu0 0.0
        %3168 = vmatprep.subr.mxu0 0.0
        %3169 = vmatpush1.msra.mxu0 0.0
        %3170 = vmatprep.subr.mxu0 0.0
        %3171 = vmatpush1.msra.mxu0 0.0
        %3172 = vmatprep.subr.mxu0 0.0
        %3173 = vmatpush1.msra.mxu0 0.0
        %3174 = vmatprep.subr.mxu0 0.0
        %3175 = vmatpush1.msra.mxu0 0.0
        %3176 = vmatprep.subr.mxu0 0.0
        %3177 = vmatpush1.msra.mxu0 0.0
        %3178 = vmatprep.subr.mxu0 0.0
        %3179 = vmatpush1.msra.mxu0 0.0
        %3180 = vmatprep.subr.mxu0 0.0
        %3181 = vmatpush1.msra.mxu0 0.0
        %3182 = vmatprep.subr.mxu0 0.0
        %3183 = vmatpush1.msra.mxu0 0.0
        %3184 = vmatprep.subr.mxu0 0.0
        %3185 = vmatpush1.msra.mxu0 0.0
        %3186 = vmatprep.subr.mxu0 0.0
        %3187 = vmatpush1.msra.mxu0 0.0
        %3188 = vmatprep.subr.mxu0 0.0
        %3189 = vmatpush1.msra.mxu0 0.0
        %3190 = vmatprep.subr.mxu0 0.0
        %3191 = vmatpush1.msra.mxu0 0.0
        %3192 = vmatprep.subr.mxu0 0.0
        %3193 = vmatpush1.msra.mxu0 0.0
        %3194 = vmatprep.subr.mxu0 0.0
        %3195 = vmatpush1.msra.mxu0 0.0
        %3196 = vmatprep.subr.mxu0 0.0
        %3197 = vmatpush1.msra.mxu0 0.0
        %3198 = vmatprep.subr.mxu0 0.0
        %3199 = vmatpush1.msra.mxu0 0.0
        %3200 = vmatprep.subr.mxu0 0.0
        %3201 = vmatpush1.msra.mxu0 0.0
        %3202 = vmatprep.subr.mxu0 0.0
        %3203 = vmatpush1.msra.mxu0 0.0
        %3204 = vmatprep.subr.mxu0 0.0
        %3205 = vmatpush1.msra.mxu0 0.0
        %3206 = vmatprep.subr.mxu0 0.0
        %3207 = vmatpush1.msra.mxu0 0.0
        %3208 = vmatprep.subr.mxu0 0.0
        %3209 = vmatpush1.msra.mxu0 0.0
        %3210 = vmatprep.subr.mxu0 0.0
        %3211 = vmatpush1.msra.mxu0 0.0
        %3212 = vmatprep.subr.mxu0 0.0
        %3213 = vmatpush1.msra.mxu0 0.0
        %3214 = vmatprep.subr.mxu0 0.0
        %3215 = vmatpush1.msra.mxu0 0.0
        %3216 = vmatprep.mubr.f32.mxu0 0.0
        %3217 = vmatmul.mubr.f32.gmra.mrb[0].mxu0 %v3150
        %v3218 = vpop.f32.mrb[0].mxu0
        %v3219 = vadd.f32 0.0, %v3218
        %v3220 = vpop.f32.mrb[0].mxu0
        %3221 = vdwg.mxu0
        %s3222 = scalar_lea.vmem %s3, 64
        %v3223 = vld [vmem:[%s3222] sm:$0xff]
        %v3224 = vld [vmem:[%s3222 + $0x8] sm:$0xff]
        %s3225 = scalar_lea.vmem %s1, 480
        %v3226 = vld [vmem:[%s3225] sm:$0xff]
        %v3227 = vld [vmem:[%s3225 + $0x8] sm:$0xff]
        %v3228 = vld [vmem:[%s3225 + $0x10] sm:$0xff]
        %v3229 = vld [vmem:[%s3225 + $0x18] sm:$0xff]
        %s3230 = scalar_lea.vmem %s2, 15
        %v3231 = vld [vmem:[%s3230] sm:$0x1]
        %v3233 = vlaneseq
        %v3234 = vshrl.u32 %v3233, 7
        %v3235 = vsub.s32 0, %v3234
        %v3236 = vrot.slane %v3231, %v3235
        %3238 = vmatprep.subr.mxu0 0.0
        %3239 = vmatpush1.msra.mxu0 %v3226
        %3240 = vmatprep.subr.mxu0 0.0
        %3241 = vmatpush1.msra.mxu0 %v3227
        %3242 = vmatprep.subr.mxu0 0.0
        %3243 = vmatpush1.msra.mxu0 %v3228
        %3244 = vmatprep.subr.mxu0 0.0
        %3245 = vmatpush1.msra.mxu0 %v3229
        %3246 = vmatprep.subr.mxu0 0.0
        %3247 = vmatpush1.msra.mxu0 0.0
        %3248 = vmatprep.subr.mxu0 0.0
        %3249 = vmatpush1.msra.mxu0 0.0
        %3250 = vmatprep.subr.mxu0 0.0
        %3251 = vmatpush1.msra.mxu0 0.0
        %3252 = vmatprep.subr.mxu0 0.0
        %3253 = vmatpush1.msra.mxu0 0.0
        %3254 = vmatprep.subr.mxu0 0.0
        %3255 = vmatpush1.msra.mxu0 0.0
        %3256 = vmatprep.subr.mxu0 0.0
        %3257 = vmatpush1.msra.mxu0 0.0
        %3258 = vmatprep.subr.mxu0 0.0
        %3259 = vmatpush1.msra.mxu0 0.0
        %3260 = vmatprep.subr.mxu0 0.0
        %3261 = vmatpush1.msra.mxu0 0.0
        %3262 = vmatprep.subr.mxu0 0.0
        %3263 = vmatpush1.msra.mxu0 0.0
        %3264 = vmatprep.subr.mxu0 0.0
        %3265 = vmatpush1.msra.mxu0 0.0
        %3266 = vmatprep.subr.mxu0 0.0
        %3267 = vmatpush1.msra.mxu0 0.0
        %3268 = vmatprep.subr.mxu0 0.0
        %3269 = vmatpush1.msra.mxu0 0.0
        %3270 = vmatprep.subr.mxu0 0.0
        %3271 = vmatpush1.msra.mxu0 0.0
        %3272 = vmatprep.subr.mxu0 0.0
        %3273 = vmatpush1.msra.mxu0 0.0
        %3274 = vmatprep.subr.mxu0 0.0
        %3275 = vmatpush1.msra.mxu0 0.0
        %3276 = vmatprep.subr.mxu0 0.0
        %3277 = vmatpush1.msra.mxu0 0.0
        %3278 = vmatprep.subr.mxu0 0.0
        %3279 = vmatpush1.msra.mxu0 0.0
        %3280 = vmatprep.subr.mxu0 0.0
        %3281 = vmatpush1.msra.mxu0 0.0
        %3282 = vmatprep.subr.mxu0 0.0
        %3283 = vmatpush1.msra.mxu0 0.0
        %3284 = vmatprep.subr.mxu0 0.0
        %3285 = vmatpush1.msra.mxu0 0.0
        %3286 = vmatprep.subr.mxu0 0.0
        %3287 = vmatpush1.msra.mxu0 0.0
        %3288 = vmatprep.subr.mxu0 0.0
        %3289 = vmatpush1.msra.mxu0 0.0
        %3290 = vmatprep.subr.mxu0 0.0
        %3291 = vmatpush1.msra.mxu0 0.0
        %3292 = vmatprep.subr.mxu0 0.0
        %3293 = vmatpush1.msra.mxu0 0.0
        %3294 = vmatprep.subr.mxu0 0.0
        %3295 = vmatpush1.msra.mxu0 0.0
        %3296 = vmatprep.subr.mxu0 0.0
        %3297 = vmatpush1.msra.mxu0 0.0
        %3298 = vmatprep.subr.mxu0 0.0
        %3299 = vmatpush1.msra.mxu0 0.0
        %3300 = vmatprep.subr.mxu0 0.0
        %3301 = vmatpush1.msra.mxu0 0.0
        %3302 = vmatprep.mubr.f32.mxu0 0.0
        %3303 = vmatmul.mubr.f32.gmra.mrb[0].mxu0 %v2824
        %v3304 = vpop.f32.mrb[0].mxu0
        %v3305 = vadd.f32 %v3236, %v3304
        %v3306 = vpop.f32.mrb[0].mxu0
        %3307 = vdwg.mxu0
        %s3308 = scalar_lea.vmem %s1, 512
        %v3309 = vld [vmem:[%s3308] sm:$0xff]
        %v3310 = vld [vmem:[%s3308 + $0x8] sm:$0xff]
        %v3311 = vld [vmem:[%s3308 + $0x10] sm:$0xff]
        %v3312 = vld [vmem:[%s3308 + $0x18] sm:$0xff]
        %s3313 = scalar_lea.vmem %s2, 16
        %v3314 = vld [vmem:[%s3313] sm:$0x1]
        %v3316 = vlaneseq
        %v3317 = vshrl.u32 %v3316, 7
        %v3318 = vsub.s32 0, %v3317
        %v3319 = vrot.slane %v3314, %v3318
        %3321 = vmatprep.subr.mxu0 0.0
        %3322 = vmatpush1.msra.mxu0 %v3309
        %3323 = vmatprep.subr.mxu0 0.0
        %3324 = vmatpush1.msra.mxu0 %v3310
        %3325 = vmatprep.subr.mxu0 0.0
        %3326 = vmatpush1.msra.mxu0 %v3311
        %3327 = vmatprep.subr.mxu0 0.0
        %3328 = vmatpush1.msra.mxu0 %v3312
        %3329 = vmatprep.subr.mxu0 0.0
        %3330 = vmatpush1.msra.mxu0 0.0
        %3331 = vmatprep.subr.mxu0 0.0
        %3332 = vmatpush1.msra.mxu0 0.0
        %3333 = vmatprep.subr.mxu0 0.0
        %3334 = vmatpush1.msra.mxu0 0.0
        %3335 = vmatprep.subr.mxu0 0.0
        %3336 = vmatpush1.msra.mxu0 0.0
        %3337 = vmatprep.subr.mxu0 0.0
        %3338 = vmatpush1.msra.mxu0 0.0
        %3339 = vmatprep.subr.mxu0 0.0
        %3340 = vmatpush1.msra.mxu0 0.0
        %3341 = vmatprep.subr.mxu0 0.0
        %3342 = vmatpush1.msra.mxu0 0.0
        %3343 = vmatprep.subr.mxu0 0.0
        %3344 = vmatpush1.msra.mxu0 0.0
        %3345 = vmatprep.subr.mxu0 0.0
        %3346 = vmatpush1.msra.mxu0 0.0
        %3347 = vmatprep.subr.mxu0 0.0
        %3348 = vmatpush1.msra.mxu0 0.0
        %3349 = vmatprep.subr.mxu0 0.0
        %3350 = vmatpush1.msra.mxu0 0.0
        %3351 = vmatprep.subr.mxu0 0.0
        %3352 = vmatpush1.msra.mxu0 0.0
        %3353 = vmatprep.subr.mxu0 0.0
        %3354 = vmatpush1.msra.mxu0 0.0
        %3355 = vmatprep.subr.mxu0 0.0
        %3356 = vmatpush1.msra.mxu0 0.0
        %3357 = vmatprep.subr.mxu0 0.0
        %3358 = vmatpush1.msra.mxu0 0.0
        %3359 = vmatprep.subr.mxu0 0.0
        %3360 = vmatpush1.msra.mxu0 0.0
        %3361 = vmatprep.subr.mxu0 0.0
        %3362 = vmatpush1.msra.mxu0 0.0
        %3363 = vmatprep.subr.mxu0 0.0
        %3364 = vmatpush1.msra.mxu0 0.0
        %3365 = vmatprep.subr.mxu0 0.0
        %3366 = vmatpush1.msra.mxu0 0.0
        %3367 = vmatprep.subr.mxu0 0.0
        %3368 = vmatpush1.msra.mxu0 0.0
        %3369 = vmatprep.subr.mxu0 0.0
        %3370 = vmatpush1.msra.mxu0 0.0
        %3371 = vmatprep.subr.mxu0 0.0
        %3372 = vmatpush1.msra.mxu0 0.0
        %3373 = vmatprep.subr.mxu0 0.0
        %3374 = vmatpush1.msra.mxu0 0.0
        %3375 = vmatprep.subr.mxu0 0.0
        %3376 = vmatpush1.msra.mxu0 0.0
        %3377 = vmatprep.subr.mxu0 0.0
        %3378 = vmatpush1.msra.mxu0 0.0
        %3379 = vmatprep.subr.mxu0 0.0
        %3380 = vmatpush1.msra.mxu0 0.0
        %3381 = vmatprep.subr.mxu0 0.0
        %3382 = vmatpush1.msra.mxu0 0.0
        %3383 = vmatprep.subr.mxu0 0.0
        %3384 = vmatpush1.msra.mxu0 0.0
        %3385 = vmatprep.mubr.f32.mxu0 0.0
        %3386 = vmatmul.mubr.f32.gmra.mrb[0].mxu0 %v2824
        %v3387 = vpop.f32.mrb[0].mxu0
        %v3388 = vadd.f32 %v3319, %v3387
        %v3389 = vpop.f32.mrb[0].mxu0
        %3390 = vdwg.mxu0
        %s3391 = scalar_lea.vmem %s1, 544
        %v3392 = vld [vmem:[%s3391] sm:$0xff]
        %v3393 = vld [vmem:[%s3391 + $0x8] sm:$0xff]
        %v3394 = vld [vmem:[%s3391 + $0x10] sm:$0xff]
        %v3395 = vld [vmem:[%s3391 + $0x18] sm:$0xff]
        %s3396 = scalar_lea.vmem %s2, 17
        %v3397 = vld [vmem:[%s3396] sm:$0x1]
        %v3399 = vlaneseq
        %v3400 = vshrl.u32 %v3399, 7
        %v3401 = vsub.s32 0, %v3400
        %v3402 = vrot.slane %v3397, %v3401
        %3404 = vmatprep.subr.mxu0 0.0
        %3405 = vmatpush1.msra.mxu0 %v3392
        %3406 = vmatprep.subr.mxu0 0.0
        %3407 = vmatpush1.msra.mxu0 %v3393
        %3408 = vmatprep.subr.mxu0 0.0
        %3409 = vmatpush1.msra.mxu0 %v3394
        %3410 = vmatprep.subr.mxu0 0.0
        %3411 = vmatpush1.msra.mxu0 %v3395
        %3412 = vmatprep.subr.mxu0 0.0
        %3413 = vmatpush1.msra.mxu0 0.0
        %3414 = vmatprep.subr.mxu0 0.0
        %3415 = vmatpush1.msra.mxu0 0.0
        %3416 = vmatprep.subr.mxu0 0.0
        %3417 = vmatpush1.msra.mxu0 0.0
        %3418 = vmatprep.subr.mxu0 0.0
        %3419 = vmatpush1.msra.mxu0 0.0
        %3420 = vmatprep.subr.mxu0 0.0
        %3421 = vmatpush1.msra.mxu0 0.0
        %3422 = vmatprep.subr.mxu0 0.0
        %3423 = vmatpush1.msra.mxu0 0.0
        %3424 = vmatprep.subr.mxu0 0.0
        %3425 = vmatpush1.msra.mxu0 0.0
        %3426 = vmatprep.subr.mxu0 0.0
        %3427 = vmatpush1.msra.mxu0 0.0
        %3428 = vmatprep.subr.mxu0 0.0
        %3429 = vmatpush1.msra.mxu0 0.0
        %3430 = vmatprep.subr.mxu0 0.0
        %3431 = vmatpush1.msra.mxu0 0.0
        %3432 = vmatprep.subr.mxu0 0.0
        %3433 = vmatpush1.msra.mxu0 0.0
        %3434 = vmatprep.subr.mxu0 0.0
        %3435 = vmatpush1.msra.mxu0 0.0
        %3436 = vmatprep.subr.mxu0 0.0
        %3437 = vmatpush1.msra.mxu0 0.0
        %3438 = vmatprep.subr.mxu0 0.0
        %3439 = vmatpush1.msra.mxu0 0.0
        %3440 = vmatprep.subr.mxu0 0.0
        %3441 = vmatpush1.msra.mxu0 0.0
        %3442 = vmatprep.subr.mxu0 0.0
        %3443 = vmatpush1.msra.mxu0 0.0
        %3444 = vmatprep.subr.mxu0 0.0
        %3445 = vmatpush1.msra.mxu0 0.0
        %3446 = vmatprep.subr.mxu0 0.0
        %3447 = vmatpush1.msra.mxu0 0.0
        %3448 = vmatprep.subr.mxu0 0.0
        %3449 = vmatpush1.msra.mxu0 0.0
        %3450 = vmatprep.subr.mxu0 0.0
        %3451 = vmatpush1.msra.mxu0 0.0
        %3452 = vmatprep.subr.mxu0 0.0
        %3453 = vmatpush1.msra.mxu0 0.0
        %3454 = vmatprep.subr.mxu0 0.0
        %3455 = vmatpush1.msra.mxu0 0.0
        %3456 = vmatprep.subr.mxu0 0.0
        %3457 = vmatpush1.msra.mxu0 0.0
        %3458 = vmatprep.subr.mxu0 0.0
        %3459 = vmatpush1.msra.mxu0 0.0
        %3460 = vmatprep.subr.mxu0 0.0
        %3461 = vmatpush1.msra.mxu0 0.0
        %3462 = vmatprep.subr.mxu0 0.0
        %3463 = vmatpush1.msra.mxu0 0.0
        %3464 = vmatprep.subr.mxu0 0.0
        %3465 = vmatpush1.msra.mxu0 0.0
        %3466 = vmatprep.subr.mxu0 0.0
        %3467 = vmatpush1.msra.mxu0 0.0
        %3468 = vmatprep.mubr.f32.mxu0 0.0
        %3469 = vmatmul.mubr.f32.gmra.mrb[0].mxu0 %v2824
        %v3470 = vpop.f32.mrb[0].mxu0
        %v3471 = vadd.f32 %v3402, %v3470
        %v3472 = vpop.f32.mrb[0].mxu0
        %3473 = vdwg.mxu0
        %v3475 = vsel %vm585, %v3305, 0
        %v3478 = vsel %vm585, %v3388, 0
        %3480 = vmatprep.subr.mxu0 0.0
        %3481 = vmatpush1.xpose.msra.mxu0 %v3478
        %3482 = vmatprep.subr.mxu0 0.0
        %3483 = vmatpush1.xpose.msra.mxu0 0.0
        %3484 = vmatprep.subr.mxu0 0.0
        %3485 = vmatpush1.xpose.msra.mxu0 0.0
        %3486 = vmatprep.subr.mxu0 0.0
        %3487 = vmatpush1.xpose.msra.mxu0 0.0
        %3488 = vmatprep.subr.mxu0 0.0
        %3489 = vmatpush1.xpose.msra.mxu0 0.0
        %3490 = vmatprep.subr.mxu0 0.0
        %3491 = vmatpush1.xpose.msra.mxu0 0.0
        %3492 = vmatprep.subr.mxu0 0.0
        %3493 = vmatpush1.xpose.msra.mxu0 0.0
        %3494 = vmatprep.subr.mxu0 0.0
        %3495 = vmatpush1.xpose.msra.mxu0 0.0
        %3496 = vmatprep.subr.mxu0 0.0
        %3497 = vmatpush1.xpose.msra.mxu0 0.0
        %3498 = vmatprep.subr.mxu0 0.0
        %3499 = vmatpush1.xpose.msra.mxu0 0.0
        %3500 = vmatprep.subr.mxu0 0.0
        %3501 = vmatpush1.xpose.msra.mxu0 0.0
        %3502 = vmatprep.subr.mxu0 0.0
        %3503 = vmatpush1.xpose.msra.mxu0 0.0
        %3504 = vmatprep.subr.mxu0 0.0
        %3505 = vmatpush1.xpose.msra.mxu0 0.0
        %3506 = vmatprep.subr.mxu0 0.0
        %3507 = vmatpush1.xpose.msra.mxu0 0.0
        %3508 = vmatprep.subr.mxu0 0.0
        %3509 = vmatpush1.xpose.msra.mxu0 0.0
        %3510 = vmatprep.subr.mxu0 0.0
        %3511 = vmatpush1.xpose.msra.mxu0 0.0
        %3512 = vmatprep.subr.mxu0 0.0
        %3513 = vmatpush1.xpose.msra.mxu0 0.0
        %3514 = vmatprep.subr.mxu0 0.0
        %3515 = vmatpush1.xpose.msra.mxu0 0.0
        %3516 = vmatprep.subr.mxu0 0.0
        %3517 = vmatpush1.xpose.msra.mxu0 0.0
        %3518 = vmatprep.subr.mxu0 0.0
        %3519 = vmatpush1.xpose.msra.mxu0 0.0
        %3520 = vmatprep.subr.mxu0 0.0
        %3521 = vmatpush1.xpose.msra.mxu0 0.0
        %3522 = vmatprep.subr.mxu0 0.0
        %3523 = vmatpush1.xpose.msra.mxu0 0.0
        %3524 = vmatprep.subr.mxu0 0.0
        %3525 = vmatpush1.xpose.msra.mxu0 0.0
        %3526 = vmatprep.subr.mxu0 0.0
        %3527 = vmatpush1.xpose.msra.mxu0 0.0
        %3528 = vmatprep.subr.mxu0 0.0
        %3529 = vmatpush1.xpose.msra.mxu0 0.0
        %3530 = vmatprep.subr.mxu0 0.0
        %3531 = vmatpush1.xpose.msra.mxu0 0.0
        %3532 = vmatprep.subr.mxu0 0.0
        %3533 = vmatpush1.xpose.msra.mxu0 0.0
        %3534 = vmatprep.subr.mxu0 0.0
        %3535 = vmatpush1.xpose.msra.mxu0 0.0
        %3536 = vmatprep.subr.mxu0 0.0
        %3537 = vmatpush1.xpose.msra.mxu0 0.0
        %3538 = vmatprep.subr.mxu0 0.0
        %3539 = vmatpush1.xpose.msra.mxu0 0.0
        %3540 = vmatprep.subr.mxu0 0.0
        %3541 = vmatpush1.xpose.msra.mxu0 0.0
        %3542 = vmatprep.subr.mxu0 0.0
        %3543 = vmatpush1.xpose.msra.mxu0 0.0
        %3544 = vmatprep.mubr.f32.mxu0 0.0
        %3545 = vmatmul.mubr.f32.gmra.mrb[0].mxu0 %v3475
        %v3546 = vpop.f32.mrb[0].mxu0
        %v3547 = vadd.f32 0.0, %v3546
        %v3548 = vpop.f32.mrb[0].mxu0
        %3549 = vdwg.mxu0
        %v3550 = vsel %vm662, %v3547, -inf
        %3551 = vmax.xlane.f32.xlu0 %v3550
        %v3552 = vpop.xlane.xlu0 %3551
        %v3553 = vsub.f32 %v3547, %v3552
        %v3554 = vmul.f32 %v3553, 1.442695
        %v3555 = vpow.pop %v3554
        %v3556 = vsel %vm662, %v3555, 0.0
        %3557 = vadd.xlane.f32.xlu0 %v3556
        %v3558 = vpop.xlane.xlu0 %3557
        %v3559 = vrcp.pop %v3558
        %v3560 = vmul.f32 %v3555, %v3559
        %v3562 = vsel %vm662, %v3560, 0
        %3564 = vmatprep.subr.mxu0 0.0
        %3565 = vmatpush1.msra.mxu0 %v3471
        %3566 = vmatprep.subr.mxu0 0.0
        %3567 = vmatpush1.msra.mxu0 0.0
        %3568 = vmatprep.subr.mxu0 0.0
        %3569 = vmatpush1.msra.mxu0 0.0
        %3570 = vmatprep.subr.mxu0 0.0
        %3571 = vmatpush1.msra.mxu0 0.0
        %3572 = vmatprep.subr.mxu0 0.0
        %3573 = vmatpush1.msra.mxu0 0.0
        %3574 = vmatprep.subr.mxu0 0.0
        %3575 = vmatpush1.msra.mxu0 0.0
        %3576 = vmatprep.subr.mxu0 0.0
        %3577 = vmatpush1.msra.mxu0 0.0
        %3578 = vmatprep.subr.mxu0 0.0
        %3579 = vmatpush1.msra.mxu0 0.0
        %3580 = vmatprep.subr.mxu0 0.0
        %3581 = vmatpush1.msra.mxu0 0.0
        %3582 = vmatprep.subr.mxu0 0.0
        %3583 = vmatpush1.msra.mxu0 0.0
        %3584 = vmatprep.subr.mxu0 0.0
        %3585 = vmatpush1.msra.mxu0 0.0
        %3586 = vmatprep.subr.mxu0 0.0
        %3587 = vmatpush1.msra.mxu0 0.0
        %3588 = vmatprep.subr.mxu0 0.0
        %3589 = vmatpush1.msra.mxu0 0.0
        %3590 = vmatprep.subr.mxu0 0.0
        %3591 = vmatpush1.msra.mxu0 0.0
        %3592 = vmatprep.subr.mxu0 0.0
        %3593 = vmatpush1.msra.mxu0 0.0
        %3594 = vmatprep.subr.mxu0 0.0
        %3595 = vmatpush1.msra.mxu0 0.0
        %3596 = vmatprep.subr.mxu0 0.0
        %3597 = vmatpush1.msra.mxu0 0.0
        %3598 = vmatprep.subr.mxu0 0.0
        %3599 = vmatpush1.msra.mxu0 0.0
        %3600 = vmatprep.subr.mxu0 0.0
        %3601 = vmatpush1.msra.mxu0 0.0
        %3602 = vmatprep.subr.mxu0 0.0
        %3603 = vmatpush1.msra.mxu0 0.0
        %3604 = vmatprep.subr.mxu0 0.0
        %3605 = vmatpush1.msra.mxu0 0.0
        %3606 = vmatprep.subr.mxu0 0.0
        %3607 = vmatpush1.msra.mxu0 0.0
        %3608 = vmatprep.subr.mxu0 0.0
        %3609 = vmatpush1.msra.mxu0 0.0
        %3610 = vmatprep.subr.mxu0 0.0
        %3611 = vmatpush1.msra.mxu0 0.0
        %3612 = vmatprep.subr.mxu0 0.0
        %3613 = vmatpush1.msra.mxu0 0.0
        %3614 = vmatprep.subr.mxu0 0.0
        %3615 = vmatpush1.msra.mxu0 0.0
        %3616 = vmatprep.subr.mxu0 0.0
        %3617 = vmatpush1.msra.mxu0 0.0
        %3618 = vmatprep.subr.mxu0 0.0
        %3619 = vmatpush1.msra.mxu0 0.0
        %3620 = vmatprep.subr.mxu0 0.0
        %3621 = vmatpush1.msra.mxu0 0.0
        %3622 = vmatprep.subr.mxu0 0.0
        %3623 = vmatpush1.msra.mxu0 0.0
        %3624 = vmatprep.subr.mxu0 0.0
        %3625 = vmatpush1.msra.mxu0 0.0
        %3626 = vmatprep.subr.mxu0 0.0
        %3627 = vmatpush1.msra.mxu0 0.0
        %3628 = vmatprep.mubr.f32.mxu0 0.0
        %3629 = vmatmul.mubr.f32.gmra.mrb[0].mxu0 %v3562
        %v3630 = vpop.f32.mrb[0].mxu0
        %v3631 = vadd.f32 0.0, %v3630
        %v3632 = vpop.f32.mrb[0].mxu0
        %3633 = vdwg.mxu0
        %s3634 = scalar_lea.vmem %s3, 80
        %v3635 = vld [vmem:[%s3634] sm:$0xff]
        %v3636 = vld [vmem:[%s3634 + $0x8] sm:$0xff]
        %v3638 = vsel %vm585, %v3631, 0
        %3640 = vmatprep.subr.mxu0 0.0
        %3641 = vmatpush1.msra.mxu0 %v3635
        %3642 = vmatprep.subr.mxu0 0.0
        %3643 = vmatpush1.msra.mxu0 %v3636
        %3644 = vmatprep.subr.mxu0 0.0
        %3645 = vmatpush1.msra.mxu0 0.0
        %3646 = vmatprep.subr.mxu0 0.0
        %3647 = vmatpush1.msra.mxu0 0.0
        %3648 = vmatprep.subr.mxu0 0.0
        %3649 = vmatpush1.msra.mxu0 0.0
        %3650 = vmatprep.subr.mxu0 0.0
        %3651 = vmatpush1.msra.mxu0 0.0
        %3652 = vmatprep.subr.mxu0 0.0
        %3653 = vmatpush1.msra.mxu0 0.0
        %3654 = vmatprep.subr.mxu0 0.0
        %3655 = vmatpush1.msra.mxu0 0.0
        %3656 = vmatprep.subr.mxu0 0.0
        %3657 = vmatpush1.msra.mxu0 0.0
        %3658 = vmatprep.subr.mxu0 0.0
        %3659 = vmatpush1.msra.mxu0 0.0
        %3660 = vmatprep.subr.mxu0 0.0
        %3661 = vmatpush1.msra.mxu0 0.0
        %3662 = vmatprep.subr.mxu0 0.0
        %3663 = vmatpush1.msra.mxu0 0.0
        %3664 = vmatprep.subr.mxu0 0.0
        %3665 = vmatpush1.msra.mxu0 0.0
        %3666 = vmatprep.subr.mxu0 0.0
        %3667 = vmatpush1.msra.mxu0 0.0
        %3668 = vmatprep.subr.mxu0 0.0
        %3669 = vmatpush1.msra.mxu0 0.0
        %3670 = vmatprep.subr.mxu0 0.0
        %3671 = vmatpush1.msra.mxu0 0.0
        %3672 = vmatprep.subr.mxu0 0.0
        %3673 = vmatpush1.msra.mxu0 0.0
        %3674 = vmatprep.subr.mxu0 0.0
        %3675 = vmatpush1.msra.mxu0 0.0
        %3676 = vmatprep.subr.mxu0 0.0
        %3677 = vmatpush1.msra.mxu0 0.0
        %3678 = vmatprep.subr.mxu0 0.0
        %3679 = vmatpush1.msra.mxu0 0.0
        %3680 = vmatprep.subr.mxu0 0.0
        %3681 = vmatpush1.msra.mxu0 0.0
        %3682 = vmatprep.subr.mxu0 0.0
        %3683 = vmatpush1.msra.mxu0 0.0
        %3684 = vmatprep.subr.mxu0 0.0
        %3685 = vmatpush1.msra.mxu0 0.0
        %3686 = vmatprep.subr.mxu0 0.0
        %3687 = vmatpush1.msra.mxu0 0.0
        %3688 = vmatprep.subr.mxu0 0.0
        %3689 = vmatpush1.msra.mxu0 0.0
        %3690 = vmatprep.subr.mxu0 0.0
        %3691 = vmatpush1.msra.mxu0 0.0
        %3692 = vmatprep.subr.mxu0 0.0
        %3693 = vmatpush1.msra.mxu0 0.0
        %3694 = vmatprep.subr.mxu0 0.0
        %3695 = vmatpush1.msra.mxu0 0.0
        %3696 = vmatprep.subr.mxu0 0.0
        %3697 = vmatpush1.msra.mxu0 0.0
        %3698 = vmatprep.subr.mxu0 0.0
        %3699 = vmatpush1.msra.mxu0 0.0
        %3700 = vmatprep.subr.mxu0 0.0
        %3701 = vmatpush1.msra.mxu0 0.0
        %3702 = vmatprep.subr.mxu0 0.0
        %3703 = vmatpush1.msra.mxu0 0.0
        %3704 = vmatprep.mubr.f32.mxu0 0.0
        %3705 = vmatmul.mubr.f32.gmra.mrb[0].mxu0 %v3638
        %v3706 = vpop.f32.mrb[0].mxu0
        %v3707 = vadd.f32 0.0, %v3706
        %v3708 = vpop.f32.mrb[0].mxu0
        %3709 = vdwg.mxu0
        %v3711 = vsel %vm585, %v3219, 0
        %3713 = vmatprep.subr.mxu0 0.0
        %3714 = vmatpush1.msra.mxu0 %v3223
        %3715 = vmatprep.subr.mxu0 0.0
        %3716 = vmatpush1.msra.mxu0 %v3224
        %3717 = vmatprep.subr.mxu0 0.0
        %3718 = vmatpush1.msra.mxu0 0.0
        %3719 = vmatprep.subr.mxu0 0.0
        %3720 = vmatpush1.msra.mxu0 0.0
        %3721 = vmatprep.subr.mxu0 0.0
        %3722 = vmatpush1.msra.mxu0 0.0
        %3723 = vmatprep.subr.mxu0 0.0
        %3724 = vmatpush1.msra.mxu0 0.0
        %3725 = vmatprep.subr.mxu0 0.0
        %3726 = vmatpush1.msra.mxu0 0.0
        %3727 = vmatprep.subr.mxu0 0.0
        %3728 = vmatpush1.msra.mxu0 0.0
        %3729 = vmatprep.subr.mxu0 0.0
        %3730 = vmatpush1.msra.mxu0 0.0
        %3731 = vmatprep.subr.mxu0 0.0
        %3732 = vmatpush1.msra.mxu0 0.0
        %3733 = vmatprep.subr.mxu0 0.0
        %3734 = vmatpush1.msra.mxu0 0.0
        %3735 = vmatprep.subr.mxu0 0.0
        %3736 = vmatpush1.msra.mxu0 0.0
        %3737 = vmatprep.subr.mxu0 0.0
        %3738 = vmatpush1.msra.mxu0 0.0
        %3739 = vmatprep.subr.mxu0 0.0
        %3740 = vmatpush1.msra.mxu0 0.0
        %3741 = vmatprep.subr.mxu0 0.0
        %3742 = vmatpush1.msra.mxu0 0.0
        %3743 = vmatprep.subr.mxu0 0.0
        %3744 = vmatpush1.msra.mxu0 0.0
        %3745 = vmatprep.subr.mxu0 0.0
        %3746 = vmatpush1.msra.mxu0 0.0
        %3747 = vmatprep.subr.mxu0 0.0
        %3748 = vmatpush1.msra.mxu0 0.0
        %3749 = vmatprep.subr.mxu0 0.0
        %3750 = vmatpush1.msra.mxu0 0.0
        %3751 = vmatprep.subr.mxu0 0.0
        %3752 = vmatpush1.msra.mxu0 0.0
        %3753 = vmatprep.subr.mxu0 0.0
        %3754 = vmatpush1.msra.mxu0 0.0
        %3755 = vmatprep.subr.mxu0 0.0
        %3756 = vmatpush1.msra.mxu0 0.0
        %3757 = vmatprep.subr.mxu0 0.0
        %3758 = vmatpush1.msra.mxu0 0.0
        %3759 = vmatprep.subr.mxu0 0.0
        %3760 = vmatpush1.msra.mxu0 0.0
        %3761 = vmatprep.subr.mxu0 0.0
        %3762 = vmatpush1.msra.mxu0 0.0
        %3763 = vmatprep.subr.mxu0 0.0
        %3764 = vmatpush1.msra.mxu0 0.0
        %3765 = vmatprep.subr.mxu0 0.0
        %3766 = vmatpush1.msra.mxu0 0.0
        %3767 = vmatprep.subr.mxu0 0.0
        %3768 = vmatpush1.msra.mxu0 0.0
        %3769 = vmatprep.subr.mxu0 0.0
        %3770 = vmatpush1.msra.mxu0 0.0
        %3771 = vmatprep.subr.mxu0 0.0
        %3772 = vmatpush1.msra.mxu0 0.0
        %3773 = vmatprep.subr.mxu0 0.0
        %3774 = vmatpush1.msra.mxu0 0.0
        %3775 = vmatprep.subr.mxu0 0.0
        %3776 = vmatpush1.msra.mxu0 0.0
        %3777 = vmatprep.mubr.f32.mxu0 0.0
        %3778 = vmatmul.mubr.f32.gmra.mrb[0].mxu0 %v3711
        %v3779 = vpop.f32.mrb[0].mxu0
        %v3780 = vadd.f32 %v3707, %v3779
        %v3781 = vpop.f32.mrb[0].mxu0
        %3782 = vdwg.mxu0
        %v3783 = vlaneseq
        %v3784 = vshrl.u32 %v3783, 7
        %v3785 = vsub.s32 0, %v3784
        %v3786 = vrot.slane %v2785, %v3785
        %v3787 = vadd.f32 %v3780, %v3786
        %v3788 = vsel %vm310, %v3787, 0.0
        %3789 = vadd.xlane.f32.xlu0 %v3788
        %v3790 = vpop.xlane.xlu0 %3789
        %v3791 = vmul.f32 %v3790, %v314
        %v3792 = vsub.f32 %v3787, %v3791
        %v3793 = vmul.f32 %v3792, %v3792
        %v3794 = vsel %vm310, %v3793, 0.0
        %3795 = vadd.xlane.f32.xlu0 %v3794
        %v3796 = vpop.xlane.xlu0 %3795
        %v3797 = vmul.f32 %v3796, %v314
        %v3798 = vadd.f32 %v3797, 1e-05
        %v3799 = vrsqrt.pop %v3798
        %v3800 = vmul.f32 %v3792, %v3799
        %v3801 = vlaneseq
        %v3802 = vshrl.u32 %v3801, 7
        %v3803 = vsub.s32 0, %v3802
        %v3804 = vrot.slane %v2781, %v3803
        %v3805 = vmul.f32 %v3800, %v3804
        %v3806 = vlaneseq
        %v3807 = vshrl.u32 %v3806, 7
        %v3808 = vsub.s32 0, %v3807
        %v3809 = vrot.slane %v2782, %v3808
        %v3810 = vadd.f32 %v3805, %v3809
        %v3811 = vadd.f32 %v2778, %v3810
        %v3812 = vsel %vm310, %v3811, 0.0
        %3813 = vadd.xlane.f32.xlu0 %v3812
        %v3814 = vpop.xlane.xlu0 %3813
        %v3815 = vmul.f32 %v3814, %v314
        %v3816 = vsub.f32 %v3811, %v3815
        %v3817 = vmul.f32 %v3816, %v3816
        %v3818 = vsel %vm310, %v3817, 0.0
        %3819 = vadd.xlane.f32.xlu0 %v3818
        %v3820 = vpop.xlane.xlu0 %3819
        %v3821 = vmul.f32 %v3820, %v314
        %v3822 = vadd.f32 %v3821, 1e-05
        %v3823 = vrsqrt.pop %v3822
        %v3824 = vmul.f32 %v3816, %v3823
        %v3825 = vlaneseq
        %v3826 = vshrl.u32 %v3825, 7
        %v3827 = vsub.s32 0, %v3826
        %v3828 = vrot.slane %v2783, %v3827
        %v3829 = vmul.f32 %v3824, %v3828
        %v3830 = vlaneseq
        %v3831 = vshrl.u32 %v3830, 7
        %v3832 = vsub.s32 0, %v3831
        %v3833 = vrot.slane %v2784, %v3832
        %v3834 = vadd.f32 %v3829, %v3833
        %s3835 = scalar_lea.vmem %s4, 64
        %v3836 = vld [vmem:[%s3835] sm:$0xff]
        %v3837 = vld [vmem:[%s3835 + $0x8] sm:$0xff]
        %v3838 = vld [vmem:[%s3835 + $0x10] sm:$0xff]
        %v3839 = vld [vmem:[%s3835 + $0x18] sm:$0xff]
        %s3840 = scalar_lea.vmem %s5, 2
        %v3841 = vld [vmem:[%s3840] sm:$0x1]
        %v3843 = vlaneseq
        %v3844 = vshrl.u32 %v3843, 7
        %v3845 = vsub.s32 0, %v3844
        %v3846 = vrot.slane %v3841, %v3845
        %v3849 = vsel %vm310, %v3834, 0
        %3851 = vmatprep.subr.mxu0 0.0
        %3852 = vmatpush1.msra.mxu0 %v3836
        %3853 = vmatprep.subr.mxu0 0.0
        %3854 = vmatpush1.msra.mxu0 %v3837
        %3855 = vmatprep.subr.mxu0 0.0
        %3856 = vmatpush1.msra.mxu0 %v3838
        %3857 = vmatprep.subr.mxu0 0.0
        %3858 = vmatpush1.msra.mxu0 %v3839
        %3859 = vmatprep.subr.mxu0 0.0
        %3860 = vmatpush1.msra.mxu0 0.0
        %3861 = vmatprep.subr.mxu0 0.0
        %3862 = vmatpush1.msra.mxu0 0.0
        %3863 = vmatprep.subr.mxu0 0.0
        %3864 = vmatpush1.msra.mxu0 0.0
        %3865 = vmatprep.subr.mxu0 0.0
        %3866 = vmatpush1.msra.mxu0 0.0
        %3867 = vmatprep.subr.mxu0 0.0
        %3868 = vmatpush1.msra.mxu0 0.0
        %3869 = vmatprep.subr.mxu0 0.0
        %3870 = vmatpush1.msra.mxu0 0.0
        %3871 = vmatprep.subr.mxu0 0.0
        %3872 = vmatpush1.msra.mxu0 0.0
        %3873 = vmatprep.subr.mxu0 0.0
        %3874 = vmatpush1.msra.mxu0 0.0
        %3875 = vmatprep.subr.mxu0 0.0
        %3876 = vmatpush1.msra.mxu0 0.0
        %3877 = vmatprep.subr.mxu0 0.0
        %3878 = vmatpush1.msra.mxu0 0.0
        %3879 = vmatprep.subr.mxu0 0.0
        %3880 = vmatpush1.msra.mxu0 0.0
        %3881 = vmatprep.subr.mxu0 0.0
        %3882 = vmatpush1.msra.mxu0 0.0
        %3883 = vmatprep.subr.mxu0 0.0
        %3884 = vmatpush1.msra.mxu0 0.0
        %3885 = vmatprep.subr.mxu0 0.0
        %3886 = vmatpush1.msra.mxu0 0.0
        %3887 = vmatprep.subr.mxu0 0.0
        %3888 = vmatpush1.msra.mxu0 0.0
        %3889 = vmatprep.subr.mxu0 0.0
        %3890 = vmatpush1.msra.mxu0 0.0
        %3891 = vmatprep.subr.mxu0 0.0
        %3892 = vmatpush1.msra.mxu0 0.0
        %3893 = vmatprep.subr.mxu0 0.0
        %3894 = vmatpush1.msra.mxu0 0.0
        %3895 = vmatprep.subr.mxu0 0.0
        %3896 = vmatpush1.msra.mxu0 0.0
        %3897 = vmatprep.subr.mxu0 0.0
        %3898 = vmatpush1.msra.mxu0 0.0
        %3899 = vmatprep.subr.mxu0 0.0
        %3900 = vmatpush1.msra.mxu0 0.0
        %3901 = vmatprep.subr.mxu0 0.0
        %3902 = vmatpush1.msra.mxu0 0.0
        %3903 = vmatprep.subr.mxu0 0.0
        %3904 = vmatpush1.msra.mxu0 0.0
        %3905 = vmatprep.subr.mxu0 0.0
        %3906 = vmatpush1.msra.mxu0 0.0
        %3907 = vmatprep.subr.mxu0 0.0
        %3908 = vmatpush1.msra.mxu0 0.0
        %3909 = vmatprep.subr.mxu0 0.0
        %3910 = vmatpush1.msra.mxu0 0.0
        %3911 = vmatprep.subr.mxu0 0.0
        %3912 = vmatpush1.msra.mxu0 0.0
        %3913 = vmatprep.subr.mxu0 0.0
        %3914 = vmatpush1.msra.mxu0 0.0
        %3915 = vmatprep.mubr.f32.mxu0 0.0
        %3916 = vmatmul.mubr.f32.gmra.mrb[0].mxu0 %v3849
        %v3917 = vpop.f32.mrb[0].mxu0
        %v3918 = vadd.f32 %v3846, %v3917
        %v3919 = vpop.f32.mrb[0].mxu0
        %3920 = vdwg.mxu0
        %v3921 = vmul.f32 %v3918, %v3918
        %v3922 = vmul.f32 %v3918, %v3921
        %v3923 = vmul.f32 %v3922, 0.044715
        %v3924 = vadd.f32 %v3918, %v3923
        %v3925 = vmul.f32 %v3924, 0.7978846
        %v3926 = vtanh.pop %v3925
        %v3927 = vadd.f32 %v3926, 1.0
        %v3928 = vmul.f32 %v3927, 0.5
        %v3929 = vmul.f32 %v3918, %v3928
        %s3930 = scalar_lea.vmem %s6, 128
        %v3931 = vld [vmem:[%s3930] sm:$0xff]
        %v3932 = vld [vmem:[%s3930 + $0x8] sm:$0xff]
        %v3933 = vld [vmem:[%s3930 + $0x10] sm:$0xff]
        %v3934 = vld [vmem:[%s3930 + $0x18] sm:$0xff]
        %v3935 = vld [vmem:[%s3930 + $0x20] sm:$0xff]
        %v3936 = vld [vmem:[%s3930 + $0x28] sm:$0xff]
        %v3937 = vld [vmem:[%s3930 + $0x30] sm:$0xff]
        %v3938 = vld [vmem:[%s3930 + $0x38] sm:$0xff]
        %v3940 = vsel %vm1460, %v3929, 0
        %3942 = vmatprep.subr.mxu0 0.0
        %3943 = vmatpush1.msra.mxu0 %v3931
        %3944 = vmatprep.subr.mxu0 0.0
        %3945 = vmatpush1.msra.mxu0 %v3932
        %3946 = vmatprep.subr.mxu0 0.0
        %3947 = vmatpush1.msra.mxu0 %v3933
        %3948 = vmatprep.subr.mxu0 0.0
        %3949 = vmatpush1.msra.mxu0 %v3934
        %3950 = vmatprep.subr.mxu0 0.0
        %3951 = vmatpush1.msra.mxu0 %v3935
        %3952 = vmatprep.subr.mxu0 0.0
        %3953 = vmatpush1.msra.mxu0 %v3936
        %3954 = vmatprep.subr.mxu0 0.0
        %3955 = vmatpush1.msra.mxu0 %v3937
        %3956 = vmatprep.subr.mxu0 0.0
        %3957 = vmatpush1.msra.mxu0 %v3938
        %3958 = vmatprep.subr.mxu0 0.0
        %3959 = vmatpush1.msra.mxu0 0.0
        %3960 = vmatprep.subr.mxu0 0.0
        %3961 = vmatpush1.msra.mxu0 0.0
        %3962 = vmatprep.subr.mxu0 0.0
        %3963 = vmatpush1.msra.mxu0 0.0
        %3964 = vmatprep.subr.mxu0 0.0
        %3965 = vmatpush1.msra.mxu0 0.0
        %3966 = vmatprep.subr.mxu0 0.0
        %3967 = vmatpush1.msra.mxu0 0.0
        %3968 = vmatprep.subr.mxu0 0.0
        %3969 = vmatpush1.msra.mxu0 0.0
        %3970 = vmatprep.subr.mxu0 0.0
        %3971 = vmatpush1.msra.mxu0 0.0
        %3972 = vmatprep.subr.mxu0 0.0
        %3973 = vmatpush1.msra.mxu0 0.0
        %3974 = vmatprep.subr.mxu0 0.0
        %3975 = vmatpush1.msra.mxu0 0.0
        %3976 = vmatprep.subr.mxu0 0.0
        %3977 = vmatpush1.msra.mxu0 0.0
        %3978 = vmatprep.subr.mxu0 0.0
        %3979 = vmatpush1.msra.mxu0 0.0
        %3980 = vmatprep.subr.mxu0 0.0
        %3981 = vmatpush1.msra.mxu0 0.0
        %3982 = vmatprep.subr.mxu0 0.0
        %3983 = vmatpush1.msra.mxu0 0.0
        %3984 = vmatprep.subr.mxu0 0.0
        %3985 = vmatpush1.msra.mxu0 0.0
        %3986 = vmatprep.subr.mxu0 0.0
        %3987 = vmatpush1.msra.mxu0 0.0
        %3988 = vmatprep.subr.mxu0 0.0
        %3989 = vmatpush1.msra.mxu0 0.0
        %3990 = vmatprep.subr.mxu0 0.0
        %3991 = vmatpush1.msra.mxu0 0.0
        %3992 = vmatprep.subr.mxu0 0.0
        %3993 = vmatpush1.msra.mxu0 0.0
        %3994 = vmatprep.subr.mxu0 0.0
        %3995 = vmatpush1.msra.mxu0 0.0
        %3996 = vmatprep.subr.mxu0 0.0
        %3997 = vmatpush1.msra.mxu0 0.0
        %3998 = vmatprep.subr.mxu0 0.0
        %3999 = vmatpush1.msra.mxu0 0.0
        %4000 = vmatprep.subr.mxu0 0.0
        %4001 = vmatpush1.msra.mxu0 0.0
        %4002 = vmatprep.subr.mxu0 0.0
        %4003 = vmatpush1.msra.mxu0 0.0
        %4004 = vmatprep.subr.mxu0 0.0
        %4005 = vmatpush1.msra.mxu0 0.0
        %4006 = vmatprep.mubr.f32.mxu0 0.0
        %4007 = vmatmul.mubr.f32.gmra.mrb[0].mxu0 %v3940
        %v4008 = vpop.f32.mrb[0].mxu0
        %v4009 = vadd.f32 0.0, %v4008
        %v4010 = vpop.f32.mrb[0].mxu0
        %4011 = vdwg.mxu0
        %v4012 = vadd.f32 %v3811, %v4009
        %v4013 = vlaneseq
        %v4014 = vshrl.u32 %v4013, 7
        %v4015 = vsub.s32 0, %v4014
        %v4016 = vrot.slane %v2786, %v4015
        %v4017 = vadd.f32 %v4012, %v4016
        %v4018 = vld [vmem:[%s7 + $0x18] sm:$0x1]
        %v4019 = vld [vmem:[%s7 + $0x19] sm:$0x1]
        %v4020 = vsel %vm310, %v4017, 0.0
        %4021 = vadd.xlane.f32.xlu0 %v4020
        %v4022 = vpop.xlane.xlu0 %4021
        %v4023 = vmul.f32 %v4022, %v314
        %v4024 = vsub.f32 %v4017, %v4023
        %v4025 = vmul.f32 %v4024, %v4024
        %v4026 = vsel %vm310, %v4025, 0.0
        %4027 = vadd.xlane.f32.xlu0 %v4026
        %v4028 = vpop.xlane.xlu0 %4027
        %v4029 = vmul.f32 %v4028, %v314
        %v4030 = vadd.f32 %v4029, 1e-05
        %v4031 = vrsqrt.pop %v4030
        %v4032 = vmul.f32 %v4024, %v4031
        %v4033 = vlaneseq
        %v4034 = vshrl.u32 %v4033, 7
        %v4035 = vsub.s32 0, %v4034
        %v4036 = vrot.slane %v4018, %v4035
        %v4037 = vmul.f32 %v4032, %v4036
        %v4038 = vlaneseq
        %v4039 = vshrl.u32 %v4038, 7
        %v4040 = vsub.s32 0, %v4039
        %v4041 = vrot.slane %v4019, %v4040
        %v4042 = vadd.f32 %v4037, %v4041
        %4043 = vst.msk [vmem:[%s296] sm:$0xff] %vm310, %v4042
        %s4044 = sand.u32 %s203, 1
        %s4045 = scalar_lea.sflag [#allocation3], %s4044
        %s4046 = sand.u32 %s203, 1
        %s4047 = smul.addr %s4046, 8
        %s4048 = scalar_lea.vmem [#allocation2], %s4047
        // Predicated region
        $region53: #{tpu_custom_call.1} parent=51 // pred_check
          %p4049 = pneg %p213
        $region54: #{tpu_custom_call.1} parent=51 // pred_check_branch
          %4051 = sbr.rel (%p4049) target = $region56
        $region55: #{tpu_custom_call.1} parent=51 // pred_region
          %s4053 = ssub.s32 128, 128
          %4054 = vsyncadd %s4045, %s4053
          %s4055 = smul.addr %s22, 128
          %s4056 = scalar_lea.hbm %s8, %s4055
          %s4058 = sshll.u32 %s4048, 4
          %s4059 = int_to_ptr.vmem [resolvable:$true] %s4058
          %4061 = dma.vmem_to_hbm [thread:$0]  %s4059, 128, %s4056, %s4045
        $region56: #{tpu_custom_call.1} parent=51 // pred_fallthru
          _
      $region52: #{tpu_custom_call.1} parent=5 // pred_fallthru
        _
      %p4062 = scmp.le.s32.totalorder 2, %s17
      // Predicated region
      $region57: #{tpu_custom_call.1} parent=5 // pred_check
        %p4063 = pneg %p4062
      $region58: #{tpu_custom_call.1} parent=5 // pred_check_branch
        %4065 = sbr.rel (%p4063) target = $region60
      $region59: #{tpu_custom_call.1} parent=5 // pred_region
        %s4066 = ssub.s32 %s17, 2
        // Predicated region
        $region61: #{tpu_custom_call.1} parent=59 // pred_check
          %p4067 = pneg %p219
        $region62: #{tpu_custom_call.1} parent=59 // pred_check_branch
          %4069 = sbr.rel (%p4067) target = $region64
        $region63: #{tpu_custom_call.1} parent=59 // pred_region
          %s4070 = sand.u32 %s204, 1
          %s4071 = scalar_lea.sflag [#allocation3], %s4070
          %s4072 = sand.u32 %s204, 1
          %s4073 = smul.addr %s4072, 8
          %s4074 = scalar_lea.vmem [#allocation2], %s4073
          %4075 = dma.done %s4071, 128
        $region64: #{tpu_custom_call.1} parent=59 // pred_fallthru
          _
      $region60: #{tpu_custom_call.1} parent=5 // pred_fallthru
        _
    $region6: #{tpu_custom_call.1} parent=1 // loop_footer
      %s21 = sadd.s32 1, %s17
    $region7: #{tpu_custom_call.1} parent=1 // loop_footer_branch
      %16 = sbr.rel target = $region3
    $region8: #{tpu_custom_call.1} parent=1 // loop_exit
      _
    %4076 = vsyncpa [#allocation3], 1
    %s4077 = scalar_lea.sflag [#allocation3], 1
    %4078 = vsyncpa %s4077, 1

</llo_original>
